<compile_context>
chip_gen: v7x
topology: tpu7x:2x2x1
jax: 0.10.0
libtpu: 0.0.40
codegen_flags: <defaults>
</compile_context>

<pallas_src>
import functools

import jax
import jax.numpy as jnp
from jax import lax
from jax.experimental import pallas as pl
from jax.experimental.pallas import tpu as pltpu


def _round_up(x, m):
    return (x + m - 1) // m * m


def _conv_mixer_kernel(x_ref, w_ref, b_ref, o_ref, slab_ref, *,
                       H, W, P, base, tap_offsets, rows_per_chunk):
    # x_ref:    (1, N, Cp)   compact image rows (N = H*W), channels last.
    # w_ref:    (K, Cp, Cp)  per-tap block-diagonal grouped-conv weights.
    # b_ref:    (1, Cp)      bias (f32).
    # o_ref:    (1, N, Cp)   compact output rows (final sequence layout).
    # slab_ref: (R_slab, Cp) VMEM scratch holding the zero-padded raster.

    # Build the zero-padded raster in VMEM: zero fill (covers all halo rows /
    # pad columns), then scatter the compact image rows.  `base` and `P` are
    # multiples of 8, so every row-copy destination is sublane-aligned.
    slab_ref[...] = jnp.zeros_like(slab_ref)
    for h in range(H):
        dst = base + h * P
        slab_ref[dst:dst + W, :] = x_ref[0, h * W:h * W + W, :]

    bias = b_ref[...].astype(jnp.float32)
    n_taps = len(tap_offsets)

    # Row-chunked tap accumulation: each chunk covers rows_per_chunk image
    # rows (~128 raster rows -> ~16 live f32 vregs), large-M MXU matmuls, no
    # accumulator spills.
    for h0 in range(0, H, rows_per_chunk):
        nh = min(rows_per_chunk, H - h0)
        r0 = h0 * P
        nr = nh * P
        off = tap_offsets[0] + r0
        acc = jnp.dot(slab_ref[off:off + nr, :], w_ref[0],
                      preferred_element_type=jnp.float32)
        for k in range(1, n_taps):
            off = tap_offsets[k] + r0
            acc = acc + jnp.dot(slab_ref[off:off + nr, :], w_ref[k],
                                preferred_element_type=jnp.float32)
        res = (acc + bias).astype(o_ref.dtype)
        # Epilogue compaction: drop the padded-width columns so the kernel
        # writes the final (N, C) layout (no wrapper-side crop pass).
        for hh in range(nh):
            h = h0 + hh
            o_ref[0, h * W:h * W + W, :] = res[hh * P:hh * P + W, :]


@functools.partial(jax.jit,
                   static_argnames=("HW", "num_heads", "local_k", "out_dtype"))
def conv_mixer_pallas(x, weight, bias, *, HW, num_heads, local_k=(3, 3),
                      out_dtype=None):
    """ConvMixer forward.

    x:      (B, N, C)  with N == H*W (sequence layout, channels last)
    weight: (C, C // num_heads, KH, KW)  PyTorch Conv2d weight, groups=num_heads
    bias:   (C,)
    returns (B, N, C) in out_dtype (defaults to x.dtype).
    """
    B, N, C = x.shape
    H, W = HW
    KH, KW = local_k
    assert N == H * W, "sequence length must equal H*W"
    assert C % num_heads == 0, "dim must be divisible by num_heads"
    G = num_heads
    cg = C // G
    assert weight.shape == (C, cg, KH, KW)
    if out_dtype is None:
        out_dtype = x.dtype

    ph, pw = KH // 2, KW // 2
    Cp = _round_up(C, 128)               # lane-dense channel dim
    P = _round_up(W + 2 * pw, 8)         # raster row stride (>= W + 2*pw)
    base = _round_up(ph * P + pw, 8)     # slab offset of image row 0 (8-aligned)
    R_slab = _round_up(base + (H + ph) * P + pw, 8)
    K = KH * KW
    # Tap (dh, dw) reads slab[off + r] for output raster row r = h*P + w.
    tap_offsets = tuple(base - ph * P - pw + dh * P + dw
                        for dh in range(KH) for dw in range(KW))
    assert min(tap_offsets) >= 0 and max(tap_offsets) + H * P <= R_slab

    # Chunk so the live f32 accumulator stays around 16 vregs.
    rows_per_chunk = max(1, (128 * 128 // Cp) // P)

    # Lane pad only if C is not already a multiple of 128 (no-op here).
    if Cp != C:
        x = jnp.pad(x, ((0, 0), (0, 0), (0, Cp - C)))

    # Grouped conv weight -> per-tap block-diagonal (Cp, Cp): a single masked
    # gather (no per-group dynamic-update-slice loop).
    # TODO(synk): cache the expanded weight across forward calls (it depends
    # only on the parameters, not on the activations).
    wt = jnp.transpose(weight, (2, 3, 1, 0)).reshape(K, cg, C)  # [k, ci%cg, co]
    w_rows = wt[:, jnp.arange(Cp) % cg, :]                      # (K, Cp, C)
    if Cp != C:
        w_rows = jnp.pad(w_rows, ((0, 0), (0, 0), (0, Cp - C)))
    ci = jnp.arange(Cp)
    mask = (((ci[:, None] // cg) == (ci[None, :] // cg))
            & (ci[:, None] < C) & (ci[None, :] < C))
    wfull = jnp.where(mask[None], w_rows, 0).astype(weight.dtype)
    b2d = jnp.pad(bias.astype(jnp.float32), (0, Cp - C)).reshape(1, Cp)

    kernel = functools.partial(
        _conv_mixer_kernel, H=H, W=W, P=P, base=base,
        tap_offsets=tap_offsets, rows_per_chunk=rows_per_chunk)

    # Honest cost numbers: true useful FLOPs (block-diag zeros and padded
    # raster rows excluded) and compact I/O bytes.
    flops = 2 * B * N * C * cg * K
    bytes_accessed = (B * N * Cp * x.dtype.itemsize
                      + K * Cp * Cp * wfull.dtype.itemsize
                      + Cp * 4
                      + B * N * Cp * jnp.dtype(out_dtype).itemsize)

    out = pl.pallas_call(
        kernel,
        out_shape=jax.ShapeDtypeStruct((B, N, Cp), out_dtype),
        grid_spec=pltpu.PrefetchScalarGridSpec(
            num_scalar_prefetch=0,
            grid=(B,),
            in_specs=[
                pl.BlockSpec((1, N, Cp), lambda b: (b, 0, 0)),
                # Grid-invariant block: constant index map => fetched once.
                # (Default double buffer wastes only K*Cp*Cp bytes here.)
                pl.BlockSpec((K, Cp, Cp), lambda b: (0, 0, 0)),
                pl.BlockSpec((1, Cp), lambda b: (0, 0)),
            ],
            out_specs=pl.BlockSpec((1, N, Cp), lambda b: (b, 0, 0)),
            scratch_shapes=[pltpu.VMEM((R_slab, Cp), x.dtype)],
        ),
        compiler_params=pltpu.CompilerParams(
            dimension_semantics=("parallel",)),
        cost_estimate=pl.CostEstimate(
            flops=flops, transcendentals=0, bytes_accessed=bytes_accessed),
    )(x, wfull, b2d)

    if Cp != C:
        out = out[..., :C]
    return out


if __name__ == "__main__":
    key = jax.random.PRNGKey(0)
    kx, kw, kb = jax.random.split(key, 3)

    # Shapes consistent with the module defaults: HW=(8, 25), 3x3 local mixer,
    # groups=num_heads=8; dim=128 keeps channels lane-dense.
    dim, num_heads, HW, local_k = 128, 8, (8, 25), (3, 3)
    B = 2
    H, W = HW
    N = H * W
    cg = dim // num_heads

    # bf16 activations/weights (MXU fast path), f32 accumulation, bf16 output.
    x = jax.random.normal(kx, (B, N, dim), dtype=jnp.float32).astype(jnp.bfloat16)
    bound = 1.0 / float(cg * local_k[0] * local_k[1]) ** 0.5
    weight = jax.random.uniform(kw, (dim, cg, local_k[0], local_k[1]),
                                jnp.float32, minval=-bound,
                                maxval=bound).astype(jnp.bfloat16)
    bias = jax.random.uniform(kb, (dim,), jnp.float32,
                              minval=-bound, maxval=bound)

    out = conv_mixer_pallas(x, weight, bias, HW=HW, num_heads=num_heads,
                            local_k=local_k)
    out = jax.block_until_ready(out)

    # Reference: grouped conv in plain JAX (same math as the PyTorch forward),
    # bf16 inputs with f32 accumulation.
    x_nchw = jnp.transpose(x.reshape(B, H, W, dim), (0, 3, 1, 2))
    ref = lax.conv_general_dilated(
        x_nchw, weight, window_strides=(1, 1),
        padding=((local_k[0] // 2, local_k[0] // 2),
                 (local_k[1] // 2, local_k[1] // 2)),
        dimension_numbers=("NCHW", "OIHW", "NCHW"),
        feature_group_count=num_heads,
        preferred_element_type=jnp.float32,
    ) + bias.reshape(1, dim, 1, 1)
    ref = jnp.transpose(ref.reshape(B, dim, N), (0, 2, 1))

    assert out.shape == (B, N, dim)
    assert out.dtype == x.dtype
    # bf16 output vs f32 reference: tolerance covers bf16 quantization.
    assert jnp.allclose(out.astype(jnp.float32), ref, atol=3e-2, rtol=3e-2)

    print("KERNEL_OK")
</pallas_src>

<mosaic_0001>
module attributes {stable_mosaic.version = 11 : i64} {
  func.func @_conv_mixer_kernel(%arg0: i32, %arg1: memref<1x200x128xbf16, #tpu.memory_space<vmem>>, %arg2: memref<9x128x128xbf16, #tpu.memory_space<vmem>>, %arg3: memref<1x128xf32, #tpu.memory_space<vmem>>, %arg4: memref<1x200x128xbf16, #tpu.memory_space<vmem>>, %arg5: memref<336x128xbf16, #tpu.memory_space<vmem>>) attributes {dimension_semantics = [#tpu.dimension_semantics<parallel>], iteration_bounds = array<i64: 2>, scalar_prefetch = 0 : i64, scratch_operands = 1 : i64, tpu.core_type = #tpu.core_type<tc>, window_params = [{transform_indices = @transform_0, window_bounds = array<i64: 1, 200, 128>}, {pipeline_mode = #tpu.pipeline_mode<synchronous>, transform_indices = @transform_1, window_bounds = array<i64: 9, 128, 128>}, {pipeline_mode = #tpu.pipeline_mode<synchronous>, transform_indices = @transform_2, window_bounds = array<i64: 1, 128>}, {transform_indices = @transform_3, window_bounds = array<i64: 1, 200, 128>}]} {
    %cst = arith.constant 0.000000e+00 : bf16
    %0 = vector.broadcast %cst : bf16 to vector<336x128xbf16>
    %c0 = arith.constant 0 : index
    %c0_0 = arith.constant 0 : index
    %1 = vector.load %arg5[%c0, %c0_0] : memref<336x128xbf16, #tpu.memory_space<vmem>>, vector<336x128xbf16>
    tpu.vector_store %arg5[%c0, %c0_0], %0 {strides = array<i32>} : memref<336x128xbf16, #tpu.memory_space<vmem>>, vector<336x128xbf16>,
    %c0_1 = arith.constant 0 : index
    %c0_2 = arith.constant 0 : index
    %c0_3 = arith.constant 0 : index
    %2 = vector.load %arg1[%c0_1, %c0_2, %c0_3] : memref<1x200x128xbf16, #tpu.memory_space<vmem>>, vector<1x25x128xbf16>
    %3 = vector.shape_cast %2 : vector<1x25x128xbf16> to vector<25x128xbf16>
    %c40 = arith.constant 40 : index
    %c0_4 = arith.constant 0 : index
    %4 = vector.load %arg5[%c40, %c0_4] : memref<336x128xbf16, #tpu.memory_space<vmem>>, vector<25x128xbf16>
    tpu.vector_store %arg5[%c40, %c0_4], %3 {strides = array<i32>} : memref<336x128xbf16, #tpu.memory_space<vmem>>, vector<25x128xbf16>,
    %c0_5 = arith.constant 0 : index
    %c25 = arith.constant 25 : index
    %c0_6 = arith.constant 0 : index
    %5 = vector.load %arg1[%c0_5, %c25, %c0_6] : memref<1x200x128xbf16, #tpu.memory_space<vmem>>, vector<1x25x128xbf16>
    %6 = vector.shape_cast %5 : vector<1x25x128xbf16> to vector<25x128xbf16>
    %c72 = arith.constant 72 : index
    %c0_7 = arith.constant 0 : index
    %7 = vector.load %arg5[%c72, %c0_7] : memref<336x128xbf16, #tpu.memory_space<vmem>>, vector<25x128xbf16>
    tpu.vector_store %arg5[%c72, %c0_7], %6 {strides = array<i32>} : memref<336x128xbf16, #tpu.memory_space<vmem>>, vector<25x128xbf16>,
    %c0_8 = arith.constant 0 : index
    %c50 = arith.constant 50 : index
    %c0_9 = arith.constant 0 : index
    %8 = vector.load %arg1[%c0_8, %c50, %c0_9] : memref<1x200x128xbf16, #tpu.memory_space<vmem>>, vector<1x25x128xbf16>
    %9 = vector.shape_cast %8 : vector<1x25x128xbf16> to vector<25x128xbf16>
    %c104 = arith.constant 104 : index
    %c0_10 = arith.constant 0 : index
    %10 = vector.load %arg5[%c104, %c0_10] : memref<336x128xbf16, #tpu.memory_space<vmem>>, vector<25x128xbf16>
    tpu.vector_store %arg5[%c104, %c0_10], %9 {strides = array<i32>} : memref<336x128xbf16, #tpu.memory_space<vmem>>, vector<25x128xbf16>,
    %c0_11 = arith.constant 0 : index
    %c75 = arith.constant 75 : index
    %c0_12 = arith.constant 0 : index
    %11 = vector.load %arg1[%c0_11, %c75, %c0_12] : memref<1x200x128xbf16, #tpu.memory_space<vmem>>, vector<1x25x128xbf16>
    %12 = vector.shape_cast %11 : vector<1x25x128xbf16> to vector<25x128xbf16>
    %c136 = arith.constant 136 : index
    %c0_13 = arith.constant 0 : index
    %13 = vector.load %arg5[%c136, %c0_13] : memref<336x128xbf16, #tpu.memory_space<vmem>>, vector<25x128xbf16>
    tpu.vector_store %arg5[%c136, %c0_13], %12 {strides = array<i32>} : memref<336x128xbf16, #tpu.memory_space<vmem>>, vector<25x128xbf16>,
    %c0_14 = arith.constant 0 : index
    %c100 = arith.constant 100 : index
    %c0_15 = arith.constant 0 : index
    %14 = vector.load %arg1[%c0_14, %c100, %c0_15] : memref<1x200x128xbf16, #tpu.memory_space<vmem>>, vector<1x25x128xbf16>
    %15 = vector.shape_cast %14 : vector<1x25x128xbf16> to vector<25x128xbf16>
    %c168 = arith.constant 168 : index
    %c0_16 = arith.constant 0 : index
    %16 = vector.load %arg5[%c168, %c0_16] : memref<336x128xbf16, #tpu.memory_space<vmem>>, vector<25x128xbf16>
    tpu.vector_store %arg5[%c168, %c0_16], %15 {strides = array<i32>} : memref<336x128xbf16, #tpu.memory_space<vmem>>, vector<25x128xbf16>,
    %c0_17 = arith.constant 0 : index
    %c125 = arith.constant 125 : index
    %c0_18 = arith.constant 0 : index
    %17 = vector.load %arg1[%c0_17, %c125, %c0_18] : memref<1x200x128xbf16, #tpu.memory_space<vmem>>, vector<1x25x128xbf16>
    %18 = vector.shape_cast %17 : vector<1x25x128xbf16> to vector<25x128xbf16>
    %c200 = arith.constant 200 : index
    %c0_19 = arith.constant 0 : index
    %19 = vector.load %arg5[%c200, %c0_19] : memref<336x128xbf16, #tpu.memory_space<vmem>>, vector<25x128xbf16>
    tpu.vector_store %arg5[%c200, %c0_19], %18 {strides = array<i32>} : memref<336x128xbf16, #tpu.memory_space<vmem>>, vector<25x128xbf16>,
    %c0_20 = arith.constant 0 : index
    %c150 = arith.constant 150 : index
    %c0_21 = arith.constant 0 : index
    %20 = vector.load %arg1[%c0_20, %c150, %c0_21] : memref<1x200x128xbf16, #tpu.memory_space<vmem>>, vector<1x25x128xbf16>
    %21 = vector.shape_cast %20 : vector<1x25x128xbf16> to vector<25x128xbf16>
    %c232 = arith.constant 232 : index
    %c0_22 = arith.constant 0 : index
    %22 = vector.load %arg5[%c232, %c0_22] : memref<336x128xbf16, #tpu.memory_space<vmem>>, vector<25x128xbf16>
    tpu.vector_store %arg5[%c232, %c0_22], %21 {strides = array<i32>} : memref<336x128xbf16, #tpu.memory_space<vmem>>, vector<25x128xbf16>,
    %c0_23 = arith.constant 0 : index
    %c175 = arith.constant 175 : index
    %c0_24 = arith.constant 0 : index
    %23 = vector.load %arg1[%c0_23, %c175, %c0_24] : memref<1x200x128xbf16, #tpu.memory_space<vmem>>, vector<1x25x128xbf16>
    %24 = vector.shape_cast %23 : vector<1x25x128xbf16> to vector<25x128xbf16>
    %c264 = arith.constant 264 : index
    %c0_25 = arith.constant 0 : index
    %25 = vector.load %arg5[%c264, %c0_25] : memref<336x128xbf16, #tpu.memory_space<vmem>>, vector<25x128xbf16>
    tpu.vector_store %arg5[%c264, %c0_25], %24 {strides = array<i32>} : memref<336x128xbf16, #tpu.memory_space<vmem>>, vector<25x128xbf16>,
    %c0_26 = arith.constant 0 : index
    %c0_27 = arith.constant 0 : index
    %26 = vector.load %arg3[%c0_26, %c0_27] : memref<1x128xf32, #tpu.memory_space<vmem>>, vector<1x128xf32>
    %c7 = arith.constant 7 : index
    %c0_28 = arith.constant 0 : index
    %27 = vector.load %arg5[%c7, %c0_28] : memref<336x128xbf16, #tpu.memory_space<vmem>>, vector<128x128xbf16>
    %c0_29 = arith.constant 0 : index
    %c0_30 = arith.constant 0 : index
    %c0_31 = arith.constant 0 : index
    %28 = vector.load %arg2[%c0_29, %c0_30, %c0_31] : memref<9x128x128xbf16, #tpu.memory_space<vmem>>, vector<1x128x128xbf16>
    %29 = vector.shape_cast %28 : vector<1x128x128xbf16> to vector<128x128xbf16>
    %cst_32 = arith.constant dense<0.000000e+00> : vector<128x128xf32>
    %30 = tpu.matmul %27, %29, %cst_32 {dimension_numbers = #tpu.dot_dimension_numbers<[1], [0], [0], [1], [0, 0, 1, 1], [], []>} : vector<128x128xbf16>, vector<128x128xbf16>, vector<128x128xf32> -> vector<128x128xf32>
    %c8 = arith.constant 8 : index
    %c0_33 = arith.constant 0 : index
    %31 = vector.load %arg5[%c8, %c0_33] : memref<336x128xbf16, #tpu.memory_space<vmem>>, vector<128x128xbf16>
    %c1 = arith.constant 1 : index
    %c0_34 = arith.constant 0 : index
    %c0_35 = arith.constant 0 : index
    %32 = vector.load %arg2[%c1, %c0_34, %c0_35] : memref<9x128x128xbf16, #tpu.memory_space<vmem>>, vector<1x128x128xbf16>
    %33 = vector.shape_cast %32 : vector<1x128x128xbf16> to vector<128x128xbf16>
    %cst_36 = arith.constant dense<0.000000e+00> : vector<128x128xf32>
    %34 = tpu.matmul %31, %33, %cst_36 {dimension_numbers = #tpu.dot_dimension_numbers<[1], [0], [0], [1], [0, 0, 1, 1], [], []>} : vector<128x128xbf16>, vector<128x128xbf16>, vector<128x128xf32> -> vector<128x128xf32>
    %35 = arith.addf %30, %34 : vector<128x128xf32>
    %c9 = arith.constant 9 : index
    %c0_37 = arith.constant 0 : index
    %36 = vector.load %arg5[%c9, %c0_37] : memref<336x128xbf16, #tpu.memory_space<vmem>>, vector<128x128xbf16>
    %c2 = arith.constant 2 : index
    %c0_38 = arith.constant 0 : index
    %c0_39 = arith.constant 0 : index
    %37 = vector.load %arg2[%c2, %c0_38, %c0_39] : memref<9x128x128xbf16, #tpu.memory_space<vmem>>, vector<1x128x128xbf16>
    %38 = vector.shape_cast %37 : vector<1x128x128xbf16> to vector<128x128xbf16>
    %cst_40 = arith.constant dense<0.000000e+00> : vector<128x128xf32>
    %39 = tpu.matmul %36, %38, %cst_40 {dimension_numbers = #tpu.dot_dimension_numbers<[1], [0], [0], [1], [0, 0, 1, 1], [], []>} : vector<128x128xbf16>, vector<128x128xbf16>, vector<128x128xf32> -> vector<128x128xf32>
    %40 = arith.addf %35, %39 : vector<128x128xf32>
    %c39 = arith.constant 39 : index
    %c0_41 = arith.constant 0 : index
    %41 = vector.load %arg5[%c39, %c0_41] : memref<336x128xbf16, #tpu.memory_space<vmem>>, vector<128x128xbf16>
    %c3 = arith.constant 3 : index
    %c0_42 = arith.constant 0 : index
    %c0_43 = arith.constant 0 : index
    %42 = vector.load %arg2[%c3, %c0_42, %c0_43] : memref<9x128x128xbf16, #tpu.memory_space<vmem>>, vector<1x128x128xbf16>
    %43 = vector.shape_cast %42 : vector<1x128x128xbf16> to vector<128x128xbf16>
    %cst_44 = arith.constant dense<0.000000e+00> : vector<128x128xf32>
    %44 = tpu.matmul %41, %43, %cst_44 {dimension_numbers = #tpu.dot_dimension_numbers<[1], [0], [0], [1], [0, 0, 1, 1], [], []>} : vector<128x128xbf16>, vector<128x128xbf16>, vector<128x128xf32> -> vector<128x128xf32>
    %45 = arith.addf %40, %44 : vector<128x128xf32>
    %c40_45 = arith.constant 40 : index
    %c0_46 = arith.constant 0 : index
    %46 = vector.load %arg5[%c40_45, %c0_46] : memref<336x128xbf16, #tpu.memory_space<vmem>>, vector<128x128xbf16>
    %c4 = arith.constant 4 : index
    %c0_47 = arith.constant 0 : index
    %c0_48 = arith.constant 0 : index
    %47 = vector.load %arg2[%c4, %c0_47, %c0_48] : memref<9x128x128xbf16, #tpu.memory_space<vmem>>, vector<1x128x128xbf16>
    %48 = vector.shape_cast %47 : vector<1x128x128xbf16> to vector<128x128xbf16>
    %cst_49 = arith.constant dense<0.000000e+00> : vector<128x128xf32>
    %49 = tpu.matmul %46, %48, %cst_49 {dimension_numbers = #tpu.dot_dimension_numbers<[1], [0], [0], [1], [0, 0, 1, 1], [], []>} : vector<128x128xbf16>, vector<128x128xbf16>, vector<128x128xf32> -> vector<128x128xf32>
    %50 = arith.addf %45, %49 : vector<128x128xf32>
    %c41 = arith.constant 41 : index
    %c0_50 = arith.constant 0 : index
    %51 = vector.load %arg5[%c41, %c0_50] : memref<336x128xbf16, #tpu.memory_space<vmem>>, vector<128x128xbf16>
    %c5 = arith.constant 5 : index
    %c0_51 = arith.constant 0 : index
    %c0_52 = arith.constant 0 : index
    %52 = vector.load %arg2[%c5, %c0_51, %c0_52] : memref<9x128x128xbf16, #tpu.memory_space<vmem>>, vector<1x128x128xbf16>
    %53 = vector.shape_cast %52 : vector<1x128x128xbf16> to vector<128x128xbf16>
    %cst_53 = arith.constant dense<0.000000e+00> : vector<128x128xf32>
    %54 = tpu.matmul %51, %53, %cst_53 {dimension_numbers = #tpu.dot_dimension_numbers<[1], [0], [0], [1], [0, 0, 1, 1], [], []>} : vector<128x128xbf16>, vector<128x128xbf16>, vector<128x128xf32> -> vector<128x128xf32>
    %55 = arith.addf %50, %54 : vector<128x128xf32>
    %c71 = arith.constant 71 : index
    %c0_54 = arith.constant 0 : index
    %56 = vector.load %arg5[%c71, %c0_54] : memref<336x128xbf16, #tpu.memory_space<vmem>>, vector<128x128xbf16>
    %c6 = arith.constant 6 : index
    %c0_55 = arith.constant 0 : index
    %c0_56 = arith.constant 0 : index
    %57 = vector.load %arg2[%c6, %c0_55, %c0_56] : memref<9x128x128xbf16, #tpu.memory_space<vmem>>, vector<1x128x128xbf16>
    %58 = vector.shape_cast %57 : vector<1x128x128xbf16> to vector<128x128xbf16>
    %cst_57 = arith.constant dense<0.000000e+00> : vector<128x128xf32>
    %59 = tpu.matmul %56, %58, %cst_57 {dimension_numbers = #tpu.dot_dimension_numbers<[1], [0], [0], [1], [0, 0, 1, 1], [], []>} : vector<128x128xbf16>, vector<128x128xbf16>, vector<128x128xf32> -> vector<128x128xf32>
    %60 = arith.addf %55, %59 : vector<128x128xf32>
    %c72_58 = arith.constant 72 : index
    %c0_59 = arith.constant 0 : index
    %61 = vector.load %arg5[%c72_58, %c0_59] : memref<336x128xbf16, #tpu.memory_space<vmem>>, vector<128x128xbf16>
    %c7_60 = arith.constant 7 : index
    %c0_61 = arith.constant 0 : index
    %c0_62 = arith.constant 0 : index
    %62 = vector.load %arg2[%c7_60, %c0_61, %c0_62] : memref<9x128x128xbf16, #tpu.memory_space<vmem>>, vector<1x128x128xbf16>
    %63 = vector.shape_cast %62 : vector<1x128x128xbf16> to vector<128x128xbf16>
    %cst_63 = arith.constant dense<0.000000e+00> : vector<128x128xf32>
    %64 = tpu.matmul %61, %63, %cst_63 {dimension_numbers = #tpu.dot_dimension_numbers<[1], [0], [0], [1], [0, 0, 1, 1], [], []>} : vector<128x128xbf16>, vector<128x128xbf16>, vector<128x128xf32> -> vector<128x128xf32>
    %65 = arith.addf %60, %64 : vector<128x128xf32>
    %c73 = arith.constant 73 : index
    %c0_64 = arith.constant 0 : index
    %66 = vector.load %arg5[%c73, %c0_64] : memref<336x128xbf16, #tpu.memory_space<vmem>>, vector<128x128xbf16>
    %c8_65 = arith.constant 8 : index
    %c0_66 = arith.constant 0 : index
    %c0_67 = arith.constant 0 : index
    %67 = vector.load %arg2[%c8_65, %c0_66, %c0_67] : memref<9x128x128xbf16, #tpu.memory_space<vmem>>, vector<1x128x128xbf16>
    %68 = vector.shape_cast %67 : vector<1x128x128xbf16> to vector<128x128xbf16>
    %cst_68 = arith.constant dense<0.000000e+00> : vector<128x128xf32>
    %69 = tpu.matmul %66, %68, %cst_68 {dimension_numbers = #tpu.dot_dimension_numbers<[1], [0], [0], [1], [0, 0, 1, 1], [], []>} : vector<128x128xbf16>, vector<128x128xbf16>, vector<128x128xf32> -> vector<128x128xf32>
    %70 = arith.addf %65, %69 : vector<128x128xf32>
    %71 = vector.broadcast %26 : vector<1x128xf32> to vector<128x128xf32>
    %72 = arith.addf %70, %71 : vector<128x128xf32>
    %73 = arith.truncf %72 : vector<128x128xf32> to vector<128x128xbf16>
    %74 = vector.extract_strided_slice %73 {offsets = [0, 0], sizes = [25, 128], strides = [1, 1]} : vector<128x128xbf16> to vector<25x128xbf16>
    %c0_69 = arith.constant 0 : index
    %c0_70 = arith.constant 0 : index
    %c0_71 = arith.constant 0 : index
    %75 = vector.load %arg4[%c0_69, %c0_70, %c0_71] : memref<1x200x128xbf16, #tpu.memory_space<vmem>>, vector<1x25x128xbf16>
    %76 = vector.shape_cast %75 : vector<1x25x128xbf16> to vector<25x128xbf16>
    %77 = vector.shape_cast %74 : vector<25x128xbf16> to vector<1x25x128xbf16>
    tpu.vector_store %arg4[%c0_69, %c0_70, %c0_71], %77 {strides = array<i32>} : memref<1x200x128xbf16, #tpu.memory_space<vmem>>, vector<1x25x128xbf16>,
    %78 = vector.extract_strided_slice %73 {offsets = [32, 0], sizes = [25, 128], strides = [1, 1]} : vector<128x128xbf16> to vector<25x128xbf16>
    %c0_72 = arith.constant 0 : index
    %c25_73 = arith.constant 25 : index
    %c0_74 = arith.constant 0 : index
    %79 = vector.load %arg4[%c0_72, %c25_73, %c0_74] : memref<1x200x128xbf16, #tpu.memory_space<vmem>>, vector<1x25x128xbf16>
    %80 = vector.shape_cast %79 : vector<1x25x128xbf16> to vector<25x128xbf16>
    %81 = vector.shape_cast %78 : vector<25x128xbf16> to vector<1x25x128xbf16>
    tpu.vector_store %arg4[%c0_72, %c25_73, %c0_74], %81 {strides = array<i32>} : memref<1x200x128xbf16, #tpu.memory_space<vmem>>, vector<1x25x128xbf16>,
    %82 = vector.extract_strided_slice %73 {offsets = [64, 0], sizes = [25, 128], strides = [1, 1]} : vector<128x128xbf16> to vector<25x128xbf16>
    %c0_75 = arith.constant 0 : index
    %c50_76 = arith.constant 50 : index
    %c0_77 = arith.constant 0 : index
    %83 = vector.load %arg4[%c0_75, %c50_76, %c0_77] : memref<1x200x128xbf16, #tpu.memory_space<vmem>>, vector<1x25x128xbf16>
    %84 = vector.shape_cast %83 : vector<1x25x128xbf16> to vector<25x128xbf16>
    %85 = vector.shape_cast %82 : vector<25x128xbf16> to vector<1x25x128xbf16>
    tpu.vector_store %arg4[%c0_75, %c50_76, %c0_77], %85 {strides = array<i32>} : memref<1x200x128xbf16, #tpu.memory_space<vmem>>, vector<1x25x128xbf16>,
    %86 = vector.extract_strided_slice %73 {offsets = [96, 0], sizes = [25, 128], strides = [1, 1]} : vector<128x128xbf16> to vector<25x128xbf16>
    %c0_78 = arith.constant 0 : index
    %c75_79 = arith.constant 75 : index
    %c0_80 = arith.constant 0 : index
    %87 = vector.load %arg4[%c0_78, %c75_79, %c0_80] : memref<1x200x128xbf16, #tpu.memory_space<vmem>>, vector<1x25x128xbf16>
    %88 = vector.shape_cast %87 : vector<1x25x128xbf16> to vector<25x128xbf16>
    %89 = vector.shape_cast %86 : vector<25x128xbf16> to vector<1x25x128xbf16>
    tpu.vector_store %arg4[%c0_78, %c75_79, %c0_80], %89 {strides = array<i32>} : memref<1x200x128xbf16, #tpu.memory_space<vmem>>, vector<1x25x128xbf16>,
    %c135 = arith.constant 135 : index
    %c0_81 = arith.constant 0 : index
    %90 = vector.load %arg5[%c135, %c0_81] : memref<336x128xbf16, #tpu.memory_space<vmem>>, vector<128x128xbf16>
    %c0_82 = arith.constant 0 : index
    %c0_83 = arith.constant 0 : index
    %c0_84 = arith.constant 0 : index
    %91 = vector.load %arg2[%c0_82, %c0_83, %c0_84] : memref<9x128x128xbf16, #tpu.memory_space<vmem>>, vector<1x128x128xbf16>
    %92 = vector.shape_cast %91 : vector<1x128x128xbf16> to vector<128x128xbf16>
    %cst_85 = arith.constant dense<0.000000e+00> : vector<128x128xf32>
    %93 = tpu.matmul %90, %92, %cst_85 {dimension_numbers = #tpu.dot_dimension_numbers<[1], [0], [0], [1], [0, 0, 1, 1], [], []>} : vector<128x128xbf16>, vector<128x128xbf16>, vector<128x128xf32> -> vector<128x128xf32>
    %c136_86 = arith.constant 136 : index
    %c0_87 = arith.constant 0 : index
    %94 = vector.load %arg5[%c136_86, %c0_87] : memref<336x128xbf16, #tpu.memory_space<vmem>>, vector<128x128xbf16>
    %c1_88 = arith.constant 1 : index
    %c0_89 = arith.constant 0 : index
    %c0_90 = arith.constant 0 : index
    %95 = vector.load %arg2[%c1_88, %c0_89, %c0_90] : memref<9x128x128xbf16, #tpu.memory_space<vmem>>, vector<1x128x128xbf16>
    %96 = vector.shape_cast %95 : vector<1x128x128xbf16> to vector<128x128xbf16>
    %cst_91 = arith.constant dense<0.000000e+00> : vector<128x128xf32>
    %97 = tpu.matmul %94, %96, %cst_91 {dimension_numbers = #tpu.dot_dimension_numbers<[1], [0], [0], [1], [0, 0, 1, 1], [], []>} : vector<128x128xbf16>, vector<128x128xbf16>, vector<128x128xf32> -> vector<128x128xf32>
    %98 = arith.addf %93, %97 : vector<128x128xf32>
    %c137 = arith.constant 137 : index
    %c0_92 = arith.constant 0 : index
    %99 = vector.load %arg5[%c137, %c0_92] : memref<336x128xbf16, #tpu.memory_space<vmem>>, vector<128x128xbf16>
    %c2_93 = arith.constant 2 : index
    %c0_94 = arith.constant 0 : index
    %c0_95 = arith.constant 0 : index
    %100 = vector.load %arg2[%c2_93, %c0_94, %c0_95] : memref<9x128x128xbf16, #tpu.memory_space<vmem>>, vector<1x128x128xbf16>
    %101 = vector.shape_cast %100 : vector<1x128x128xbf16> to vector<128x128xbf16>
    %cst_96 = arith.constant dense<0.000000e+00> : vector<128x128xf32>
    %102 = tpu.matmul %99, %101, %cst_96 {dimension_numbers = #tpu.dot_dimension_numbers<[1], [0], [0], [1], [0, 0, 1, 1], [], []>} : vector<128x128xbf16>, vector<128x128xbf16>, vector<128x128xf32> -> vector<128x128xf32>
    %103 = arith.addf %98, %102 : vector<128x128xf32>
    %c167 = arith.constant 167 : index
    %c0_97 = arith.constant 0 : index
    %104 = vector.load %arg5[%c167, %c0_97] : memref<336x128xbf16, #tpu.memory_space<vmem>>, vector<128x128xbf16>
    %c3_98 = arith.constant 3 : index
    %c0_99 = arith.constant 0 : index
    %c0_100 = arith.constant 0 : index
    %105 = vector.load %arg2[%c3_98, %c0_99, %c0_100] : memref<9x128x128xbf16, #tpu.memory_space<vmem>>, vector<1x128x128xbf16>
    %106 = vector.shape_cast %105 : vector<1x128x128xbf16> to vector<128x128xbf16>
    %cst_101 = arith.constant dense<0.000000e+00> : vector<128x128xf32>
    %107 = tpu.matmul %104, %106, %cst_101 {dimension_numbers = #tpu.dot_dimension_numbers<[1], [0], [0], [1], [0, 0, 1, 1], [], []>} : vector<128x128xbf16>, vector<128x128xbf16>, vector<128x128xf32> -> vector<128x128xf32>
    %108 = arith.addf %103, %107 : vector<128x128xf32>
    %c168_102 = arith.constant 168 : index
    %c0_103 = arith.constant 0 : index
    %109 = vector.load %arg5[%c168_102, %c0_103] : memref<336x128xbf16, #tpu.memory_space<vmem>>, vector<128x128xbf16>
    %c4_104 = arith.constant 4 : index
    %c0_105 = arith.constant 0 : index
    %c0_106 = arith.constant 0 : index
    %110 = vector.load %arg2[%c4_104, %c0_105, %c0_106] : memref<9x128x128xbf16, #tpu.memory_space<vmem>>, vector<1x128x128xbf16>
    %111 = vector.shape_cast %110 : vector<1x128x128xbf16> to vector<128x128xbf16>
    %cst_107 = arith.constant dense<0.000000e+00> : vector<128x128xf32>
    %112 = tpu.matmul %109, %111, %cst_107 {dimension_numbers = #tpu.dot_dimension_numbers<[1], [0], [0], [1], [0, 0, 1, 1], [], []>} : vector<128x128xbf16>, vector<128x128xbf16>, vector<128x128xf32> -> vector<128x128xf32>
    %113 = arith.addf %108, %112 : vector<128x128xf32>
    %c169 = arith.constant 169 : index
    %c0_108 = arith.constant 0 : index
    %114 = vector.load %arg5[%c169, %c0_108] : memref<336x128xbf16, #tpu.memory_space<vmem>>, vector<128x128xbf16>
    %c5_109 = arith.constant 5 : index
    %c0_110 = arith.constant 0 : index
    %c0_111 = arith.constant 0 : index
    %115 = vector.load %arg2[%c5_109, %c0_110, %c0_111] : memref<9x128x128xbf16, #tpu.memory_space<vmem>>, vector<1x128x128xbf16>
    %116 = vector.shape_cast %115 : vector<1x128x128xbf16> to vector<128x128xbf16>
    %cst_112 = arith.constant dense<0.000000e+00> : vector<128x128xf32>
    %117 = tpu.matmul %114, %116, %cst_112 {dimension_numbers = #tpu.dot_dimension_numbers<[1], [0], [0], [1], [0, 0, 1, 1], [], []>} : vector<128x128xbf16>, vector<128x128xbf16>, vector<128x128xf32> -> vector<128x128xf32>
    %118 = arith.addf %113, %117 : vector<128x128xf32>
    %c199 = arith.constant 199 : index
    %c0_113 = arith.constant 0 : index
    %119 = vector.load %arg5[%c199, %c0_113] : memref<336x128xbf16, #tpu.memory_space<vmem>>, vector<128x128xbf16>
    %c6_114 = arith.constant 6 : index
    %c0_115 = arith.constant 0 : index
    %c0_116 = arith.constant 0 : index
    %120 = vector.load %arg2[%c6_114, %c0_115, %c0_116] : memref<9x128x128xbf16, #tpu.memory_space<vmem>>, vector<1x128x128xbf16>
    %121 = vector.shape_cast %120 : vector<1x128x128xbf16> to vector<128x128xbf16>
    %cst_117 = arith.constant dense<0.000000e+00> : vector<128x128xf32>
    %122 = tpu.matmul %119, %121, %cst_117 {dimension_numbers = #tpu.dot_dimension_numbers<[1], [0], [0], [1], [0, 0, 1, 1], [], []>} : vector<128x128xbf16>, vector<128x128xbf16>, vector<128x128xf32> -> vector<128x128xf32>
    %123 = arith.addf %118, %122 : vector<128x128xf32>
    %c200_118 = arith.constant 200 : index
    %c0_119 = arith.constant 0 : index
    %124 = vector.load %arg5[%c200_118, %c0_119] : memref<336x128xbf16, #tpu.memory_space<vmem>>, vector<128x128xbf16>
    %c7_120 = arith.constant 7 : index
    %c0_121 = arith.constant 0 : index
    %c0_122 = arith.constant 0 : index
    %125 = vector.load %arg2[%c7_120, %c0_121, %c0_122] : memref<9x128x128xbf16, #tpu.memory_space<vmem>>, vector<1x128x128xbf16>
    %126 = vector.shape_cast %125 : vector<1x128x128xbf16> to vector<128x128xbf16>
    %cst_123 = arith.constant dense<0.000000e+00> : vector<128x128xf32>
    %127 = tpu.matmul %124, %126, %cst_123 {dimension_numbers = #tpu.dot_dimension_numbers<[1], [0], [0], [1], [0, 0, 1, 1], [], []>} : vector<128x128xbf16>, vector<128x128xbf16>, vector<128x128xf32> -> vector<128x128xf32>
    %128 = arith.addf %123, %127 : vector<128x128xf32>
    %c201 = arith.constant 201 : index
    %c0_124 = arith.constant 0 : index
    %129 = vector.load %arg5[%c201, %c0_124] : memref<336x128xbf16, #tpu.memory_space<vmem>>, vector<128x128xbf16>
    %c8_125 = arith.constant 8 : index
    %c0_126 = arith.constant 0 : index
    %c0_127 = arith.constant 0 : index
    %130 = vector.load %arg2[%c8_125, %c0_126, %c0_127] : memref<9x128x128xbf16, #tpu.memory_space<vmem>>, vector<1x128x128xbf16>
    %131 = vector.shape_cast %130 : vector<1x128x128xbf16> to vector<128x128xbf16>
    %cst_128 = arith.constant dense<0.000000e+00> : vector<128x128xf32>
    %132 = tpu.matmul %129, %131, %cst_128 {dimension_numbers = #tpu.dot_dimension_numbers<[1], [0], [0], [1], [0, 0, 1, 1], [], []>} : vector<128x128xbf16>, vector<128x128xbf16>, vector<128x128xf32> -> vector<128x128xf32>
    %133 = arith.addf %128, %132 : vector<128x128xf32>
    %134 = vector.broadcast %26 : vector<1x128xf32> to vector<128x128xf32>
    %135 = arith.addf %133, %134 : vector<128x128xf32>
    %136 = arith.truncf %135 : vector<128x128xf32> to vector<128x128xbf16>
    %137 = vector.extract_strided_slice %136 {offsets = [0, 0], sizes = [25, 128], strides = [1, 1]} : vector<128x128xbf16> to vector<25x128xbf16>
    %c0_129 = arith.constant 0 : index
    %c100_130 = arith.constant 100 : index
    %c0_131 = arith.constant 0 : index
    %138 = vector.load %arg4[%c0_129, %c100_130, %c0_131] : memref<1x200x128xbf16, #tpu.memory_space<vmem>>, vector<1x25x128xbf16>
    %139 = vector.shape_cast %138 : vector<1x25x128xbf16> to vector<25x128xbf16>
    %140 = vector.shape_cast %137 : vector<25x128xbf16> to vector<1x25x128xbf16>
    tpu.vector_store %arg4[%c0_129, %c100_130, %c0_131], %140 {strides = array<i32>} : memref<1x200x128xbf16, #tpu.memory_space<vmem>>, vector<1x25x128xbf16>,
    %141 = vector.extract_strided_slice %136 {offsets = [32, 0], sizes = [25, 128], strides = [1, 1]} : vector<128x128xbf16> to vector<25x128xbf16>
    %c0_132 = arith.constant 0 : index
    %c125_133 = arith.constant 125 : index
    %c0_134 = arith.constant 0 : index
    %142 = vector.load %arg4[%c0_132, %c125_133, %c0_134] : memref<1x200x128xbf16, #tpu.memory_space<vmem>>, vector<1x25x128xbf16>
    %143 = vector.shape_cast %142 : vector<1x25x128xbf16> to vector<25x128xbf16>
    %144 = vector.shape_cast %141 : vector<25x128xbf16> to vector<1x25x128xbf16>
    tpu.vector_store %arg4[%c0_132, %c125_133, %c0_134], %144 {strides = array<i32>} : memref<1x200x128xbf16, #tpu.memory_space<vmem>>, vector<1x25x128xbf16>,
    %145 = vector.extract_strided_slice %136 {offsets = [64, 0], sizes = [25, 128], strides = [1, 1]} : vector<128x128xbf16> to vector<25x128xbf16>
    %c0_135 = arith.constant 0 : index
    %c150_136 = arith.constant 150 : index
    %c0_137 = arith.constant 0 : index
    %146 = vector.load %arg4[%c0_135, %c150_136, %c0_137] : memref<1x200x128xbf16, #tpu.memory_space<vmem>>, vector<1x25x128xbf16>
    %147 = vector.shape_cast %146 : vector<1x25x128xbf16> to vector<25x128xbf16>
    %148 = vector.shape_cast %145 : vector<25x128xbf16> to vector<1x25x128xbf16>
    tpu.vector_store %arg4[%c0_135, %c150_136, %c0_137], %148 {strides = array<i32>} : memref<1x200x128xbf16, #tpu.memory_space<vmem>>, vector<1x25x128xbf16>,
    %149 = vector.extract_strided_slice %136 {offsets = [96, 0], sizes = [25, 128], strides = [1, 1]} : vector<128x128xbf16> to vector<25x128xbf16>
    %c0_138 = arith.constant 0 : index
    %c175_139 = arith.constant 175 : index
    %c0_140 = arith.constant 0 : index
    %150 = vector.load %arg4[%c0_138, %c175_139, %c0_140] : memref<1x200x128xbf16, #tpu.memory_space<vmem>>, vector<1x25x128xbf16>
    %151 = vector.shape_cast %150 : vector<1x25x128xbf16> to vector<25x128xbf16>
    %152 = vector.shape_cast %149 : vector<25x128xbf16> to vector<1x25x128xbf16>
    tpu.vector_store %arg4[%c0_138, %c175_139, %c0_140], %152 {strides = array<i32>} : memref<1x200x128xbf16, #tpu.memory_space<vmem>>, vector<1x25x128xbf16>,
    return
  }
  func.func @transform_0(%arg0: i32) -> (i32, i32, i32) {
    %c0_i32 = arith.constant 0 : i32
    %c0_i32_0 = arith.constant 0 : i32
    %c0_i32_1 = arith.constant 0 : i32
    return %arg0, %c0_i32, %c0_i32_0 : i32, i32, i32
  }
  func.func @transform_1(%arg0: i32) -> (i32, i32, i32) {
    %c0_i32 = arith.constant 0 : i32
    %c0_i32_0 = arith.constant 0 : i32
    %c0_i32_1 = arith.constant 0 : i32
    %c0_i32_2 = arith.constant 0 : i32
    return %c0_i32, %c0_i32_0, %c0_i32_1 : i32, i32, i32
  }
  func.func @transform_2(%arg0: i32) -> (i32, i32) {
    %c0_i32 = arith.constant 0 : i32
    %c0_i32_0 = arith.constant 0 : i32
    %c0_i32_1 = arith.constant 0 : i32
    return %c0_i32, %c0_i32_0 : i32, i32
  }
  func.func @transform_3(%arg0: i32) -> (i32, i32, i32) {
    %c0_i32 = arith.constant 0 : i32
    %c0_i32_0 = arith.constant 0 : i32
    %c0_i32_1 = arith.constant 0 : i32
    return %arg0, %c0_i32, %c0_i32_0 : i32, i32, i32
  }
}

</mosaic_0001>

<llo_original>
// kernel: conv_mixer_pallas.1
$region0: #{conv_mixer_pallas.1}
  #allocation0 [shape = 'u32[]', space=smem, size = 0x4, offset = 0x4, fixed_abs, tag = 'smem constant byte address 0x4 - core index']
  #allocation1 [shape = 'u32[144,128]{1,0:T(1,128)}', space=vmem, size = 0x12000, scoped, tag = 'internal scratch']
  #allocation2 [shape = 'bf16[336,128]{1,0:T(16,128)(2,1)}', space=vmem, size = 0x15000, scoped, tag = 'scratch operand']
  %s0 = inlined_call_operand.vmem [shape: bf16[2,200,128], index: 0, kind: input, shape index: {}]
  %s1 = inlined_call_operand.vmem [shape: bf16[9,128,128], index: 1, kind: input, shape index: {}]
  %s2 = inlined_call_operand.vmem [shape: f32[1,128], index: 2, kind: input, shape index: {}]
  %s3 = inlined_call_operand.hbm [shape: bf16[2,200,128], index: 3, kind: output, shape index: {}]
  %s4 = sld [smem:[#allocation0]]
  $region45: #{conv_mixer_pallas.1} parent=0
    _
  %s6 = ssub.s32 1, %s4
  %s7 = scalar_select 0, %s6, %s4
  $region1: #{conv_mixer_pallas.1} parent=0
    #allocation3 [shape = 'u8[102400]{0}', space=vmem, size = 0x19000, scoped, tag = 'output window, operand 0']
    #allocation4 [shape = 's32[2]{0}', space=sflag, size = 0x8, scoped, tag = 'scoped memory for conv_mixer_pallas.1']
    %8 = vsyncpa [#allocation4], 0
    %s9 = scalar_lea.sflag [#allocation4], 1
    %10 = vsyncpa %s9, 0
    loop: start=0, step=1, limit=4
    $region2: #{conv_mixer_pallas.1} parent=1 // loop_pre_header
      _
    $region3: #{conv_mixer_pallas.1} parent=1 // loop_header
      %s12 = sphi 0, %s16
      %p13 = scmp.ge.s32.totalorder %s12, 4
      %s22 = sphi 0, %s24
      %s25 = sphi 0, %s22
      %s26 = sphi 0, %s25
      %s42 = sphi 0, %s26
      %s46 = sphi 0, %s46
      %s48 = sphi 0, %s46
      %s49 = sphi 0, %s48
      %s63 = sphi 0, %s49
      %s67 = sphi 0, %s67
      %s69 = sphi 0, %s67
      %s70 = sphi 0, %s69
      %s84 = sphi 0, %s70
      %s90 = sphi 0, %s92
      %s93 = sphi 0, %s90
      %s94 = sphi 0, %s93
      %s110 = sphi 0, %s94
    $region4: #{conv_mixer_pallas.1} parent=1 // loop_header_branch
      %15 = sbr.rel (%p13) target = $region8
    $region5: #{conv_mixer_pallas.1} parent=1 // loop_body
      %s17 = ssub.s32 %s12, 1
      %s18 = ssub.s32 %s12, 2
      %s19 = sadd.s32 %s12, 1
      %s20 = ssub.s32 %s12, %s19
      %p21 = scmp.eq.s32.totalorder %s20, 0
      %s23 = sadd.s32 %s22, 1
      %s24 = scalar_select %p21, %s22, %s23
      %p27 = pneg %p21
      %p28 = scmp.eq.s32.totalorder %s12, 1
      %p29 = por %p27, %p28
      %p30 = scmp.ne.s32.totalorder %s22, %s25
      %p31 = scmp.eq.s32.totalorder %s12, 0
      %p32 = por %p30, %p31
      %p33 = scmp.ne.s32.totalorder %s22, %s25
      %p34 = scmp.eq.s32.totalorder %s17, 1
      %p35 = por %p33, %p34
      %p36 = scmp.ne.s32.totalorder %s25, %s26
      %p37 = scmp.eq.s32.totalorder %s17, 0
      %p38 = por %p36, %p37
      %p39 = scmp.ne.s32.totalorder %s25, %s26
      %p40 = scmp.eq.s32.totalorder %s18, 1
      %p41 = por %p39, %p40
      %p43 = scmp.ne.s32.totalorder %s26, %s42
      %p44 = scmp.eq.s32.totalorder %s18, 0
      %p45 = por %p43, %p44
      %s47 = sadd.s32 %s46, 1
      %p50 = scmp.eq.s32.totalorder %s12, 1
      %p51 = scmp.ne.s32.totalorder %s46, %s48
      %p52 = scmp.eq.s32.totalorder %s12, 0
      %p53 = por %p51, %p52
      %p54 = scmp.ne.s32.totalorder %s46, %s48
      %p55 = scmp.eq.s32.totalorder %s17, 1
      %p56 = por %p54, %p55
      %p57 = scmp.ne.s32.totalorder %s48, %s49
      %p58 = scmp.eq.s32.totalorder %s17, 0
      %p59 = por %p57, %p58
      %p60 = scmp.ne.s32.totalorder %s48, %s49
      %p61 = scmp.eq.s32.totalorder %s18, 1
      %p62 = por %p60, %p61
      %p64 = scmp.ne.s32.totalorder %s49, %s63
      %p65 = scmp.eq.s32.totalorder %s18, 0
      %p66 = por %p64, %p65
      %s68 = sadd.s32 %s67, 1
      %p71 = scmp.eq.s32.totalorder %s12, 1
      %p72 = scmp.ne.s32.totalorder %s67, %s69
      %p73 = scmp.eq.s32.totalorder %s12, 0
      %p74 = por %p72, %p73
      %p75 = scmp.ne.s32.totalorder %s67, %s69
      %p76 = scmp.eq.s32.totalorder %s17, 1
      %p77 = por %p75, %p76
      %p78 = scmp.ne.s32.totalorder %s69, %s70
      %p79 = scmp.eq.s32.totalorder %s17, 0
      %p80 = por %p78, %p79
      %p81 = scmp.ne.s32.totalorder %s69, %s70
      %p82 = scmp.eq.s32.totalorder %s18, 1
      %p83 = por %p81, %p82
      %p85 = scmp.ne.s32.totalorder %s70, %s84
      %p86 = scmp.eq.s32.totalorder %s18, 0
      %p87 = por %p85, %p86
      %s88 = ssub.s32 %s12, %s19
      %p89 = scmp.eq.s32.totalorder %s88, 0
      %s91 = sadd.s32 %s90, 1
      %s92 = scalar_select %p89, %s90, %s91
      %p95 = pneg %p89
      %p96 = scmp.eq.s32.totalorder %s12, 1
      %p97 = por %p95, %p96
      %p98 = scmp.ne.s32.totalorder %s90, %s93
      %p99 = scmp.eq.s32.totalorder %s12, 0
      %p100 = por %p98, %p99
      %p101 = scmp.ne.s32.totalorder %s90, %s93
      %p102 = scmp.eq.s32.totalorder %s17, 1
      %p103 = por %p101, %p102
      %p104 = scmp.ne.s32.totalorder %s93, %s94
      %p105 = scmp.eq.s32.totalorder %s17, 0
      %p106 = por %p104, %p105
      %p107 = scmp.ne.s32.totalorder %s93, %s94
      %p108 = scmp.eq.s32.totalorder %s18, 1
      %p109 = por %p107, %p108
      %p111 = scmp.ne.s32.totalorder %s94, %s110
      %p112 = scmp.eq.s32.totalorder %s18, 0
      %p113 = por %p111, %p112
      %p114 = scmp.le.s32.totalorder 1, %s12
      %p115 = scmp.lt.s32.totalorder %s12, 3
      %p116 = pnand %p114, %p115
      %p117 = pneg %p116
      // Predicated region
      $region9: #{conv_mixer_pallas.1} parent=5 // pred_check
        _
      $region10: #{conv_mixer_pallas.1} parent=5 // pred_check_branch
        %119 = sbr.rel (%p116) target = $region12
      $region11: #{conv_mixer_pallas.1} parent=5 // pred_region
        %s120 = ssub.s32 %s12, 1
        // Predicated region
        $region13: #{conv_mixer_pallas.1} parent=11 // pred_check
          %p121 = pneg %p59
        $region14: #{conv_mixer_pallas.1} parent=11 // pred_check_branch
          %123 = sbr.rel (%p121) target = $region16
        $region15: #{conv_mixer_pallas.1} parent=11 // pred_region
          _
        $region16: #{conv_mixer_pallas.1} parent=11 // pred_fallthru
          _
        // Predicated region
        $region17: #{conv_mixer_pallas.1} parent=11 // pred_check
          %p124 = pneg %p80
        $region18: #{conv_mixer_pallas.1} parent=11 // pred_check_branch
          %126 = sbr.rel (%p124) target = $region20
        $region19: #{conv_mixer_pallas.1} parent=11 // pred_region
          _
        $region20: #{conv_mixer_pallas.1} parent=11 // pred_fallthru
          _
      $region12: #{conv_mixer_pallas.1} parent=5 // pred_fallthru
        _
      %p127 = scmp.lt.s32.totalorder %s12, 2
      // Predicated region
      $region21: #{conv_mixer_pallas.1} parent=5 // pred_check
        %p128 = pneg %p127
      $region22: #{conv_mixer_pallas.1} parent=5 // pred_check_branch
        %130 = sbr.rel (%p128) target = $region24
      $region23: #{conv_mixer_pallas.1} parent=5 // pred_region
        // Predicated region
        $region25: #{conv_mixer_pallas.1} parent=23 // pred_check
          %p131 = pneg %p32
        $region26: #{conv_mixer_pallas.1} parent=23 // pred_check_branch
          %133 = sbr.rel (%p131) target = $region28
        $region27: #{conv_mixer_pallas.1} parent=23 // pred_region
          %p134 = scmp.lt.s32.totalorder %s12, 1
          %s135 = scalar_select %p134, %s12, 1
          %s136 = smul.addr %s135, 25
          %s137 = smul.addr %s136, 4
          %s138 = scalar_lea.vmem %s0, %s137
        $region28: #{conv_mixer_pallas.1} parent=23 // pred_fallthru
          _
      $region24: #{conv_mixer_pallas.1} parent=5 // pred_fallthru
        _
      %p139 = scmp.le.s32.totalorder 1, %s12
      %p140 = scmp.lt.s32.totalorder %s12, 3
      %p141 = pnand %p139, %p140
      %p142 = pneg %p141
      // Predicated region
      $region29: #{conv_mixer_pallas.1} parent=5 // pred_check
        _
      $region30: #{conv_mixer_pallas.1} parent=5 // pred_check_branch
        %144 = sbr.rel (%p141) target = $region32
      $region31: #{conv_mixer_pallas.1} parent=5 // pred_region
        %s145 = ssub.s32 %s12, 1
        %p146 = scmp.lt.s32.totalorder %s17, 1
        %s147 = scalar_select %p146, %s17, 1
        %s148 = smul.addr %s147, 25
        %s149 = smul.addr %s148, 4
        %s150 = scalar_lea.vmem %s0, %s149
        %p151 = pneg %p38
        %p152 = pneg %p35
        %p153 = pneg %p59
        %p154 = pneg %p56
        %p155 = pneg %p80
        %p156 = pneg %p77
        %p157 = pneg %p106
        %p158 = pneg %p103
        %s159 = sand.u32 %s93, 1
        %s160 = scalar_lea.sflag [#allocation4], %s159
        %s161 = sand.u32 %s93, 1
        %s162 = smul.addr %s161, 100
        %s163 = scalar_lea.vmem [#allocation3], %s162
        %p164 = scmp.lt.s32.totalorder %s17, 1
        %s165 = scalar_select %p164, %s17, 1
        %s166 = smul.addr %s165, 25
        %s167 = smul.addr %s166, 4
        %s168 = scalar_lea.vmem %s0, %s167
        %170 = vst [vmem:[#allocation2] sm:$0xff] 0
        %171 = vst [vmem:[#allocation2 + $0x8] sm:$0xff] 0
        %172 = vst [vmem:[#allocation2 + $0x10] sm:$0xff] 0
        %173 = vst [vmem:[#allocation2 + $0x18] sm:$0xff] 0
        %174 = vst [vmem:[#allocation2 + $0x20] sm:$0xff] 0
        %175 = vst [vmem:[#allocation2 + $0x28] sm:$0xff] 0
        %176 = vst [vmem:[#allocation2 + $0x30] sm:$0xff] 0
        %177 = vst [vmem:[#allocation2 + $0x38] sm:$0xff] 0
        %178 = vst [vmem:[#allocation2 + $0x40] sm:$0xff] 0
        %179 = vst [vmem:[#allocation2 + $0x48] sm:$0xff] 0
        %180 = vst [vmem:[#allocation2 + $0x50] sm:$0xff] 0
        %181 = vst [vmem:[#allocation2 + $0x58] sm:$0xff] 0
        %182 = vst [vmem:[#allocation2 + $0x60] sm:$0xff] 0
        %183 = vst [vmem:[#allocation2 + $0x68] sm:$0xff] 0
        %184 = vst [vmem:[#allocation2 + $0x70] sm:$0xff] 0
        %185 = vst [vmem:[#allocation2 + $0x78] sm:$0xff] 0
        %186 = vst [vmem:[#allocation2 + $0x80] sm:$0xff] 0
        %187 = vst [vmem:[#allocation2 + $0x88] sm:$0xff] 0
        %188 = vst [vmem:[#allocation2 + $0x90] sm:$0xff] 0
        %189 = vst [vmem:[#allocation2 + $0x98] sm:$0xff] 0
        %190 = vst [vmem:[#allocation2 + $0xa0] sm:$0xff] 0
        %v191 = vld [vmem:[%s168] sm:$0xf]
        %v192 = vld [vmem:[%s168 + $0x4] sm:$0xf]
        %v193 = vld [vmem:[%s168 + $0x8] sm:$0xf]
        %v194 = vld [vmem:[%s168 + $0xc] sm:$0x1]
        %v199 = vunpack.c.l.b16 %v191
        %v200 = vunpack.c.l.b16 %v192
        %v201 = vunpack.c.l.b16 %v193
        %v202 = vunpack.c.l.b16 %v194
        %v203 = vpack.c.b16 %v199, %v199
        %v204 = vpack.c.b16 %v201, %v200
        %v205 = vpack.c.b16 %v202, %v202
        %209 = vst [vmem:[#allocation2 + $0x10] sm:$0xf0] %v203
        %210 = vst [vmem:[#allocation2 + $0x18] sm:$0xff] %v204
        %vm211 = vcmask 1040384
        %vm212 = vsmask.f32 256
        %vm213 = vmand %vm211, %vm212
        %v214 = vld [vmem:[#allocation2 + $0x20] sm:$0x1]
        %v215 = vsel %vm213, %v205, %v214
        %216 = vst [vmem:[#allocation2 + $0x20] sm:$0x1] %v215
        %v217 = vld [vmem:[%s168 + $0xc] sm:$0xf]
        %v218 = vld [vmem:[%s168 + $0x10] sm:$0xf]
        %v219 = vld [vmem:[%s168 + $0x14] sm:$0xf]
        %v220 = vld [vmem:[%s168 + $0x18] sm:$0x1]
        %v225 = vunpack.c.l.b16 %v217
        %v226 = vunpack.c.l.b16 %v218
        %v227 = vunpack.c.l.b16 %v219
        %v228 = vunpack.c.l.b16 %v220
        %v229 = vpack.c.b16 %v226, %v225
        %v230 = vpack.c.b16 %v228, %v227
        %vm231 = vsmask.f32 3328
        %v233 = vshrl.u32 %v229, 16
        %v235 = vrot.slane %v233, 4
        %v236 = vshll.u32 %v229, 16
        %v238 = vrot.slane %v236, 5
        %v239 = vor.u32 %v235, %v238
        %v241 = vshrl.u32 %v230, 16
        %v243 = vrot.slane %v241, 4
        %v244 = vshll.u32 %v230, 16
        %v246 = vrot.slane %v244, 5
        %v247 = vor.u32 %v243, %v246
        %v248 = vsel %vm231, %v239, %v247
        %252 = vst [vmem:[#allocation2 + $0x20] sm:$0xf0] %v239
        %253 = vst [vmem:[#allocation2 + $0x28] sm:$0xff] %v248
        %v254 = vld [vmem:[#allocation2 + $0x30] sm:$0x1]
        %v255 = vsel %vm213, %v243, %v254
        %256 = vst [vmem:[#allocation2 + $0x30] sm:$0x1] %v255
        %v257 = vld [vmem:[%s168 + $0x18] sm:$0xe]
        %v258 = vld [vmem:[%s168 + $0x1c] sm:$0xf]
        %v259 = vld [vmem:[%s168 + $0x20] sm:$0xf]
        %v260 = vld [vmem:[%s168 + $0x24] sm:$0x3]
        %v265 = vunpack.c.l.b16 %v257
        %v266 = vunpack.c.l.b16 %v258
        %v267 = vunpack.c.l.b16 %v259
        %v268 = vunpack.c.l.b16 %v260
        %v269 = vpack.c.b16 %v266, %v265
        %v270 = vpack.c.b16 %v268, %v267
        %vm271 = vcmask 1042432
        %v272 = vrot.slane %v269, 5
        %v273 = vrot.slane %v270, 5
        %v274 = vsel %vm271, %v272, %v273
        %278 = vst [vmem:[#allocation2 + $0x30] sm:$0xf0] %v272
        %279 = vst [vmem:[#allocation2 + $0x38] sm:$0xff] %v274
        %v280 = vld [vmem:[#allocation2 + $0x40] sm:$0x1]
        %v281 = vsel %vm213, %v273, %v280
        %282 = vst [vmem:[#allocation2 + $0x40] sm:$0x1] %v281
        %v283 = vld [vmem:[%s168 + $0x24] sm:$0xe]
        %v284 = vld [vmem:[%s168 + $0x28] sm:$0xf]
        %v285 = vld [vmem:[%s168 + $0x2c] sm:$0xf]
        %v286 = vld [vmem:[%s168 + $0x30] sm:$0x3]
        %v291 = vunpack.c.l.b16 %v283
        %v292 = vunpack.c.l.b16 %v284
        %v293 = vunpack.c.l.b16 %v285
        %v294 = vunpack.c.l.b16 %v286
        %v295 = vpack.c.b16 %v292, %v291
        %v296 = vpack.c.b16 %v294, %v293
        %vm297 = vsmask.f32 2304
        %v299 = vshrl.u32 %v295, 16
        %v301 = vrot.slane %v299, 5
        %v302 = vshll.u32 %v295, 16
        %v304 = vrot.slane %v302, 6
        %v305 = vor.u32 %v301, %v304
        %v307 = vshrl.u32 %v296, 16
        %v309 = vrot.slane %v307, 5
        %v310 = vshll.u32 %v296, 16
        %v312 = vrot.slane %v310, 6
        %v313 = vor.u32 %v309, %v312
        %v314 = vsel %vm297, %v305, %v313
        %318 = vst [vmem:[#allocation2 + $0x40] sm:$0xf0] %v305
        %319 = vst [vmem:[#allocation2 + $0x48] sm:$0xff] %v314
        %v320 = vld [vmem:[#allocation2 + $0x50] sm:$0x1]
        %v321 = vsel %vm213, %v309, %v320
        %322 = vst [vmem:[#allocation2 + $0x50] sm:$0x1] %v321
        %v323 = vld [vmem:[%s168 + $0x30] sm:$0xc]
        %v324 = vld [vmem:[%s168 + $0x34] sm:$0xf]
        %v325 = vld [vmem:[%s168 + $0x38] sm:$0xf]
        %v326 = vld [vmem:[%s168 + $0x3c] sm:$0x7]
        %v331 = vunpack.c.l.b16 %v323
        %v332 = vunpack.c.l.b16 %v324
        %v333 = vunpack.c.l.b16 %v325
        %v334 = vunpack.c.l.b16 %v326
        %v335 = vpack.c.b16 %v332, %v331
        %v336 = vpack.c.b16 %v334, %v333
        %vm337 = vcmask 1041408
        %v338 = vrot.slane %v335, 6
        %v339 = vrot.slane %v336, 6
        %v340 = vsel %vm337, %v338, %v339
        %344 = vst [vmem:[#allocation2 + $0x50] sm:$0xf0] %v338
        %345 = vst [vmem:[#allocation2 + $0x58] sm:$0xff] %v340
        %v346 = vld [vmem:[#allocation2 + $0x60] sm:$0x1]
        %v347 = vsel %vm213, %v339, %v346
        %348 = vst [vmem:[#allocation2 + $0x60] sm:$0x1] %v347
        %v349 = vld [vmem:[%s168 + $0x3c] sm:$0xc]
        %v350 = vld [vmem:[%s168 + $0x40] sm:$0xf]
        %v351 = vld [vmem:[%s168 + $0x44] sm:$0xf]
        %v352 = vld [vmem:[%s168 + $0x48] sm:$0x7]
        %v357 = vunpack.c.l.b16 %v349
        %v358 = vunpack.c.l.b16 %v350
        %v359 = vunpack.c.l.b16 %v351
        %v360 = vunpack.c.l.b16 %v352
        %v361 = vpack.c.b16 %v358, %v357
        %v362 = vpack.c.b16 %v360, %v359
        %vm363 = vsmask.f32 1280
        %v365 = vshrl.u32 %v361, 16
        %v367 = vrot.slane %v365, 6
        %v368 = vshll.u32 %v361, 16
        %v370 = vrot.slane %v368, 7
        %v371 = vor.u32 %v367, %v370
        %v373 = vshrl.u32 %v362, 16
        %v375 = vrot.slane %v373, 6
        %v376 = vshll.u32 %v362, 16
        %v378 = vrot.slane %v376, 7
        %v379 = vor.u32 %v375, %v378
        %v380 = vsel %vm363, %v371, %v379
        %384 = vst [vmem:[#allocation2 + $0x60] sm:$0xf0] %v371
        %385 = vst [vmem:[#allocation2 + $0x68] sm:$0xff] %v380
        %v386 = vld [vmem:[#allocation2 + $0x70] sm:$0x1]
        %v387 = vsel %vm213, %v375, %v386
        %388 = vst [vmem:[#allocation2 + $0x70] sm:$0x1] %v387
        %v389 = vld [vmem:[%s168 + $0x48] sm:$0x8]
        %v390 = vld [vmem:[%s168 + $0x4c] sm:$0xf]
        %v391 = vld [vmem:[%s168 + $0x50] sm:$0xf]
        %v392 = vld [vmem:[%s168 + $0x54] sm:$0xf]
        %v397 = vunpack.c.l.b16 %v389
        %v398 = vunpack.c.l.b16 %v390
        %v399 = vunpack.c.l.b16 %v391
        %v400 = vunpack.c.l.b16 %v392
        %v401 = vpack.c.b16 %v398, %v397
        %v402 = vpack.c.b16 %v400, %v399
        %v403 = vrot.slane %v401, 7
        %v404 = vrot.slane %v402, 7
        %v405 = vsel %vm211, %v403, %v404
        %409 = vst [vmem:[#allocation2 + $0x70] sm:$0xf0] %v403
        %410 = vst [vmem:[#allocation2 + $0x78] sm:$0xff] %v405
        %v411 = vld [vmem:[#allocation2 + $0x80] sm:$0x1]
        %v412 = vsel %vm213, %v404, %v411
        %413 = vst [vmem:[#allocation2 + $0x80] sm:$0x1] %v412
        %v414 = vld [vmem:[%s168 + $0x54] sm:$0x8]
        %v415 = vld [vmem:[%s168 + $0x58] sm:$0xf]
        %v416 = vld [vmem:[%s168 + $0x5c] sm:$0xf]
        %v417 = vld [vmem:[%s168 + $0x60] sm:$0xf]
        %v422 = vunpack.c.l.b16 %v414
        %v423 = vunpack.c.l.b16 %v415
        %v424 = vunpack.c.l.b16 %v416
        %v425 = vunpack.c.l.b16 %v417
        %v426 = vpack.c.b16 %v423, %v422
        %v427 = vpack.c.b16 %v425, %v424
        %v429 = vshrl.u32 %v426, 16
        %v431 = vrot.slane %v429, 7
        %v432 = vshll.u32 %v426, 16
        %v434 = vor.u32 %v431, %v432
        %v436 = vshrl.u32 %v427, 16
        %v438 = vrot.slane %v436, 7
        %v439 = vshll.u32 %v427, 16
        %v441 = vor.u32 %v438, %v439
        %v442 = vsel %vm212, %v431, %v441
        %446 = vst [vmem:[#allocation2 + $0x80] sm:$0xf0] %v434
        %447 = vst [vmem:[#allocation2 + $0x88] sm:$0xff] %v442
        %v448 = vld [vmem:[#allocation2 + $0x90] sm:$0x1]
        %v449 = vsel %vm213, %v438, %v448
        %450 = vst [vmem:[#allocation2 + $0x90] sm:$0x1] %v449
        %v451 = vld [vmem:[%s2] sm:$0x1]
        %v452 = vld [vmem:[#allocation2] sm:$0xf8]
        %v453 = vld [vmem:[#allocation2 + $0x8] sm:$0xff]
        %v454 = vld [vmem:[#allocation2 + $0x10] sm:$0xff]
        %v455 = vld [vmem:[#allocation2 + $0x18] sm:$0xff]
        %v456 = vld [vmem:[#allocation2 + $0x20] sm:$0xff]
        %v457 = vld [vmem:[#allocation2 + $0x28] sm:$0xff]
        %v458 = vld [vmem:[#allocation2 + $0x30] sm:$0xff]
        %v459 = vld [vmem:[#allocation2 + $0x38] sm:$0xff]
        %v460 = vld [vmem:[#allocation2 + $0x40] sm:$0xf]
        %v461 = vld [vmem:[%s1] sm:$0xf]
        %v462 = vld [vmem:[%s1 + $0x4] sm:$0xf]
        %v463 = vld [vmem:[%s1 + $0x8] sm:$0xf]
        %v464 = vld [vmem:[%s1 + $0xc] sm:$0xf]
        %v465 = vld [vmem:[%s1 + $0x10] sm:$0xf]
        %v466 = vld [vmem:[%s1 + $0x14] sm:$0xf]
        %v467 = vld [vmem:[%s1 + $0x18] sm:$0xf]
        %v468 = vld [vmem:[%s1 + $0x1c] sm:$0xf]
        %v469 = vld [vmem:[%s1 + $0x20] sm:$0xf]
        %v470 = vld [vmem:[%s1 + $0x24] sm:$0xf]
        %v471 = vld [vmem:[%s1 + $0x28] sm:$0xf]
        %v472 = vld [vmem:[%s1 + $0x2c] sm:$0xf]
        %v473 = vld [vmem:[%s1 + $0x30] sm:$0xf]
        %v474 = vld [vmem:[%s1 + $0x34] sm:$0xf]
        %v475 = vld [vmem:[%s1 + $0x38] sm:$0xf]
        %v476 = vld [vmem:[%s1 + $0x3c] sm:$0xf]
        %v477 = vld [vmem:[#allocation2] sm:$0xf0]
        %s478 = scalar_lea.vmem %s1, 64
        %v479 = vld [vmem:[%s478] sm:$0xf]
        %v480 = vld [vmem:[%s478 + $0x4] sm:$0xf]
        %v481 = vld [vmem:[%s478 + $0x8] sm:$0xf]
        %v482 = vld [vmem:[%s478 + $0xc] sm:$0xf]
        %v483 = vld [vmem:[%s478 + $0x10] sm:$0xf]
        %v484 = vld [vmem:[%s478 + $0x14] sm:$0xf]
        %v485 = vld [vmem:[%s478 + $0x18] sm:$0xf]
        %v486 = vld [vmem:[%s478 + $0x1c] sm:$0xf]
        %v487 = vld [vmem:[%s478 + $0x20] sm:$0xf]
        %v488 = vld [vmem:[%s478 + $0x24] sm:$0xf]
        %v489 = vld [vmem:[%s478 + $0x28] sm:$0xf]
        %v490 = vld [vmem:[%s478 + $0x2c] sm:$0xf]
        %v491 = vld [vmem:[%s478 + $0x30] sm:$0xf]
        %v492 = vld [vmem:[%s478 + $0x34] sm:$0xf]
        %v493 = vld [vmem:[%s478 + $0x38] sm:$0xf]
        %v494 = vld [vmem:[%s478 + $0x3c] sm:$0xf]
        %vm504 = vcmask 1043456
        %v505 = vrot.slane %v477, 4
        %v506 = vrot.slane %v453, 4
        %v507 = vsel %vm504, %v505, %v506
        %v508 = vrot.slane %v454, 4
        %v509 = vsel %vm504, %v506, %v508
        %v510 = vrot.slane %v455, 4
        %v511 = vsel %vm504, %v508, %v510
        %v512 = vrot.slane %v456, 4
        %v513 = vsel %vm504, %v510, %v512
        %v514 = vrot.slane %v457, 4
        %v515 = vsel %vm504, %v512, %v514
        %v516 = vrot.slane %v458, 4
        %v517 = vsel %vm504, %v514, %v516
        %v518 = vrot.slane %v459, 4
        %v519 = vsel %vm504, %v516, %v518
        %v520 = vrot.slane %v460, 4
        %v521 = vsel %vm504, %v518, %v520
        %v546 = vunpack.c.l.b16 %v479
        %v547 = vunpack.c.l.b16 %v480
        %v548 = vunpack.c.l.b16 %v481
        %v549 = vunpack.c.l.b16 %v482
        %v550 = vunpack.c.l.b16 %v483
        %v551 = vunpack.c.l.b16 %v484
        %v552 = vunpack.c.l.b16 %v485
        %v553 = vunpack.c.l.b16 %v486
        %v554 = vunpack.c.l.b16 %v487
        %v555 = vunpack.c.l.b16 %v488
        %v556 = vunpack.c.l.b16 %v489
        %v557 = vunpack.c.l.b16 %v490
        %v558 = vunpack.c.l.b16 %v491
        %v559 = vunpack.c.l.b16 %v492
        %v560 = vunpack.c.l.b16 %v493
        %v561 = vunpack.c.l.b16 %v494
        %v562 = vpack.c.b16 %v547, %v546
        %v563 = vpack.c.b16 %v549, %v548
        %v564 = vpack.c.b16 %v551, %v550
        %v565 = vpack.c.b16 %v553, %v552
        %v566 = vpack.c.b16 %v555, %v554
        %v567 = vpack.c.b16 %v557, %v556
        %v568 = vpack.c.b16 %v559, %v558
        %v569 = vpack.c.b16 %v561, %v560
        %578 = vmatprep.subr.bf16.mxu0 0
        %579 = vmatpush1.bf16.msra.mxu0 %v562
        %580 = vmatprep.subr.bf16.mxu0 0
        %581 = vmatpush1.bf16.msra.mxu0 %v563
        %582 = vmatprep.subr.bf16.mxu0 0
        %583 = vmatpush1.bf16.msra.mxu0 %v564
        %584 = vmatprep.subr.bf16.mxu0 0
        %585 = vmatpush1.bf16.msra.mxu0 %v565
        %586 = vmatprep.subr.bf16.mxu0 0
        %587 = vmatpush1.bf16.msra.mxu0 %v566
        %588 = vmatprep.subr.bf16.mxu0 0
        %589 = vmatpush1.bf16.msra.mxu0 %v567
        %590 = vmatprep.subr.bf16.mxu0 0
        %591 = vmatpush1.bf16.msra.mxu0 %v568
        %592 = vmatprep.subr.bf16.mxu0 0
        %593 = vmatpush1.bf16.msra.mxu0 %v569
        %594 = vmatprep.subr.bf16.mxu0 0
        %595 = vmatpush1.bf16.msra.mxu0 0
        %596 = vmatprep.subr.bf16.mxu0 0
        %597 = vmatpush1.bf16.msra.mxu0 0
        %598 = vmatprep.subr.bf16.mxu0 0
        %599 = vmatpush1.bf16.msra.mxu0 0
        %600 = vmatprep.subr.bf16.mxu0 0
        %601 = vmatpush1.bf16.msra.mxu0 0
        %602 = vmatprep.subr.bf16.mxu0 0
        %603 = vmatpush1.bf16.msra.mxu0 0
        %604 = vmatprep.subr.bf16.mxu0 0
        %605 = vmatpush1.bf16.msra.mxu0 0
        %606 = vmatprep.subr.bf16.mxu0 0
        %607 = vmatpush1.bf16.msra.mxu0 0
        %608 = vmatprep.subr.bf16.mxu0 0
        %609 = vmatpush1.bf16.msra.mxu0 0
        %610 = vmatprep.mubr.bf16.mxu0 0
        %611 = vmatmul.mubr.bf16.gmra.mrb[0].mxu0 %v507
        %v612 = vpop.f32.mrb[0].mxu0
        %v613 = vadd.f32 0.0, %v612
        %v614 = vpop.f32.mrb[0].mxu0
        %v615 = vpop.f32.mrb[0].mxu0
        %v616 = vadd.f32 0.0, %v615
        %v617 = vpop.f32.mrb[0].mxu0
        %618 = vmatprep.mubr.bf16.mxu0 0
        %619 = vmatmul.mubr.bf16.gmra.mrb[0].mxu0 %v509
        %v620 = vpop.f32.mrb[0].mxu0
        %v621 = vadd.f32 0.0, %v620
        %v622 = vpop.f32.mrb[0].mxu0
        %v623 = vpop.f32.mrb[0].mxu0
        %v624 = vadd.f32 0.0, %v623
        %v625 = vpop.f32.mrb[0].mxu0
        %626 = vmatprep.mubr.bf16.mxu0 0
        %627 = vmatmul.mubr.bf16.gmra.mrb[0].mxu0 %v511
        %v628 = vpop.f32.mrb[0].mxu0
        %v629 = vadd.f32 0.0, %v628
        %v630 = vpop.f32.mrb[0].mxu0
        %v631 = vpop.f32.mrb[0].mxu0
        %v632 = vadd.f32 0.0, %v631
        %v633 = vpop.f32.mrb[0].mxu0
        %634 = vmatprep.mubr.bf16.mxu0 0
        %635 = vmatmul.mubr.bf16.gmra.mrb[0].mxu0 %v513
        %v636 = vpop.f32.mrb[0].mxu0
        %v637 = vadd.f32 0.0, %v636
        %v638 = vpop.f32.mrb[0].mxu0
        %v639 = vpop.f32.mrb[0].mxu0
        %v640 = vadd.f32 0.0, %v639
        %v641 = vpop.f32.mrb[0].mxu0
        %642 = vmatprep.mubr.bf16.mxu0 0
        %643 = vmatmul.mubr.bf16.gmra.mrb[0].mxu0 %v515
        %v644 = vpop.f32.mrb[0].mxu0
        %v645 = vadd.f32 0.0, %v644
        %v646 = vpop.f32.mrb[0].mxu0
        %v647 = vpop.f32.mrb[0].mxu0
        %v648 = vadd.f32 0.0, %v647
        %v649 = vpop.f32.mrb[0].mxu0
        %650 = vmatprep.mubr.bf16.mxu0 0
        %651 = vmatmul.mubr.bf16.gmra.mrb[0].mxu0 %v517
        %v652 = vpop.f32.mrb[0].mxu0
        %v653 = vadd.f32 0.0, %v652
        %v654 = vpop.f32.mrb[0].mxu0
        %v655 = vpop.f32.mrb[0].mxu0
        %v656 = vadd.f32 0.0, %v655
        %v657 = vpop.f32.mrb[0].mxu0
        %658 = vmatprep.mubr.bf16.mxu0 0
        %659 = vmatmul.mubr.bf16.gmra.mrb[0].mxu0 %v519
        %v660 = vpop.f32.mrb[0].mxu0
        %v661 = vadd.f32 0.0, %v660
        %v662 = vpop.f32.mrb[0].mxu0
        %v663 = vpop.f32.mrb[0].mxu0
        %v664 = vadd.f32 0.0, %v663
        %v665 = vpop.f32.mrb[0].mxu0
        %666 = vmatprep.mubr.bf16.mxu0 0
        %667 = vmatmul.mubr.bf16.gmra.mrb[0].mxu0 %v521
        %v668 = vpop.f32.mrb[0].mxu0
        %v669 = vadd.f32 0.0, %v668
        %v670 = vpop.f32.mrb[0].mxu0
        %v671 = vpop.f32.mrb[0].mxu0
        %v672 = vadd.f32 0.0, %v671
        %v673 = vpop.f32.mrb[0].mxu0
        %674 = vdwg.mxu0
        %vm675 = vsmask.f32 4352
        %v677 = vshrl.u32 %v452, 16
        %v679 = vrot.slane %v677, 3
        %v680 = vshll.u32 %v452, 16
        %v682 = vrot.slane %v680, 4
        %v683 = vor.u32 %v679, %v682
        %v685 = vshrl.u32 %v453, 16
        %v687 = vrot.slane %v685, 3
        %v688 = vshll.u32 %v453, 16
        %v690 = vrot.slane %v688, 4
        %v691 = vor.u32 %v687, %v690
        %v692 = vsel %vm675, %v683, %v691
        %v694 = vshrl.u32 %v454, 16
        %v696 = vrot.slane %v694, 3
        %v697 = vshll.u32 %v454, 16
        %v699 = vrot.slane %v697, 4
        %v700 = vor.u32 %v696, %v699
        %v701 = vsel %vm675, %v691, %v700
        %v703 = vshrl.u32 %v455, 16
        %v705 = vrot.slane %v703, 3
        %v706 = vshll.u32 %v455, 16
        %v708 = vrot.slane %v706, 4
        %v709 = vor.u32 %v705, %v708
        %v710 = vsel %vm675, %v700, %v709
        %v712 = vshrl.u32 %v456, 16
        %v714 = vrot.slane %v712, 3
        %v715 = vshll.u32 %v456, 16
        %v717 = vrot.slane %v715, 4
        %v718 = vor.u32 %v714, %v717
        %v719 = vsel %vm675, %v709, %v718
        %v721 = vshrl.u32 %v457, 16
        %v723 = vrot.slane %v721, 3
        %v724 = vshll.u32 %v457, 16
        %v726 = vrot.slane %v724, 4
        %v727 = vor.u32 %v723, %v726
        %v728 = vsel %vm675, %v718, %v727
        %v730 = vshrl.u32 %v458, 16
        %v732 = vrot.slane %v730, 3
        %v733 = vshll.u32 %v458, 16
        %v735 = vrot.slane %v733, 4
        %v736 = vor.u32 %v732, %v735
        %v737 = vsel %vm675, %v727, %v736
        %v739 = vshrl.u32 %v459, 16
        %v741 = vrot.slane %v739, 3
        %v742 = vshll.u32 %v459, 16
        %v744 = vrot.slane %v742, 4
        %v745 = vor.u32 %v741, %v744
        %v746 = vsel %vm675, %v736, %v745
        %v748 = vshrl.u32 %v460, 16
        %v750 = vrot.slane %v748, 3
        %v751 = vshll.u32 %v460, 16
        %v753 = vrot.slane %v751, 4
        %v754 = vor.u32 %v750, %v753
        %v755 = vsel %vm675, %v745, %v754
        %v780 = vunpack.c.l.b16 %v461
        %v781 = vunpack.c.l.b16 %v462
        %v782 = vunpack.c.l.b16 %v463
        %v783 = vunpack.c.l.b16 %v464
        %v784 = vunpack.c.l.b16 %v465
        %v785 = vunpack.c.l.b16 %v466
        %v786 = vunpack.c.l.b16 %v467
        %v787 = vunpack.c.l.b16 %v468
        %v788 = vunpack.c.l.b16 %v469
        %v789 = vunpack.c.l.b16 %v470
        %v790 = vunpack.c.l.b16 %v471
        %v791 = vunpack.c.l.b16 %v472
        %v792 = vunpack.c.l.b16 %v473
        %v793 = vunpack.c.l.b16 %v474
        %v794 = vunpack.c.l.b16 %v475
        %v795 = vunpack.c.l.b16 %v476
        %v796 = vpack.c.b16 %v781, %v780
        %v797 = vpack.c.b16 %v783, %v782
        %v798 = vpack.c.b16 %v785, %v784
        %v799 = vpack.c.b16 %v787, %v786
        %v800 = vpack.c.b16 %v789, %v788
        %v801 = vpack.c.b16 %v791, %v790
        %v802 = vpack.c.b16 %v793, %v792
        %v803 = vpack.c.b16 %v795, %v794
        %812 = vmatprep.subr.bf16.mxu0 0
        %813 = vmatpush1.bf16.msra.mxu0 %v796
        %814 = vmatprep.subr.bf16.mxu0 0
        %815 = vmatpush1.bf16.msra.mxu0 %v797
        %816 = vmatprep.subr.bf16.mxu0 0
        %817 = vmatpush1.bf16.msra.mxu0 %v798
        %818 = vmatprep.subr.bf16.mxu0 0
        %819 = vmatpush1.bf16.msra.mxu0 %v799
        %820 = vmatprep.subr.bf16.mxu0 0
        %821 = vmatpush1.bf16.msra.mxu0 %v800
        %822 = vmatprep.subr.bf16.mxu0 0
        %823 = vmatpush1.bf16.msra.mxu0 %v801
        %824 = vmatprep.subr.bf16.mxu0 0
        %825 = vmatpush1.bf16.msra.mxu0 %v802
        %826 = vmatprep.subr.bf16.mxu0 0
        %827 = vmatpush1.bf16.msra.mxu0 %v803
        %828 = vmatprep.subr.bf16.mxu0 0
        %829 = vmatpush1.bf16.msra.mxu0 0
        %830 = vmatprep.subr.bf16.mxu0 0
        %831 = vmatpush1.bf16.msra.mxu0 0
        %832 = vmatprep.subr.bf16.mxu0 0
        %833 = vmatpush1.bf16.msra.mxu0 0
        %834 = vmatprep.subr.bf16.mxu0 0
        %835 = vmatpush1.bf16.msra.mxu0 0
        %836 = vmatprep.subr.bf16.mxu0 0
        %837 = vmatpush1.bf16.msra.mxu0 0
        %838 = vmatprep.subr.bf16.mxu0 0
        %839 = vmatpush1.bf16.msra.mxu0 0
        %840 = vmatprep.subr.bf16.mxu0 0
        %841 = vmatpush1.bf16.msra.mxu0 0
        %842 = vmatprep.subr.bf16.mxu0 0
        %843 = vmatpush1.bf16.msra.mxu0 0
        %844 = vmatprep.mubr.bf16.mxu0 0
        %845 = vmatmul.mubr.bf16.gmra.mrb[0].mxu0 %v692
        %v846 = vpop.f32.mrb[0].mxu0
        %v847 = vadd.f32 %v613, %v846
        %v848 = vpop.f32.mrb[0].mxu0
        %v849 = vpop.f32.mrb[0].mxu0
        %v850 = vadd.f32 %v616, %v849
        %v851 = vpop.f32.mrb[0].mxu0
        %852 = vmatprep.mubr.bf16.mxu0 0
        %853 = vmatmul.mubr.bf16.gmra.mrb[0].mxu0 %v701
        %v854 = vpop.f32.mrb[0].mxu0
        %v855 = vadd.f32 %v621, %v854
        %v856 = vpop.f32.mrb[0].mxu0
        %v857 = vpop.f32.mrb[0].mxu0
        %v858 = vadd.f32 %v624, %v857
        %v859 = vpop.f32.mrb[0].mxu0
        %860 = vmatprep.mubr.bf16.mxu0 0
        %861 = vmatmul.mubr.bf16.gmra.mrb[0].mxu0 %v710
        %v862 = vpop.f32.mrb[0].mxu0
        %v863 = vadd.f32 %v629, %v862
        %v864 = vpop.f32.mrb[0].mxu0
        %v865 = vpop.f32.mrb[0].mxu0
        %v866 = vadd.f32 %v632, %v865
        %v867 = vpop.f32.mrb[0].mxu0
        %868 = vmatprep.mubr.bf16.mxu0 0
        %869 = vmatmul.mubr.bf16.gmra.mrb[0].mxu0 %v719
        %v870 = vpop.f32.mrb[0].mxu0
        %v871 = vadd.f32 %v637, %v870
        %v872 = vpop.f32.mrb[0].mxu0
        %v873 = vpop.f32.mrb[0].mxu0
        %v874 = vadd.f32 %v640, %v873
        %v875 = vpop.f32.mrb[0].mxu0
        %876 = vmatprep.mubr.bf16.mxu0 0
        %877 = vmatmul.mubr.bf16.gmra.mrb[0].mxu0 %v728
        %v878 = vpop.f32.mrb[0].mxu0
        %v879 = vadd.f32 %v645, %v878
        %v880 = vpop.f32.mrb[0].mxu0
        %v881 = vpop.f32.mrb[0].mxu0
        %v882 = vadd.f32 %v648, %v881
        %v883 = vpop.f32.mrb[0].mxu0
        %884 = vmatprep.mubr.bf16.mxu0 0
        %885 = vmatmul.mubr.bf16.gmra.mrb[0].mxu0 %v737
        %v886 = vpop.f32.mrb[0].mxu0
        %v887 = vadd.f32 %v653, %v886
        %v888 = vpop.f32.mrb[0].mxu0
        %v889 = vpop.f32.mrb[0].mxu0
        %v890 = vadd.f32 %v656, %v889
        %v891 = vpop.f32.mrb[0].mxu0
        %892 = vmatprep.mubr.bf16.mxu0 0
        %893 = vmatmul.mubr.bf16.gmra.mrb[0].mxu0 %v746
        %v894 = vpop.f32.mrb[0].mxu0
        %v895 = vadd.f32 %v661, %v894
        %v896 = vpop.f32.mrb[0].mxu0
        %v897 = vpop.f32.mrb[0].mxu0
        %v898 = vadd.f32 %v664, %v897
        %v899 = vpop.f32.mrb[0].mxu0
        %900 = vmatprep.mubr.bf16.mxu0 0
        %901 = vmatmul.mubr.bf16.gmra.mrb[0].mxu0 %v755
        %v902 = vpop.f32.mrb[0].mxu0
        %v903 = vadd.f32 %v669, %v902
        %v904 = vpop.f32.mrb[0].mxu0
        %v905 = vpop.f32.mrb[0].mxu0
        %v906 = vadd.f32 %v672, %v905
        %v907 = vpop.f32.mrb[0].mxu0
        %908 = vdwg.mxu0
        %v909 = vld [vmem:[#allocation2 + $0x40] sm:$0x1f]
        %s910 = scalar_lea.vmem %s1, 128
        %v911 = vld [vmem:[%s910] sm:$0xf]
        %v912 = vld [vmem:[%s910 + $0x4] sm:$0xf]
        %v913 = vld [vmem:[%s910 + $0x8] sm:$0xf]
        %v914 = vld [vmem:[%s910 + $0xc] sm:$0xf]
        %v915 = vld [vmem:[%s910 + $0x10] sm:$0xf]
        %v916 = vld [vmem:[%s910 + $0x14] sm:$0xf]
        %v917 = vld [vmem:[%s910 + $0x18] sm:$0xf]
        %v918 = vld [vmem:[%s910 + $0x1c] sm:$0xf]
        %v919 = vld [vmem:[%s910 + $0x20] sm:$0xf]
        %v920 = vld [vmem:[%s910 + $0x24] sm:$0xf]
        %v921 = vld [vmem:[%s910 + $0x28] sm:$0xf]
        %v922 = vld [vmem:[%s910 + $0x2c] sm:$0xf]
        %v923 = vld [vmem:[%s910 + $0x30] sm:$0xf]
        %v924 = vld [vmem:[%s910 + $0x34] sm:$0xf]
        %v925 = vld [vmem:[%s910 + $0x38] sm:$0xf]
        %v926 = vld [vmem:[%s910 + $0x3c] sm:$0xf]
        %v928 = vshrl.u32 %v477, 16
        %v930 = vrot.slane %v928, 4
        %v931 = vshll.u32 %v477, 16
        %v933 = vrot.slane %v931, 5
        %v934 = vor.u32 %v930, %v933
        %v935 = vrot.slane %v685, 4
        %v936 = vrot.slane %v688, 5
        %v937 = vor.u32 %v935, %v936
        %v938 = vsel %vm231, %v934, %v937
        %v939 = vrot.slane %v694, 4
        %v940 = vrot.slane %v697, 5
        %v941 = vor.u32 %v939, %v940
        %v942 = vsel %vm231, %v937, %v941
        %v943 = vrot.slane %v703, 4
        %v944 = vrot.slane %v706, 5
        %v945 = vor.u32 %v943, %v944
        %v946 = vsel %vm231, %v941, %v945
        %v947 = vrot.slane %v712, 4
        %v948 = vrot.slane %v715, 5
        %v949 = vor.u32 %v947, %v948
        %v950 = vsel %vm231, %v945, %v949
        %v951 = vrot.slane %v721, 4
        %v952 = vrot.slane %v724, 5
        %v953 = vor.u32 %v951, %v952
        %v954 = vsel %vm231, %v949, %v953
        %v955 = vrot.slane %v730, 4
        %v956 = vrot.slane %v733, 5
        %v957 = vor.u32 %v955, %v956
        %v958 = vsel %vm231, %v953, %v957
        %v959 = vrot.slane %v739, 4
        %v960 = vrot.slane %v742, 5
        %v961 = vor.u32 %v959, %v960
        %v962 = vsel %vm231, %v957, %v961
        %v964 = vshrl.u32 %v909, 16
        %v966 = vrot.slane %v964, 4
        %v967 = vshll.u32 %v909, 16
        %v969 = vrot.slane %v967, 5
        %v970 = vor.u32 %v966, %v969
        %v971 = vsel %vm231, %v961, %v970
        %v996 = vunpack.c.l.b16 %v911
        %v997 = vunpack.c.l.b16 %v912
        %v998 = vunpack.c.l.b16 %v913
        %v999 = vunpack.c.l.b16 %v914
        %v1000 = vunpack.c.l.b16 %v915
        %v1001 = vunpack.c.l.b16 %v916
        %v1002 = vunpack.c.l.b16 %v917
        %v1003 = vunpack.c.l.b16 %v918
        %v1004 = vunpack.c.l.b16 %v919
        %v1005 = vunpack.c.l.b16 %v920
        %v1006 = vunpack.c.l.b16 %v921
        %v1007 = vunpack.c.l.b16 %v922
        %v1008 = vunpack.c.l.b16 %v923
        %v1009 = vunpack.c.l.b16 %v924
        %v1010 = vunpack.c.l.b16 %v925
        %v1011 = vunpack.c.l.b16 %v926
        %v1012 = vpack.c.b16 %v997, %v996
        %v1013 = vpack.c.b16 %v999, %v998
        %v1014 = vpack.c.b16 %v1001, %v1000
        %v1015 = vpack.c.b16 %v1003, %v1002
        %v1016 = vpack.c.b16 %v1005, %v1004
        %v1017 = vpack.c.b16 %v1007, %v1006
        %v1018 = vpack.c.b16 %v1009, %v1008
        %v1019 = vpack.c.b16 %v1011, %v1010
        %1028 = vmatprep.subr.bf16.mxu0 0
        %1029 = vmatpush1.bf16.msra.mxu0 %v1012
        %1030 = vmatprep.subr.bf16.mxu0 0
        %1031 = vmatpush1.bf16.msra.mxu0 %v1013
        %1032 = vmatprep.subr.bf16.mxu0 0
        %1033 = vmatpush1.bf16.msra.mxu0 %v1014
        %1034 = vmatprep.subr.bf16.mxu0 0
        %1035 = vmatpush1.bf16.msra.mxu0 %v1015
        %1036 = vmatprep.subr.bf16.mxu0 0
        %1037 = vmatpush1.bf16.msra.mxu0 %v1016
        %1038 = vmatprep.subr.bf16.mxu0 0
        %1039 = vmatpush1.bf16.msra.mxu0 %v1017
        %1040 = vmatprep.subr.bf16.mxu0 0
        %1041 = vmatpush1.bf16.msra.mxu0 %v1018
        %1042 = vmatprep.subr.bf16.mxu0 0
        %1043 = vmatpush1.bf16.msra.mxu0 %v1019
        %1044 = vmatprep.subr.bf16.mxu0 0
        %1045 = vmatpush1.bf16.msra.mxu0 0
        %1046 = vmatprep.subr.bf16.mxu0 0
        %1047 = vmatpush1.bf16.msra.mxu0 0
        %1048 = vmatprep.subr.bf16.mxu0 0
        %1049 = vmatpush1.bf16.msra.mxu0 0
        %1050 = vmatprep.subr.bf16.mxu0 0
        %1051 = vmatpush1.bf16.msra.mxu0 0
        %1052 = vmatprep.subr.bf16.mxu0 0
        %1053 = vmatpush1.bf16.msra.mxu0 0
        %1054 = vmatprep.subr.bf16.mxu0 0
        %1055 = vmatpush1.bf16.msra.mxu0 0
        %1056 = vmatprep.subr.bf16.mxu0 0
        %1057 = vmatpush1.bf16.msra.mxu0 0
        %1058 = vmatprep.subr.bf16.mxu0 0
        %1059 = vmatpush1.bf16.msra.mxu0 0
        %1060 = vmatprep.mubr.bf16.mxu0 0
        %1061 = vmatmul.mubr.bf16.gmra.mrb[0].mxu0 %v938
        %v1062 = vpop.f32.mrb[0].mxu0
        %v1063 = vadd.f32 0.0, %v1062
        %v1064 = vpop.f32.mrb[0].mxu0
        %v1065 = vpop.f32.mrb[0].mxu0
        %v1066 = vadd.f32 0.0, %v1065
        %v1067 = vpop.f32.mrb[0].mxu0
        %1068 = vmatprep.mubr.bf16.mxu0 0
        %1069 = vmatmul.mubr.bf16.gmra.mrb[0].mxu0 %v942
        %v1070 = vpop.f32.mrb[0].mxu0
        %v1071 = vadd.f32 0.0, %v1070
        %v1072 = vpop.f32.mrb[0].mxu0
        %v1073 = vpop.f32.mrb[0].mxu0
        %v1074 = vadd.f32 0.0, %v1073
        %v1075 = vpop.f32.mrb[0].mxu0
        %1076 = vmatprep.mubr.bf16.mxu0 0
        %1077 = vmatmul.mubr.bf16.gmra.mrb[0].mxu0 %v946
        %v1078 = vpop.f32.mrb[0].mxu0
        %v1079 = vadd.f32 0.0, %v1078
        %v1080 = vpop.f32.mrb[0].mxu0
        %v1081 = vpop.f32.mrb[0].mxu0
        %v1082 = vadd.f32 0.0, %v1081
        %v1083 = vpop.f32.mrb[0].mxu0
        %1084 = vmatprep.mubr.bf16.mxu0 0
        %1085 = vmatmul.mubr.bf16.gmra.mrb[0].mxu0 %v950
        %v1086 = vpop.f32.mrb[0].mxu0
        %v1087 = vadd.f32 0.0, %v1086
        %v1088 = vpop.f32.mrb[0].mxu0
        %v1089 = vpop.f32.mrb[0].mxu0
        %v1090 = vadd.f32 0.0, %v1089
        %v1091 = vpop.f32.mrb[0].mxu0
        %1092 = vmatprep.mubr.bf16.mxu0 0
        %1093 = vmatmul.mubr.bf16.gmra.mrb[0].mxu0 %v954
        %v1094 = vpop.f32.mrb[0].mxu0
        %v1095 = vadd.f32 0.0, %v1094
        %v1096 = vpop.f32.mrb[0].mxu0
        %v1097 = vpop.f32.mrb[0].mxu0
        %v1098 = vadd.f32 0.0, %v1097
        %v1099 = vpop.f32.mrb[0].mxu0
        %1100 = vmatprep.mubr.bf16.mxu0 0
        %1101 = vmatmul.mubr.bf16.gmra.mrb[0].mxu0 %v958
        %v1102 = vpop.f32.mrb[0].mxu0
        %v1103 = vadd.f32 0.0, %v1102
        %v1104 = vpop.f32.mrb[0].mxu0
        %v1105 = vpop.f32.mrb[0].mxu0
        %v1106 = vadd.f32 0.0, %v1105
        %v1107 = vpop.f32.mrb[0].mxu0
        %1108 = vmatprep.mubr.bf16.mxu0 0
        %1109 = vmatmul.mubr.bf16.gmra.mrb[0].mxu0 %v962
        %v1110 = vpop.f32.mrb[0].mxu0
        %v1111 = vadd.f32 0.0, %v1110
        %v1112 = vpop.f32.mrb[0].mxu0
        %v1113 = vpop.f32.mrb[0].mxu0
        %v1114 = vadd.f32 0.0, %v1113
        %v1115 = vpop.f32.mrb[0].mxu0
        %1116 = vmatprep.mubr.bf16.mxu0 0
        %1117 = vmatmul.mubr.bf16.gmra.mrb[0].mxu0 %v971
        %v1118 = vpop.f32.mrb[0].mxu0
        %v1119 = vadd.f32 0.0, %v1118
        %v1120 = vpop.f32.mrb[0].mxu0
        %v1121 = vpop.f32.mrb[0].mxu0
        %v1122 = vadd.f32 0.0, %v1121
        %v1123 = vpop.f32.mrb[0].mxu0
        %1124 = vdwg.mxu0
        %v1125 = vadd.f32 %v847, %v1063
        %v1126 = vadd.f32 %v850, %v1066
        %v1127 = vadd.f32 %v855, %v1071
        %v1128 = vadd.f32 %v858, %v1074
        %v1129 = vadd.f32 %v863, %v1079
        %v1130 = vadd.f32 %v866, %v1082
        %v1131 = vadd.f32 %v871, %v1087
        %v1132 = vadd.f32 %v874, %v1090
        %v1133 = vadd.f32 %v879, %v1095
        %v1134 = vadd.f32 %v882, %v1098
        %v1135 = vadd.f32 %v887, %v1103
        %v1136 = vadd.f32 %v890, %v1106
        %v1137 = vadd.f32 %v895, %v1111
        %v1138 = vadd.f32 %v898, %v1114
        %v1139 = vadd.f32 %v903, %v1119
        %v1140 = vadd.f32 %v906, %v1122
        %v1141 = vld [vmem:[#allocation2 + $0x10] sm:$0xf8]
        %v1142 = vld [vmem:[#allocation2 + $0x18] sm:$0xff]
        %v1143 = vld [vmem:[#allocation2 + $0x20] sm:$0xff]
        %v1144 = vld [vmem:[#allocation2 + $0x28] sm:$0xff]
        %v1145 = vld [vmem:[#allocation2 + $0x30] sm:$0xff]
        %v1146 = vld [vmem:[#allocation2 + $0x38] sm:$0xff]
        %v1147 = vld [vmem:[#allocation2 + $0x40] sm:$0xff]
        %v1148 = vld [vmem:[#allocation2 + $0x48] sm:$0xff]
        %v1149 = vld [vmem:[#allocation2 + $0x50] sm:$0xf]
        %s1150 = scalar_lea.vmem %s1, 192
        %v1151 = vld [vmem:[%s1150] sm:$0xf]
        %v1152 = vld [vmem:[%s1150 + $0x4] sm:$0xf]
        %v1153 = vld [vmem:[%s1150 + $0x8] sm:$0xf]
        %v1154 = vld [vmem:[%s1150 + $0xc] sm:$0xf]
        %v1155 = vld [vmem:[%s1150 + $0x10] sm:$0xf]
        %v1156 = vld [vmem:[%s1150 + $0x14] sm:$0xf]
        %v1157 = vld [vmem:[%s1150 + $0x18] sm:$0xf]
        %v1158 = vld [vmem:[%s1150 + $0x1c] sm:$0xf]
        %v1159 = vld [vmem:[%s1150 + $0x20] sm:$0xf]
        %v1160 = vld [vmem:[%s1150 + $0x24] sm:$0xf]
        %v1161 = vld [vmem:[%s1150 + $0x28] sm:$0xf]
        %v1162 = vld [vmem:[%s1150 + $0x2c] sm:$0xf]
        %v1163 = vld [vmem:[%s1150 + $0x30] sm:$0xf]
        %v1164 = vld [vmem:[%s1150 + $0x34] sm:$0xf]
        %v1165 = vld [vmem:[%s1150 + $0x38] sm:$0xf]
        %v1166 = vld [vmem:[%s1150 + $0x3c] sm:$0xf]
        %v1168 = vshrl.u32 %v1141, 16
        %v1170 = vrot.slane %v1168, 3
        %v1171 = vshll.u32 %v1141, 16
        %v1173 = vrot.slane %v1171, 4
        %v1174 = vor.u32 %v1170, %v1173
        %v1176 = vshrl.u32 %v1142, 16
        %v1178 = vrot.slane %v1176, 3
        %v1179 = vshll.u32 %v1142, 16
        %v1181 = vrot.slane %v1179, 4
        %v1182 = vor.u32 %v1178, %v1181
        %v1183 = vsel %vm675, %v1174, %v1182
        %v1185 = vshrl.u32 %v1143, 16
        %v1187 = vrot.slane %v1185, 3
        %v1188 = vshll.u32 %v1143, 16
        %v1190 = vrot.slane %v1188, 4
        %v1191 = vor.u32 %v1187, %v1190
        %v1192 = vsel %vm675, %v1182, %v1191
        %v1194 = vshrl.u32 %v1144, 16
        %v1196 = vrot.slane %v1194, 3
        %v1197 = vshll.u32 %v1144, 16
        %v1199 = vrot.slane %v1197, 4
        %v1200 = vor.u32 %v1196, %v1199
        %v1201 = vsel %vm675, %v1191, %v1200
        %v1203 = vshrl.u32 %v1145, 16
        %v1205 = vrot.slane %v1203, 3
        %v1206 = vshll.u32 %v1145, 16
        %v1208 = vrot.slane %v1206, 4
        %v1209 = vor.u32 %v1205, %v1208
        %v1210 = vsel %vm675, %v1200, %v1209
        %v1212 = vshrl.u32 %v1146, 16
        %v1214 = vrot.slane %v1212, 3
        %v1215 = vshll.u32 %v1146, 16
        %v1217 = vrot.slane %v1215, 4
        %v1218 = vor.u32 %v1214, %v1217
        %v1219 = vsel %vm675, %v1209, %v1218
        %v1221 = vshrl.u32 %v1147, 16
        %v1223 = vrot.slane %v1221, 3
        %v1224 = vshll.u32 %v1147, 16
        %v1226 = vrot.slane %v1224, 4
        %v1227 = vor.u32 %v1223, %v1226
        %v1228 = vsel %vm675, %v1218, %v1227
        %v1230 = vshrl.u32 %v1148, 16
        %v1232 = vrot.slane %v1230, 3
        %v1233 = vshll.u32 %v1148, 16
        %v1235 = vrot.slane %v1233, 4
        %v1236 = vor.u32 %v1232, %v1235
        %v1237 = vsel %vm675, %v1227, %v1236
        %v1239 = vshrl.u32 %v1149, 16
        %v1241 = vrot.slane %v1239, 3
        %v1242 = vshll.u32 %v1149, 16
        %v1244 = vrot.slane %v1242, 4
        %v1245 = vor.u32 %v1241, %v1244
        %v1246 = vsel %vm675, %v1236, %v1245
        %v1271 = vunpack.c.l.b16 %v1151
        %v1272 = vunpack.c.l.b16 %v1152
        %v1273 = vunpack.c.l.b16 %v1153
        %v1274 = vunpack.c.l.b16 %v1154
        %v1275 = vunpack.c.l.b16 %v1155
        %v1276 = vunpack.c.l.b16 %v1156
        %v1277 = vunpack.c.l.b16 %v1157
        %v1278 = vunpack.c.l.b16 %v1158
        %v1279 = vunpack.c.l.b16 %v1159
        %v1280 = vunpack.c.l.b16 %v1160
        %v1281 = vunpack.c.l.b16 %v1161
        %v1282 = vunpack.c.l.b16 %v1162
        %v1283 = vunpack.c.l.b16 %v1163
        %v1284 = vunpack.c.l.b16 %v1164
        %v1285 = vunpack.c.l.b16 %v1165
        %v1286 = vunpack.c.l.b16 %v1166
        %v1287 = vpack.c.b16 %v1272, %v1271
        %v1288 = vpack.c.b16 %v1274, %v1273
        %v1289 = vpack.c.b16 %v1276, %v1275
        %v1290 = vpack.c.b16 %v1278, %v1277
        %v1291 = vpack.c.b16 %v1280, %v1279
        %v1292 = vpack.c.b16 %v1282, %v1281
        %v1293 = vpack.c.b16 %v1284, %v1283
        %v1294 = vpack.c.b16 %v1286, %v1285
        %1303 = vmatprep.subr.bf16.mxu0 0
        %1304 = vmatpush1.bf16.msra.mxu0 %v1287
        %1305 = vmatprep.subr.bf16.mxu0 0
        %1306 = vmatpush1.bf16.msra.mxu0 %v1288
        %1307 = vmatprep.subr.bf16.mxu0 0
        %1308 = vmatpush1.bf16.msra.mxu0 %v1289
        %1309 = vmatprep.subr.bf16.mxu0 0
        %1310 = vmatpush1.bf16.msra.mxu0 %v1290
        %1311 = vmatprep.subr.bf16.mxu0 0
        %1312 = vmatpush1.bf16.msra.mxu0 %v1291
        %1313 = vmatprep.subr.bf16.mxu0 0
        %1314 = vmatpush1.bf16.msra.mxu0 %v1292
        %1315 = vmatprep.subr.bf16.mxu0 0
        %1316 = vmatpush1.bf16.msra.mxu0 %v1293
        %1317 = vmatprep.subr.bf16.mxu0 0
        %1318 = vmatpush1.bf16.msra.mxu0 %v1294
        %1319 = vmatprep.subr.bf16.mxu0 0
        %1320 = vmatpush1.bf16.msra.mxu0 0
        %1321 = vmatprep.subr.bf16.mxu0 0
        %1322 = vmatpush1.bf16.msra.mxu0 0
        %1323 = vmatprep.subr.bf16.mxu0 0
        %1324 = vmatpush1.bf16.msra.mxu0 0
        %1325 = vmatprep.subr.bf16.mxu0 0
        %1326 = vmatpush1.bf16.msra.mxu0 0
        %1327 = vmatprep.subr.bf16.mxu0 0
        %1328 = vmatpush1.bf16.msra.mxu0 0
        %1329 = vmatprep.subr.bf16.mxu0 0
        %1330 = vmatpush1.bf16.msra.mxu0 0
        %1331 = vmatprep.subr.bf16.mxu0 0
        %1332 = vmatpush1.bf16.msra.mxu0 0
        %1333 = vmatprep.subr.bf16.mxu0 0
        %1334 = vmatpush1.bf16.msra.mxu0 0
        %1335 = vmatprep.mubr.bf16.mxu0 0
        %1336 = vmatmul.mubr.bf16.gmra.mrb[0].mxu0 %v1183
        %v1337 = vpop.f32.mrb[0].mxu0
        %v1338 = vadd.f32 0.0, %v1337
        %v1339 = vpop.f32.mrb[0].mxu0
        %v1340 = vpop.f32.mrb[0].mxu0
        %v1341 = vadd.f32 0.0, %v1340
        %v1342 = vpop.f32.mrb[0].mxu0
        %1343 = vmatprep.mubr.bf16.mxu0 0
        %1344 = vmatmul.mubr.bf16.gmra.mrb[0].mxu0 %v1192
        %v1345 = vpop.f32.mrb[0].mxu0
        %v1346 = vadd.f32 0.0, %v1345
        %v1347 = vpop.f32.mrb[0].mxu0
        %v1348 = vpop.f32.mrb[0].mxu0
        %v1349 = vadd.f32 0.0, %v1348
        %v1350 = vpop.f32.mrb[0].mxu0
        %1351 = vmatprep.mubr.bf16.mxu0 0
        %1352 = vmatmul.mubr.bf16.gmra.mrb[0].mxu0 %v1201
        %v1353 = vpop.f32.mrb[0].mxu0
        %v1354 = vadd.f32 0.0, %v1353
        %v1355 = vpop.f32.mrb[0].mxu0
        %v1356 = vpop.f32.mrb[0].mxu0
        %v1357 = vadd.f32 0.0, %v1356
        %v1358 = vpop.f32.mrb[0].mxu0
        %1359 = vmatprep.mubr.bf16.mxu0 0
        %1360 = vmatmul.mubr.bf16.gmra.mrb[0].mxu0 %v1210
        %v1361 = vpop.f32.mrb[0].mxu0
        %v1362 = vadd.f32 0.0, %v1361
        %v1363 = vpop.f32.mrb[0].mxu0
        %v1364 = vpop.f32.mrb[0].mxu0
        %v1365 = vadd.f32 0.0, %v1364
        %v1366 = vpop.f32.mrb[0].mxu0
        %1367 = vmatprep.mubr.bf16.mxu0 0
        %1368 = vmatmul.mubr.bf16.gmra.mrb[0].mxu0 %v1219
        %v1369 = vpop.f32.mrb[0].mxu0
        %v1370 = vadd.f32 0.0, %v1369
        %v1371 = vpop.f32.mrb[0].mxu0
        %v1372 = vpop.f32.mrb[0].mxu0
        %v1373 = vadd.f32 0.0, %v1372
        %v1374 = vpop.f32.mrb[0].mxu0
        %1375 = vmatprep.mubr.bf16.mxu0 0
        %1376 = vmatmul.mubr.bf16.gmra.mrb[0].mxu0 %v1228
        %v1377 = vpop.f32.mrb[0].mxu0
        %v1378 = vadd.f32 0.0, %v1377
        %v1379 = vpop.f32.mrb[0].mxu0
        %v1380 = vpop.f32.mrb[0].mxu0
        %v1381 = vadd.f32 0.0, %v1380
        %v1382 = vpop.f32.mrb[0].mxu0
        %1383 = vmatprep.mubr.bf16.mxu0 0
        %1384 = vmatmul.mubr.bf16.gmra.mrb[0].mxu0 %v1237
        %v1385 = vpop.f32.mrb[0].mxu0
        %v1386 = vadd.f32 0.0, %v1385
        %v1387 = vpop.f32.mrb[0].mxu0
        %v1388 = vpop.f32.mrb[0].mxu0
        %v1389 = vadd.f32 0.0, %v1388
        %v1390 = vpop.f32.mrb[0].mxu0
        %1391 = vmatprep.mubr.bf16.mxu0 0
        %1392 = vmatmul.mubr.bf16.gmra.mrb[0].mxu0 %v1246
        %v1393 = vpop.f32.mrb[0].mxu0
        %v1394 = vadd.f32 0.0, %v1393
        %v1395 = vpop.f32.mrb[0].mxu0
        %v1396 = vpop.f32.mrb[0].mxu0
        %v1397 = vadd.f32 0.0, %v1396
        %v1398 = vpop.f32.mrb[0].mxu0
        %1399 = vdwg.mxu0
        %v1400 = vadd.f32 %v1125, %v1338
        %v1401 = vadd.f32 %v1126, %v1341
        %v1402 = vadd.f32 %v1127, %v1346
        %v1403 = vadd.f32 %v1128, %v1349
        %v1404 = vadd.f32 %v1129, %v1354
        %v1405 = vadd.f32 %v1130, %v1357
        %v1406 = vadd.f32 %v1131, %v1362
        %v1407 = vadd.f32 %v1132, %v1365
        %v1408 = vadd.f32 %v1133, %v1370
        %v1409 = vadd.f32 %v1134, %v1373
        %v1410 = vadd.f32 %v1135, %v1378
        %v1411 = vadd.f32 %v1136, %v1381
        %v1412 = vadd.f32 %v1137, %v1386
        %v1413 = vadd.f32 %v1138, %v1389
        %v1414 = vadd.f32 %v1139, %v1394
        %v1415 = vadd.f32 %v1140, %v1397
        %v1416 = vld [vmem:[#allocation2 + $0x10] sm:$0xf0]
        %s1417 = scalar_lea.vmem %s1, 256
        %v1418 = vld [vmem:[%s1417] sm:$0xf]
        %v1419 = vld [vmem:[%s1417 + $0x4] sm:$0xf]
        %v1420 = vld [vmem:[%s1417 + $0x8] sm:$0xf]
        %v1421 = vld [vmem:[%s1417 + $0xc] sm:$0xf]
        %v1422 = vld [vmem:[%s1417 + $0x10] sm:$0xf]
        %v1423 = vld [vmem:[%s1417 + $0x14] sm:$0xf]
        %v1424 = vld [vmem:[%s1417 + $0x18] sm:$0xf]
        %v1425 = vld [vmem:[%s1417 + $0x1c] sm:$0xf]
        %v1426 = vld [vmem:[%s1417 + $0x20] sm:$0xf]
        %v1427 = vld [vmem:[%s1417 + $0x24] sm:$0xf]
        %v1428 = vld [vmem:[%s1417 + $0x28] sm:$0xf]
        %v1429 = vld [vmem:[%s1417 + $0x2c] sm:$0xf]
        %v1430 = vld [vmem:[%s1417 + $0x30] sm:$0xf]
        %v1431 = vld [vmem:[%s1417 + $0x34] sm:$0xf]
        %v1432 = vld [vmem:[%s1417 + $0x38] sm:$0xf]
        %v1433 = vld [vmem:[%s1417 + $0x3c] sm:$0xf]
        %v1443 = vrot.slane %v1416, 4
        %v1444 = vrot.slane %v1142, 4
        %v1445 = vsel %vm504, %v1443, %v1444
        %v1446 = vrot.slane %v1143, 4
        %v1447 = vsel %vm504, %v1444, %v1446
        %v1448 = vrot.slane %v1144, 4
        %v1449 = vsel %vm504, %v1446, %v1448
        %v1450 = vrot.slane %v1145, 4
        %v1451 = vsel %vm504, %v1448, %v1450
        %v1452 = vrot.slane %v1146, 4
        %v1453 = vsel %vm504, %v1450, %v1452
        %v1454 = vrot.slane %v1147, 4
        %v1455 = vsel %vm504, %v1452, %v1454
        %v1456 = vrot.slane %v1148, 4
        %v1457 = vsel %vm504, %v1454, %v1456
        %v1458 = vrot.slane %v1149, 4
        %v1459 = vsel %vm504, %v1456, %v1458
        %v1484 = vunpack.c.l.b16 %v1418
        %v1485 = vunpack.c.l.b16 %v1419
        %v1486 = vunpack.c.l.b16 %v1420
        %v1487 = vunpack.c.l.b16 %v1421
        %v1488 = vunpack.c.l.b16 %v1422
        %v1489 = vunpack.c.l.b16 %v1423
        %v1490 = vunpack.c.l.b16 %v1424
        %v1491 = vunpack.c.l.b16 %v1425
        %v1492 = vunpack.c.l.b16 %v1426
        %v1493 = vunpack.c.l.b16 %v1427
        %v1494 = vunpack.c.l.b16 %v1428
        %v1495 = vunpack.c.l.b16 %v1429
        %v1496 = vunpack.c.l.b16 %v1430
        %v1497 = vunpack.c.l.b16 %v1431
        %v1498 = vunpack.c.l.b16 %v1432
        %v1499 = vunpack.c.l.b16 %v1433
        %v1500 = vpack.c.b16 %v1485, %v1484
        %v1501 = vpack.c.b16 %v1487, %v1486
        %v1502 = vpack.c.b16 %v1489, %v1488
        %v1503 = vpack.c.b16 %v1491, %v1490
        %v1504 = vpack.c.b16 %v1493, %v1492
        %v1505 = vpack.c.b16 %v1495, %v1494
        %v1506 = vpack.c.b16 %v1497, %v1496
        %v1507 = vpack.c.b16 %v1499, %v1498
        %1516 = vmatprep.subr.bf16.mxu0 0
        %1517 = vmatpush1.bf16.msra.mxu0 %v1500
        %1518 = vmatprep.subr.bf16.mxu0 0
        %1519 = vmatpush1.bf16.msra.mxu0 %v1501
        %1520 = vmatprep.subr.bf16.mxu0 0
        %1521 = vmatpush1.bf16.msra.mxu0 %v1502
        %1522 = vmatprep.subr.bf16.mxu0 0
        %1523 = vmatpush1.bf16.msra.mxu0 %v1503
        %1524 = vmatprep.subr.bf16.mxu0 0
        %1525 = vmatpush1.bf16.msra.mxu0 %v1504
        %1526 = vmatprep.subr.bf16.mxu0 0
        %1527 = vmatpush1.bf16.msra.mxu0 %v1505
        %1528 = vmatprep.subr.bf16.mxu0 0
        %1529 = vmatpush1.bf16.msra.mxu0 %v1506
        %1530 = vmatprep.subr.bf16.mxu0 0
        %1531 = vmatpush1.bf16.msra.mxu0 %v1507
        %1532 = vmatprep.subr.bf16.mxu0 0
        %1533 = vmatpush1.bf16.msra.mxu0 0
        %1534 = vmatprep.subr.bf16.mxu0 0
        %1535 = vmatpush1.bf16.msra.mxu0 0
        %1536 = vmatprep.subr.bf16.mxu0 0
        %1537 = vmatpush1.bf16.msra.mxu0 0
        %1538 = vmatprep.subr.bf16.mxu0 0
        %1539 = vmatpush1.bf16.msra.mxu0 0
        %1540 = vmatprep.subr.bf16.mxu0 0
        %1541 = vmatpush1.bf16.msra.mxu0 0
        %1542 = vmatprep.subr.bf16.mxu0 0
        %1543 = vmatpush1.bf16.msra.mxu0 0
        %1544 = vmatprep.subr.bf16.mxu0 0
        %1545 = vmatpush1.bf16.msra.mxu0 0
        %1546 = vmatprep.subr.bf16.mxu0 0
        %1547 = vmatpush1.bf16.msra.mxu0 0
        %1548 = vmatprep.mubr.bf16.mxu0 0
        %1549 = vmatmul.mubr.bf16.gmra.mrb[0].mxu0 %v1445
        %v1550 = vpop.f32.mrb[0].mxu0
        %v1551 = vadd.f32 0.0, %v1550
        %v1552 = vpop.f32.mrb[0].mxu0
        %v1553 = vpop.f32.mrb[0].mxu0
        %v1554 = vadd.f32 0.0, %v1553
        %v1555 = vpop.f32.mrb[0].mxu0
        %1556 = vmatprep.mubr.bf16.mxu0 0
        %1557 = vmatmul.mubr.bf16.gmra.mrb[0].mxu0 %v1447
        %v1558 = vpop.f32.mrb[0].mxu0
        %v1559 = vadd.f32 0.0, %v1558
        %v1560 = vpop.f32.mrb[0].mxu0
        %v1561 = vpop.f32.mrb[0].mxu0
        %v1562 = vadd.f32 0.0, %v1561
        %v1563 = vpop.f32.mrb[0].mxu0
        %1564 = vmatprep.mubr.bf16.mxu0 0
        %1565 = vmatmul.mubr.bf16.gmra.mrb[0].mxu0 %v1449
        %v1566 = vpop.f32.mrb[0].mxu0
        %v1567 = vadd.f32 0.0, %v1566
        %v1568 = vpop.f32.mrb[0].mxu0
        %v1569 = vpop.f32.mrb[0].mxu0
        %v1570 = vadd.f32 0.0, %v1569
        %v1571 = vpop.f32.mrb[0].mxu0
        %1572 = vmatprep.mubr.bf16.mxu0 0
        %1573 = vmatmul.mubr.bf16.gmra.mrb[0].mxu0 %v1451
        %v1574 = vpop.f32.mrb[0].mxu0
        %v1575 = vadd.f32 0.0, %v1574
        %v1576 = vpop.f32.mrb[0].mxu0
        %v1577 = vpop.f32.mrb[0].mxu0
        %v1578 = vadd.f32 0.0, %v1577
        %v1579 = vpop.f32.mrb[0].mxu0
        %1580 = vmatprep.mubr.bf16.mxu0 0
        %1581 = vmatmul.mubr.bf16.gmra.mrb[0].mxu0 %v1453
        %v1582 = vpop.f32.mrb[0].mxu0
        %v1583 = vadd.f32 0.0, %v1582
        %v1584 = vpop.f32.mrb[0].mxu0
        %v1585 = vpop.f32.mrb[0].mxu0
        %v1586 = vadd.f32 0.0, %v1585
        %v1587 = vpop.f32.mrb[0].mxu0
        %1588 = vmatprep.mubr.bf16.mxu0 0
        %1589 = vmatmul.mubr.bf16.gmra.mrb[0].mxu0 %v1455
        %v1590 = vpop.f32.mrb[0].mxu0
        %v1591 = vadd.f32 0.0, %v1590
        %v1592 = vpop.f32.mrb[0].mxu0
        %v1593 = vpop.f32.mrb[0].mxu0
        %v1594 = vadd.f32 0.0, %v1593
        %v1595 = vpop.f32.mrb[0].mxu0
        %1596 = vmatprep.mubr.bf16.mxu0 0
        %1597 = vmatmul.mubr.bf16.gmra.mrb[0].mxu0 %v1457
        %v1598 = vpop.f32.mrb[0].mxu0
        %v1599 = vadd.f32 0.0, %v1598
        %v1600 = vpop.f32.mrb[0].mxu0
        %v1601 = vpop.f32.mrb[0].mxu0
        %v1602 = vadd.f32 0.0, %v1601
        %v1603 = vpop.f32.mrb[0].mxu0
        %1604 = vmatprep.mubr.bf16.mxu0 0
        %1605 = vmatmul.mubr.bf16.gmra.mrb[0].mxu0 %v1459
        %v1606 = vpop.f32.mrb[0].mxu0
        %v1607 = vadd.f32 0.0, %v1606
        %v1608 = vpop.f32.mrb[0].mxu0
        %v1609 = vpop.f32.mrb[0].mxu0
        %v1610 = vadd.f32 0.0, %v1609
        %v1611 = vpop.f32.mrb[0].mxu0
        %1612 = vdwg.mxu0
        %v1613 = vadd.f32 %v1400, %v1551
        %v1614 = vadd.f32 %v1401, %v1554
        %v1615 = vadd.f32 %v1402, %v1559
        %v1616 = vadd.f32 %v1403, %v1562
        %v1617 = vadd.f32 %v1404, %v1567
        %v1618 = vadd.f32 %v1405, %v1570
        %v1619 = vadd.f32 %v1406, %v1575
        %v1620 = vadd.f32 %v1407, %v1578
        %v1621 = vadd.f32 %v1408, %v1583
        %v1622 = vadd.f32 %v1409, %v1586
        %v1623 = vadd.f32 %v1410, %v1591
        %v1624 = vadd.f32 %v1411, %v1594
        %v1625 = vadd.f32 %v1412, %v1599
        %v1626 = vadd.f32 %v1413, %v1602
        %v1627 = vadd.f32 %v1414, %v1607
        %v1628 = vadd.f32 %v1415, %v1610
        %v1629 = vld [vmem:[#allocation2 + $0x50] sm:$0x1f]
        %s1630 = scalar_lea.vmem %s1, 320
        %v1631 = vld [vmem:[%s1630] sm:$0xf]
        %v1632 = vld [vmem:[%s1630 + $0x4] sm:$0xf]
        %v1633 = vld [vmem:[%s1630 + $0x8] sm:$0xf]
        %v1634 = vld [vmem:[%s1630 + $0xc] sm:$0xf]
        %v1635 = vld [vmem:[%s1630 + $0x10] sm:$0xf]
        %v1636 = vld [vmem:[%s1630 + $0x14] sm:$0xf]
        %v1637 = vld [vmem:[%s1630 + $0x18] sm:$0xf]
        %v1638 = vld [vmem:[%s1630 + $0x1c] sm:$0xf]
        %v1639 = vld [vmem:[%s1630 + $0x20] sm:$0xf]
        %v1640 = vld [vmem:[%s1630 + $0x24] sm:$0xf]
        %v1641 = vld [vmem:[%s1630 + $0x28] sm:$0xf]
        %v1642 = vld [vmem:[%s1630 + $0x2c] sm:$0xf]
        %v1643 = vld [vmem:[%s1630 + $0x30] sm:$0xf]
        %v1644 = vld [vmem:[%s1630 + $0x34] sm:$0xf]
        %v1645 = vld [vmem:[%s1630 + $0x38] sm:$0xf]
        %v1646 = vld [vmem:[%s1630 + $0x3c] sm:$0xf]
        %v1648 = vshrl.u32 %v1416, 16
        %v1650 = vrot.slane %v1648, 4
        %v1651 = vshll.u32 %v1416, 16
        %v1653 = vrot.slane %v1651, 5
        %v1654 = vor.u32 %v1650, %v1653
        %v1655 = vrot.slane %v1176, 4
        %v1656 = vrot.slane %v1179, 5
        %v1657 = vor.u32 %v1655, %v1656
        %v1658 = vsel %vm231, %v1654, %v1657
        %v1659 = vrot.slane %v1185, 4
        %v1660 = vrot.slane %v1188, 5
        %v1661 = vor.u32 %v1659, %v1660
        %v1662 = vsel %vm231, %v1657, %v1661
        %v1663 = vrot.slane %v1194, 4
        %v1664 = vrot.slane %v1197, 5
        %v1665 = vor.u32 %v1663, %v1664
        %v1666 = vsel %vm231, %v1661, %v1665
        %v1667 = vrot.slane %v1203, 4
        %v1668 = vrot.slane %v1206, 5
        %v1669 = vor.u32 %v1667, %v1668
        %v1670 = vsel %vm231, %v1665, %v1669
        %v1671 = vrot.slane %v1212, 4
        %v1672 = vrot.slane %v1215, 5
        %v1673 = vor.u32 %v1671, %v1672
        %v1674 = vsel %vm231, %v1669, %v1673
        %v1675 = vrot.slane %v1221, 4
        %v1676 = vrot.slane %v1224, 5
        %v1677 = vor.u32 %v1675, %v1676
        %v1678 = vsel %vm231, %v1673, %v1677
        %v1679 = vrot.slane %v1230, 4
        %v1680 = vrot.slane %v1233, 5
        %v1681 = vor.u32 %v1679, %v1680
        %v1682 = vsel %vm231, %v1677, %v1681
        %v1684 = vshrl.u32 %v1629, 16
        %v1686 = vrot.slane %v1684, 4
        %v1687 = vshll.u32 %v1629, 16
        %v1689 = vrot.slane %v1687, 5
        %v1690 = vor.u32 %v1686, %v1689
        %v1691 = vsel %vm231, %v1681, %v1690
        %v1716 = vunpack.c.l.b16 %v1631
        %v1717 = vunpack.c.l.b16 %v1632
        %v1718 = vunpack.c.l.b16 %v1633
        %v1719 = vunpack.c.l.b16 %v1634
        %v1720 = vunpack.c.l.b16 %v1635
        %v1721 = vunpack.c.l.b16 %v1636
        %v1722 = vunpack.c.l.b16 %v1637
        %v1723 = vunpack.c.l.b16 %v1638
        %v1724 = vunpack.c.l.b16 %v1639
        %v1725 = vunpack.c.l.b16 %v1640
        %v1726 = vunpack.c.l.b16 %v1641
        %v1727 = vunpack.c.l.b16 %v1642
        %v1728 = vunpack.c.l.b16 %v1643
        %v1729 = vunpack.c.l.b16 %v1644
        %v1730 = vunpack.c.l.b16 %v1645
        %v1731 = vunpack.c.l.b16 %v1646
        %v1732 = vpack.c.b16 %v1717, %v1716
        %v1733 = vpack.c.b16 %v1719, %v1718
        %v1734 = vpack.c.b16 %v1721, %v1720
        %v1735 = vpack.c.b16 %v1723, %v1722
        %v1736 = vpack.c.b16 %v1725, %v1724
        %v1737 = vpack.c.b16 %v1727, %v1726
        %v1738 = vpack.c.b16 %v1729, %v1728
        %v1739 = vpack.c.b16 %v1731, %v1730
        %1748 = vmatprep.subr.bf16.mxu0 0
        %1749 = vmatpush1.bf16.msra.mxu0 %v1732
        %1750 = vmatprep.subr.bf16.mxu0 0
        %1751 = vmatpush1.bf16.msra.mxu0 %v1733
        %1752 = vmatprep.subr.bf16.mxu0 0
        %1753 = vmatpush1.bf16.msra.mxu0 %v1734
        %1754 = vmatprep.subr.bf16.mxu0 0
        %1755 = vmatpush1.bf16.msra.mxu0 %v1735
        %1756 = vmatprep.subr.bf16.mxu0 0
        %1757 = vmatpush1.bf16.msra.mxu0 %v1736
        %1758 = vmatprep.subr.bf16.mxu0 0
        %1759 = vmatpush1.bf16.msra.mxu0 %v1737
        %1760 = vmatprep.subr.bf16.mxu0 0
        %1761 = vmatpush1.bf16.msra.mxu0 %v1738
        %1762 = vmatprep.subr.bf16.mxu0 0
        %1763 = vmatpush1.bf16.msra.mxu0 %v1739
        %1764 = vmatprep.subr.bf16.mxu0 0
        %1765 = vmatpush1.bf16.msra.mxu0 0
        %1766 = vmatprep.subr.bf16.mxu0 0
        %1767 = vmatpush1.bf16.msra.mxu0 0
        %1768 = vmatprep.subr.bf16.mxu0 0
        %1769 = vmatpush1.bf16.msra.mxu0 0
        %1770 = vmatprep.subr.bf16.mxu0 0
        %1771 = vmatpush1.bf16.msra.mxu0 0
        %1772 = vmatprep.subr.bf16.mxu0 0
        %1773 = vmatpush1.bf16.msra.mxu0 0
        %1774 = vmatprep.subr.bf16.mxu0 0
        %1775 = vmatpush1.bf16.msra.mxu0 0
        %1776 = vmatprep.subr.bf16.mxu0 0
        %1777 = vmatpush1.bf16.msra.mxu0 0
        %1778 = vmatprep.subr.bf16.mxu0 0
        %1779 = vmatpush1.bf16.msra.mxu0 0
        %1780 = vmatprep.mubr.bf16.mxu0 0
        %1781 = vmatmul.mubr.bf16.gmra.mrb[0].mxu0 %v1658
        %v1782 = vpop.f32.mrb[0].mxu0
        %v1783 = vadd.f32 0.0, %v1782
        %v1784 = vpop.f32.mrb[0].mxu0
        %v1785 = vpop.f32.mrb[0].mxu0
        %v1786 = vadd.f32 0.0, %v1785
        %v1787 = vpop.f32.mrb[0].mxu0
        %1788 = vmatprep.mubr.bf16.mxu0 0
        %1789 = vmatmul.mubr.bf16.gmra.mrb[0].mxu0 %v1662
        %v1790 = vpop.f32.mrb[0].mxu0
        %v1791 = vadd.f32 0.0, %v1790
        %v1792 = vpop.f32.mrb[0].mxu0
        %v1793 = vpop.f32.mrb[0].mxu0
        %v1794 = vadd.f32 0.0, %v1793
        %v1795 = vpop.f32.mrb[0].mxu0
        %1796 = vmatprep.mubr.bf16.mxu0 0
        %1797 = vmatmul.mubr.bf16.gmra.mrb[0].mxu0 %v1666
        %v1798 = vpop.f32.mrb[0].mxu0
        %v1799 = vadd.f32 0.0, %v1798
        %v1800 = vpop.f32.mrb[0].mxu0
        %v1801 = vpop.f32.mrb[0].mxu0
        %v1802 = vadd.f32 0.0, %v1801
        %v1803 = vpop.f32.mrb[0].mxu0
        %1804 = vmatprep.mubr.bf16.mxu0 0
        %1805 = vmatmul.mubr.bf16.gmra.mrb[0].mxu0 %v1670
        %v1806 = vpop.f32.mrb[0].mxu0
        %v1807 = vadd.f32 0.0, %v1806
        %v1808 = vpop.f32.mrb[0].mxu0
        %v1809 = vpop.f32.mrb[0].mxu0
        %v1810 = vadd.f32 0.0, %v1809
        %v1811 = vpop.f32.mrb[0].mxu0
        %1812 = vmatprep.mubr.bf16.mxu0 0
        %1813 = vmatmul.mubr.bf16.gmra.mrb[0].mxu0 %v1674
        %v1814 = vpop.f32.mrb[0].mxu0
        %v1815 = vadd.f32 0.0, %v1814
        %v1816 = vpop.f32.mrb[0].mxu0
        %v1817 = vpop.f32.mrb[0].mxu0
        %v1818 = vadd.f32 0.0, %v1817
        %v1819 = vpop.f32.mrb[0].mxu0
        %1820 = vmatprep.mubr.bf16.mxu0 0
        %1821 = vmatmul.mubr.bf16.gmra.mrb[0].mxu0 %v1678
        %v1822 = vpop.f32.mrb[0].mxu0
        %v1823 = vadd.f32 0.0, %v1822
        %v1824 = vpop.f32.mrb[0].mxu0
        %v1825 = vpop.f32.mrb[0].mxu0
        %v1826 = vadd.f32 0.0, %v1825
        %v1827 = vpop.f32.mrb[0].mxu0
        %1828 = vmatprep.mubr.bf16.mxu0 0
        %1829 = vmatmul.mubr.bf16.gmra.mrb[0].mxu0 %v1682
        %v1830 = vpop.f32.mrb[0].mxu0
        %v1831 = vadd.f32 0.0, %v1830
        %v1832 = vpop.f32.mrb[0].mxu0
        %v1833 = vpop.f32.mrb[0].mxu0
        %v1834 = vadd.f32 0.0, %v1833
        %v1835 = vpop.f32.mrb[0].mxu0
        %1836 = vmatprep.mubr.bf16.mxu0 0
        %1837 = vmatmul.mubr.bf16.gmra.mrb[0].mxu0 %v1691
        %v1838 = vpop.f32.mrb[0].mxu0
        %v1839 = vadd.f32 0.0, %v1838
        %v1840 = vpop.f32.mrb[0].mxu0
        %v1841 = vpop.f32.mrb[0].mxu0
        %v1842 = vadd.f32 0.0, %v1841
        %v1843 = vpop.f32.mrb[0].mxu0
        %1844 = vdwg.mxu0
        %v1845 = vadd.f32 %v1613, %v1783
        %v1846 = vadd.f32 %v1614, %v1786
        %v1847 = vadd.f32 %v1615, %v1791
        %v1848 = vadd.f32 %v1616, %v1794
        %v1849 = vadd.f32 %v1617, %v1799
        %v1850 = vadd.f32 %v1618, %v1802
        %v1851 = vadd.f32 %v1619, %v1807
        %v1852 = vadd.f32 %v1620, %v1810
        %v1853 = vadd.f32 %v1621, %v1815
        %v1854 = vadd.f32 %v1622, %v1818
        %v1855 = vadd.f32 %v1623, %v1823
        %v1856 = vadd.f32 %v1624, %v1826
        %v1857 = vadd.f32 %v1625, %v1831
        %v1858 = vadd.f32 %v1626, %v1834
        %v1859 = vadd.f32 %v1627, %v1839
        %v1860 = vadd.f32 %v1628, %v1842
        %v1861 = vld [vmem:[#allocation2 + $0x20] sm:$0xf8]
        %v1862 = vld [vmem:[#allocation2 + $0x28] sm:$0xff]
        %v1863 = vld [vmem:[#allocation2 + $0x30] sm:$0xff]
        %v1864 = vld [vmem:[#allocation2 + $0x38] sm:$0xff]
        %v1865 = vld [vmem:[#allocation2 + $0x40] sm:$0xff]
        %v1866 = vld [vmem:[#allocation2 + $0x48] sm:$0xff]
        %v1867 = vld [vmem:[#allocation2 + $0x50] sm:$0xff]
        %v1868 = vld [vmem:[#allocation2 + $0x58] sm:$0xff]
        %v1869 = vld [vmem:[#allocation2 + $0x60] sm:$0xf]
        %s1870 = scalar_lea.vmem %s1, 384
        %v1871 = vld [vmem:[%s1870] sm:$0xf]
        %v1872 = vld [vmem:[%s1870 + $0x4] sm:$0xf]
        %v1873 = vld [vmem:[%s1870 + $0x8] sm:$0xf]
        %v1874 = vld [vmem:[%s1870 + $0xc] sm:$0xf]
        %v1875 = vld [vmem:[%s1870 + $0x10] sm:$0xf]
        %v1876 = vld [vmem:[%s1870 + $0x14] sm:$0xf]
        %v1877 = vld [vmem:[%s1870 + $0x18] sm:$0xf]
        %v1878 = vld [vmem:[%s1870 + $0x1c] sm:$0xf]
        %v1879 = vld [vmem:[%s1870 + $0x20] sm:$0xf]
        %v1880 = vld [vmem:[%s1870 + $0x24] sm:$0xf]
        %v1881 = vld [vmem:[%s1870 + $0x28] sm:$0xf]
        %v1882 = vld [vmem:[%s1870 + $0x2c] sm:$0xf]
        %v1883 = vld [vmem:[%s1870 + $0x30] sm:$0xf]
        %v1884 = vld [vmem:[%s1870 + $0x34] sm:$0xf]
        %v1885 = vld [vmem:[%s1870 + $0x38] sm:$0xf]
        %v1886 = vld [vmem:[%s1870 + $0x3c] sm:$0xf]
        %v1888 = vshrl.u32 %v1861, 16
        %v1890 = vrot.slane %v1888, 3
        %v1891 = vshll.u32 %v1861, 16
        %v1893 = vrot.slane %v1891, 4
        %v1894 = vor.u32 %v1890, %v1893
        %v1896 = vshrl.u32 %v1862, 16
        %v1898 = vrot.slane %v1896, 3
        %v1899 = vshll.u32 %v1862, 16
        %v1901 = vrot.slane %v1899, 4
        %v1902 = vor.u32 %v1898, %v1901
        %v1903 = vsel %vm675, %v1894, %v1902
        %v1905 = vshrl.u32 %v1863, 16
        %v1907 = vrot.slane %v1905, 3
        %v1908 = vshll.u32 %v1863, 16
        %v1910 = vrot.slane %v1908, 4
        %v1911 = vor.u32 %v1907, %v1910
        %v1912 = vsel %vm675, %v1902, %v1911
        %v1914 = vshrl.u32 %v1864, 16
        %v1916 = vrot.slane %v1914, 3
        %v1917 = vshll.u32 %v1864, 16
        %v1919 = vrot.slane %v1917, 4
        %v1920 = vor.u32 %v1916, %v1919
        %v1921 = vsel %vm675, %v1911, %v1920
        %v1923 = vshrl.u32 %v1865, 16
        %v1925 = vrot.slane %v1923, 3
        %v1926 = vshll.u32 %v1865, 16
        %v1928 = vrot.slane %v1926, 4
        %v1929 = vor.u32 %v1925, %v1928
        %v1930 = vsel %vm675, %v1920, %v1929
        %v1932 = vshrl.u32 %v1866, 16
        %v1934 = vrot.slane %v1932, 3
        %v1935 = vshll.u32 %v1866, 16
        %v1937 = vrot.slane %v1935, 4
        %v1938 = vor.u32 %v1934, %v1937
        %v1939 = vsel %vm675, %v1929, %v1938
        %v1941 = vshrl.u32 %v1867, 16
        %v1943 = vrot.slane %v1941, 3
        %v1944 = vshll.u32 %v1867, 16
        %v1946 = vrot.slane %v1944, 4
        %v1947 = vor.u32 %v1943, %v1946
        %v1948 = vsel %vm675, %v1938, %v1947
        %v1950 = vshrl.u32 %v1868, 16
        %v1952 = vrot.slane %v1950, 3
        %v1953 = vshll.u32 %v1868, 16
        %v1955 = vrot.slane %v1953, 4
        %v1956 = vor.u32 %v1952, %v1955
        %v1957 = vsel %vm675, %v1947, %v1956
        %v1959 = vshrl.u32 %v1869, 16
        %v1961 = vrot.slane %v1959, 3
        %v1962 = vshll.u32 %v1869, 16
        %v1964 = vrot.slane %v1962, 4
        %v1965 = vor.u32 %v1961, %v1964
        %v1966 = vsel %vm675, %v1956, %v1965
        %v1991 = vunpack.c.l.b16 %v1871
        %v1992 = vunpack.c.l.b16 %v1872
        %v1993 = vunpack.c.l.b16 %v1873
        %v1994 = vunpack.c.l.b16 %v1874
        %v1995 = vunpack.c.l.b16 %v1875
        %v1996 = vunpack.c.l.b16 %v1876
        %v1997 = vunpack.c.l.b16 %v1877
        %v1998 = vunpack.c.l.b16 %v1878
        %v1999 = vunpack.c.l.b16 %v1879
        %v2000 = vunpack.c.l.b16 %v1880
        %v2001 = vunpack.c.l.b16 %v1881
        %v2002 = vunpack.c.l.b16 %v1882
        %v2003 = vunpack.c.l.b16 %v1883
        %v2004 = vunpack.c.l.b16 %v1884
        %v2005 = vunpack.c.l.b16 %v1885
        %v2006 = vunpack.c.l.b16 %v1886
        %v2007 = vpack.c.b16 %v1992, %v1991
        %v2008 = vpack.c.b16 %v1994, %v1993
        %v2009 = vpack.c.b16 %v1996, %v1995
        %v2010 = vpack.c.b16 %v1998, %v1997
        %v2011 = vpack.c.b16 %v2000, %v1999
        %v2012 = vpack.c.b16 %v2002, %v2001
        %v2013 = vpack.c.b16 %v2004, %v2003
        %v2014 = vpack.c.b16 %v2006, %v2005
        %2023 = vmatprep.subr.bf16.mxu0 0
        %2024 = vmatpush1.bf16.msra.mxu0 %v2007
        %2025 = vmatprep.subr.bf16.mxu0 0
        %2026 = vmatpush1.bf16.msra.mxu0 %v2008
        %2027 = vmatprep.subr.bf16.mxu0 0
        %2028 = vmatpush1.bf16.msra.mxu0 %v2009
        %2029 = vmatprep.subr.bf16.mxu0 0
        %2030 = vmatpush1.bf16.msra.mxu0 %v2010
        %2031 = vmatprep.subr.bf16.mxu0 0
        %2032 = vmatpush1.bf16.msra.mxu0 %v2011
        %2033 = vmatprep.subr.bf16.mxu0 0
        %2034 = vmatpush1.bf16.msra.mxu0 %v2012
        %2035 = vmatprep.subr.bf16.mxu0 0
        %2036 = vmatpush1.bf16.msra.mxu0 %v2013
        %2037 = vmatprep.subr.bf16.mxu0 0
        %2038 = vmatpush1.bf16.msra.mxu0 %v2014
        %2039 = vmatprep.subr.bf16.mxu0 0
        %2040 = vmatpush1.bf16.msra.mxu0 0
        %2041 = vmatprep.subr.bf16.mxu0 0
        %2042 = vmatpush1.bf16.msra.mxu0 0
        %2043 = vmatprep.subr.bf16.mxu0 0
        %2044 = vmatpush1.bf16.msra.mxu0 0
        %2045 = vmatprep.subr.bf16.mxu0 0
        %2046 = vmatpush1.bf16.msra.mxu0 0
        %2047 = vmatprep.subr.bf16.mxu0 0
        %2048 = vmatpush1.bf16.msra.mxu0 0
        %2049 = vmatprep.subr.bf16.mxu0 0
        %2050 = vmatpush1.bf16.msra.mxu0 0
        %2051 = vmatprep.subr.bf16.mxu0 0
        %2052 = vmatpush1.bf16.msra.mxu0 0
        %2053 = vmatprep.subr.bf16.mxu0 0
        %2054 = vmatpush1.bf16.msra.mxu0 0
        %2055 = vmatprep.mubr.bf16.mxu0 0
        %2056 = vmatmul.mubr.bf16.gmra.mrb[0].mxu0 %v1903
        %v2057 = vpop.f32.mrb[0].mxu0
        %v2058 = vadd.f32 0.0, %v2057
        %v2059 = vpop.f32.mrb[0].mxu0
        %v2060 = vpop.f32.mrb[0].mxu0
        %v2061 = vadd.f32 0.0, %v2060
        %v2062 = vpop.f32.mrb[0].mxu0
        %2063 = vmatprep.mubr.bf16.mxu0 0
        %2064 = vmatmul.mubr.bf16.gmra.mrb[0].mxu0 %v1912
        %v2065 = vpop.f32.mrb[0].mxu0
        %v2066 = vadd.f32 0.0, %v2065
        %v2067 = vpop.f32.mrb[0].mxu0
        %v2068 = vpop.f32.mrb[0].mxu0
        %v2069 = vadd.f32 0.0, %v2068
        %v2070 = vpop.f32.mrb[0].mxu0
        %2071 = vmatprep.mubr.bf16.mxu0 0
        %2072 = vmatmul.mubr.bf16.gmra.mrb[0].mxu0 %v1921
        %v2073 = vpop.f32.mrb[0].mxu0
        %v2074 = vadd.f32 0.0, %v2073
        %v2075 = vpop.f32.mrb[0].mxu0
        %v2076 = vpop.f32.mrb[0].mxu0
        %v2077 = vadd.f32 0.0, %v2076
        %v2078 = vpop.f32.mrb[0].mxu0
        %2079 = vmatprep.mubr.bf16.mxu0 0
        %2080 = vmatmul.mubr.bf16.gmra.mrb[0].mxu0 %v1930
        %v2081 = vpop.f32.mrb[0].mxu0
        %v2082 = vadd.f32 0.0, %v2081
        %v2083 = vpop.f32.mrb[0].mxu0
        %v2084 = vpop.f32.mrb[0].mxu0
        %v2085 = vadd.f32 0.0, %v2084
        %v2086 = vpop.f32.mrb[0].mxu0
        %2087 = vmatprep.mubr.bf16.mxu0 0
        %2088 = vmatmul.mubr.bf16.gmra.mrb[0].mxu0 %v1939
        %v2089 = vpop.f32.mrb[0].mxu0
        %v2090 = vadd.f32 0.0, %v2089
        %v2091 = vpop.f32.mrb[0].mxu0
        %v2092 = vpop.f32.mrb[0].mxu0
        %v2093 = vadd.f32 0.0, %v2092
        %v2094 = vpop.f32.mrb[0].mxu0
        %2095 = vmatprep.mubr.bf16.mxu0 0
        %2096 = vmatmul.mubr.bf16.gmra.mrb[0].mxu0 %v1948
        %v2097 = vpop.f32.mrb[0].mxu0
        %v2098 = vadd.f32 0.0, %v2097
        %v2099 = vpop.f32.mrb[0].mxu0
        %v2100 = vpop.f32.mrb[0].mxu0
        %v2101 = vadd.f32 0.0, %v2100
        %v2102 = vpop.f32.mrb[0].mxu0
        %2103 = vmatprep.mubr.bf16.mxu0 0
        %2104 = vmatmul.mubr.bf16.gmra.mrb[0].mxu0 %v1957
        %v2105 = vpop.f32.mrb[0].mxu0
        %v2106 = vadd.f32 0.0, %v2105
        %v2107 = vpop.f32.mrb[0].mxu0
        %v2108 = vpop.f32.mrb[0].mxu0
        %v2109 = vadd.f32 0.0, %v2108
        %v2110 = vpop.f32.mrb[0].mxu0
        %2111 = vmatprep.mubr.bf16.mxu0 0
        %2112 = vmatmul.mubr.bf16.gmra.mrb[0].mxu0 %v1966
        %v2113 = vpop.f32.mrb[0].mxu0
        %v2114 = vadd.f32 0.0, %v2113
        %v2115 = vpop.f32.mrb[0].mxu0
        %v2116 = vpop.f32.mrb[0].mxu0
        %v2117 = vadd.f32 0.0, %v2116
        %v2118 = vpop.f32.mrb[0].mxu0
        %2119 = vdwg.mxu0
        %v2120 = vadd.f32 %v1845, %v2058
        %v2121 = vadd.f32 %v1846, %v2061
        %v2122 = vadd.f32 %v1847, %v2066
        %v2123 = vadd.f32 %v1848, %v2069
        %v2124 = vadd.f32 %v1849, %v2074
        %v2125 = vadd.f32 %v1850, %v2077
        %v2126 = vadd.f32 %v1851, %v2082
        %v2127 = vadd.f32 %v1852, %v2085
        %v2128 = vadd.f32 %v1853, %v2090
        %v2129 = vadd.f32 %v1854, %v2093
        %v2130 = vadd.f32 %v1855, %v2098
        %v2131 = vadd.f32 %v1856, %v2101
        %v2132 = vadd.f32 %v1857, %v2106
        %v2133 = vadd.f32 %v1858, %v2109
        %v2134 = vadd.f32 %v1859, %v2114
        %v2135 = vadd.f32 %v1860, %v2117
        %v2136 = vld [vmem:[#allocation2 + $0x20] sm:$0xf0]
        %s2137 = scalar_lea.vmem %s1, 448
        %v2138 = vld [vmem:[%s2137] sm:$0xf]
        %v2139 = vld [vmem:[%s2137 + $0x4] sm:$0xf]
        %v2140 = vld [vmem:[%s2137 + $0x8] sm:$0xf]
        %v2141 = vld [vmem:[%s2137 + $0xc] sm:$0xf]
        %v2142 = vld [vmem:[%s2137 + $0x10] sm:$0xf]
        %v2143 = vld [vmem:[%s2137 + $0x14] sm:$0xf]
        %v2144 = vld [vmem:[%s2137 + $0x18] sm:$0xf]
        %v2145 = vld [vmem:[%s2137 + $0x1c] sm:$0xf]
        %v2146 = vld [vmem:[%s2137 + $0x20] sm:$0xf]
        %v2147 = vld [vmem:[%s2137 + $0x24] sm:$0xf]
        %v2148 = vld [vmem:[%s2137 + $0x28] sm:$0xf]
        %v2149 = vld [vmem:[%s2137 + $0x2c] sm:$0xf]
        %v2150 = vld [vmem:[%s2137 + $0x30] sm:$0xf]
        %v2151 = vld [vmem:[%s2137 + $0x34] sm:$0xf]
        %v2152 = vld [vmem:[%s2137 + $0x38] sm:$0xf]
        %v2153 = vld [vmem:[%s2137 + $0x3c] sm:$0xf]
        %v2163 = vrot.slane %v2136, 4
        %v2164 = vrot.slane %v1862, 4
        %v2165 = vsel %vm504, %v2163, %v2164
        %v2166 = vrot.slane %v1863, 4
        %v2167 = vsel %vm504, %v2164, %v2166
        %v2168 = vrot.slane %v1864, 4
        %v2169 = vsel %vm504, %v2166, %v2168
        %v2170 = vrot.slane %v1865, 4
        %v2171 = vsel %vm504, %v2168, %v2170
        %v2172 = vrot.slane %v1866, 4
        %v2173 = vsel %vm504, %v2170, %v2172
        %v2174 = vrot.slane %v1867, 4
        %v2175 = vsel %vm504, %v2172, %v2174
        %v2176 = vrot.slane %v1868, 4
        %v2177 = vsel %vm504, %v2174, %v2176
        %v2178 = vrot.slane %v1869, 4
        %v2179 = vsel %vm504, %v2176, %v2178
        %v2204 = vunpack.c.l.b16 %v2138
        %v2205 = vunpack.c.l.b16 %v2139
        %v2206 = vunpack.c.l.b16 %v2140
        %v2207 = vunpack.c.l.b16 %v2141
        %v2208 = vunpack.c.l.b16 %v2142
        %v2209 = vunpack.c.l.b16 %v2143
        %v2210 = vunpack.c.l.b16 %v2144
        %v2211 = vunpack.c.l.b16 %v2145
        %v2212 = vunpack.c.l.b16 %v2146
        %v2213 = vunpack.c.l.b16 %v2147
        %v2214 = vunpack.c.l.b16 %v2148
        %v2215 = vunpack.c.l.b16 %v2149
        %v2216 = vunpack.c.l.b16 %v2150
        %v2217 = vunpack.c.l.b16 %v2151
        %v2218 = vunpack.c.l.b16 %v2152
        %v2219 = vunpack.c.l.b16 %v2153
        %v2220 = vpack.c.b16 %v2205, %v2204
        %v2221 = vpack.c.b16 %v2207, %v2206
        %v2222 = vpack.c.b16 %v2209, %v2208
        %v2223 = vpack.c.b16 %v2211, %v2210
        %v2224 = vpack.c.b16 %v2213, %v2212
        %v2225 = vpack.c.b16 %v2215, %v2214
        %v2226 = vpack.c.b16 %v2217, %v2216
        %v2227 = vpack.c.b16 %v2219, %v2218
        %2236 = vmatprep.subr.bf16.mxu0 0
        %2237 = vmatpush1.bf16.msra.mxu0 %v2220
        %2238 = vmatprep.subr.bf16.mxu0 0
        %2239 = vmatpush1.bf16.msra.mxu0 %v2221
        %2240 = vmatprep.subr.bf16.mxu0 0
        %2241 = vmatpush1.bf16.msra.mxu0 %v2222
        %2242 = vmatprep.subr.bf16.mxu0 0
        %2243 = vmatpush1.bf16.msra.mxu0 %v2223
        %2244 = vmatprep.subr.bf16.mxu0 0
        %2245 = vmatpush1.bf16.msra.mxu0 %v2224
        %2246 = vmatprep.subr.bf16.mxu0 0
        %2247 = vmatpush1.bf16.msra.mxu0 %v2225
        %2248 = vmatprep.subr.bf16.mxu0 0
        %2249 = vmatpush1.bf16.msra.mxu0 %v2226
        %2250 = vmatprep.subr.bf16.mxu0 0
        %2251 = vmatpush1.bf16.msra.mxu0 %v2227
        %2252 = vmatprep.subr.bf16.mxu0 0
        %2253 = vmatpush1.bf16.msra.mxu0 0
        %2254 = vmatprep.subr.bf16.mxu0 0
        %2255 = vmatpush1.bf16.msra.mxu0 0
        %2256 = vmatprep.subr.bf16.mxu0 0
        %2257 = vmatpush1.bf16.msra.mxu0 0
        %2258 = vmatprep.subr.bf16.mxu0 0
        %2259 = vmatpush1.bf16.msra.mxu0 0
        %2260 = vmatprep.subr.bf16.mxu0 0
        %2261 = vmatpush1.bf16.msra.mxu0 0
        %2262 = vmatprep.subr.bf16.mxu0 0
        %2263 = vmatpush1.bf16.msra.mxu0 0
        %2264 = vmatprep.subr.bf16.mxu0 0
        %2265 = vmatpush1.bf16.msra.mxu0 0
        %2266 = vmatprep.subr.bf16.mxu0 0
        %2267 = vmatpush1.bf16.msra.mxu0 0
        %2268 = vmatprep.mubr.bf16.mxu0 0
        %2269 = vmatmul.mubr.bf16.gmra.mrb[0].mxu0 %v2165
        %v2270 = vpop.f32.mrb[0].mxu0
        %v2271 = vadd.f32 0.0, %v2270
        %v2272 = vpop.f32.mrb[0].mxu0
        %v2273 = vpop.f32.mrb[0].mxu0
        %v2274 = vadd.f32 0.0, %v2273
        %v2275 = vpop.f32.mrb[0].mxu0
        %2276 = vmatprep.mubr.bf16.mxu0 0
        %2277 = vmatmul.mubr.bf16.gmra.mrb[0].mxu0 %v2167
        %v2278 = vpop.f32.mrb[0].mxu0
        %v2279 = vadd.f32 0.0, %v2278
        %v2280 = vpop.f32.mrb[0].mxu0
        %v2281 = vpop.f32.mrb[0].mxu0
        %v2282 = vadd.f32 0.0, %v2281
        %v2283 = vpop.f32.mrb[0].mxu0
        %2284 = vmatprep.mubr.bf16.mxu0 0
        %2285 = vmatmul.mubr.bf16.gmra.mrb[0].mxu0 %v2169
        %v2286 = vpop.f32.mrb[0].mxu0
        %v2287 = vadd.f32 0.0, %v2286
        %v2288 = vpop.f32.mrb[0].mxu0
        %v2289 = vpop.f32.mrb[0].mxu0
        %v2290 = vadd.f32 0.0, %v2289
        %v2291 = vpop.f32.mrb[0].mxu0
        %2292 = vmatprep.mubr.bf16.mxu0 0
        %2293 = vmatmul.mubr.bf16.gmra.mrb[0].mxu0 %v2171
        %v2294 = vpop.f32.mrb[0].mxu0
        %v2295 = vadd.f32 0.0, %v2294
        %v2296 = vpop.f32.mrb[0].mxu0
        %v2297 = vpop.f32.mrb[0].mxu0
        %v2298 = vadd.f32 0.0, %v2297
        %v2299 = vpop.f32.mrb[0].mxu0
        %2300 = vmatprep.mubr.bf16.mxu0 0
        %2301 = vmatmul.mubr.bf16.gmra.mrb[0].mxu0 %v2173
        %v2302 = vpop.f32.mrb[0].mxu0
        %v2303 = vadd.f32 0.0, %v2302
        %v2304 = vpop.f32.mrb[0].mxu0
        %v2305 = vpop.f32.mrb[0].mxu0
        %v2306 = vadd.f32 0.0, %v2305
        %v2307 = vpop.f32.mrb[0].mxu0
        %2308 = vmatprep.mubr.bf16.mxu0 0
        %2309 = vmatmul.mubr.bf16.gmra.mrb[0].mxu0 %v2175
        %v2310 = vpop.f32.mrb[0].mxu0
        %v2311 = vadd.f32 0.0, %v2310
        %v2312 = vpop.f32.mrb[0].mxu0
        %v2313 = vpop.f32.mrb[0].mxu0
        %v2314 = vadd.f32 0.0, %v2313
        %v2315 = vpop.f32.mrb[0].mxu0
        %2316 = vmatprep.mubr.bf16.mxu0 0
        %2317 = vmatmul.mubr.bf16.gmra.mrb[0].mxu0 %v2177
        %v2318 = vpop.f32.mrb[0].mxu0
        %v2319 = vadd.f32 0.0, %v2318
        %v2320 = vpop.f32.mrb[0].mxu0
        %v2321 = vpop.f32.mrb[0].mxu0
        %v2322 = vadd.f32 0.0, %v2321
        %v2323 = vpop.f32.mrb[0].mxu0
        %2324 = vmatprep.mubr.bf16.mxu0 0
        %2325 = vmatmul.mubr.bf16.gmra.mrb[0].mxu0 %v2179
        %v2326 = vpop.f32.mrb[0].mxu0
        %v2327 = vadd.f32 0.0, %v2326
        %v2328 = vpop.f32.mrb[0].mxu0
        %v2329 = vpop.f32.mrb[0].mxu0
        %v2330 = vadd.f32 0.0, %v2329
        %v2331 = vpop.f32.mrb[0].mxu0
        %2332 = vdwg.mxu0
        %v2333 = vadd.f32 %v2120, %v2271
        %v2334 = vadd.f32 %v2121, %v2274
        %v2335 = vadd.f32 %v2122, %v2279
        %v2336 = vadd.f32 %v2123, %v2282
        %v2337 = vadd.f32 %v2124, %v2287
        %v2338 = vadd.f32 %v2125, %v2290
        %v2339 = vadd.f32 %v2126, %v2295
        %v2340 = vadd.f32 %v2127, %v2298
        %v2341 = vadd.f32 %v2128, %v2303
        %v2342 = vadd.f32 %v2129, %v2306
        %v2343 = vadd.f32 %v2130, %v2311
        %v2344 = vadd.f32 %v2131, %v2314
        %v2345 = vadd.f32 %v2132, %v2319
        %v2346 = vadd.f32 %v2133, %v2322
        %v2347 = vadd.f32 %v2134, %v2327
        %v2348 = vadd.f32 %v2135, %v2330
        %v2349 = vld [vmem:[#allocation2 + $0x60] sm:$0x1f]
        %s2350 = scalar_lea.vmem %s1, 512
        %v2351 = vld [vmem:[%s2350] sm:$0xf]
        %v2352 = vld [vmem:[%s2350 + $0x4] sm:$0xf]
        %v2353 = vld [vmem:[%s2350 + $0x8] sm:$0xf]
        %v2354 = vld [vmem:[%s2350 + $0xc] sm:$0xf]
        %v2355 = vld [vmem:[%s2350 + $0x10] sm:$0xf]
        %v2356 = vld [vmem:[%s2350 + $0x14] sm:$0xf]
        %v2357 = vld [vmem:[%s2350 + $0x18] sm:$0xf]
        %v2358 = vld [vmem:[%s2350 + $0x1c] sm:$0xf]
        %v2359 = vld [vmem:[%s2350 + $0x20] sm:$0xf]
        %v2360 = vld [vmem:[%s2350 + $0x24] sm:$0xf]
        %v2361 = vld [vmem:[%s2350 + $0x28] sm:$0xf]
        %v2362 = vld [vmem:[%s2350 + $0x2c] sm:$0xf]
        %v2363 = vld [vmem:[%s2350 + $0x30] sm:$0xf]
        %v2364 = vld [vmem:[%s2350 + $0x34] sm:$0xf]
        %v2365 = vld [vmem:[%s2350 + $0x38] sm:$0xf]
        %v2366 = vld [vmem:[%s2350 + $0x3c] sm:$0xf]
        %v2368 = vshrl.u32 %v2136, 16
        %v2370 = vrot.slane %v2368, 4
        %v2371 = vshll.u32 %v2136, 16
        %v2373 = vrot.slane %v2371, 5
        %v2374 = vor.u32 %v2370, %v2373
        %v2375 = vrot.slane %v1896, 4
        %v2376 = vrot.slane %v1899, 5
        %v2377 = vor.u32 %v2375, %v2376
        %v2378 = vsel %vm231, %v2374, %v2377
        %v2379 = vrot.slane %v1905, 4
        %v2380 = vrot.slane %v1908, 5
        %v2381 = vor.u32 %v2379, %v2380
        %v2382 = vsel %vm231, %v2377, %v2381
        %v2383 = vrot.slane %v1914, 4
        %v2384 = vrot.slane %v1917, 5
        %v2385 = vor.u32 %v2383, %v2384
        %v2386 = vsel %vm231, %v2381, %v2385
        %v2387 = vrot.slane %v1923, 4
        %v2388 = vrot.slane %v1926, 5
        %v2389 = vor.u32 %v2387, %v2388
        %v2390 = vsel %vm231, %v2385, %v2389
        %v2391 = vrot.slane %v1932, 4
        %v2392 = vrot.slane %v1935, 5
        %v2393 = vor.u32 %v2391, %v2392
        %v2394 = vsel %vm231, %v2389, %v2393
        %v2395 = vrot.slane %v1941, 4
        %v2396 = vrot.slane %v1944, 5
        %v2397 = vor.u32 %v2395, %v2396
        %v2398 = vsel %vm231, %v2393, %v2397
        %v2399 = vrot.slane %v1950, 4
        %v2400 = vrot.slane %v1953, 5
        %v2401 = vor.u32 %v2399, %v2400
        %v2402 = vsel %vm231, %v2397, %v2401
        %v2404 = vshrl.u32 %v2349, 16
        %v2406 = vrot.slane %v2404, 4
        %v2407 = vshll.u32 %v2349, 16
        %v2409 = vrot.slane %v2407, 5
        %v2410 = vor.u32 %v2406, %v2409
        %v2411 = vsel %vm231, %v2401, %v2410
        %v2436 = vunpack.c.l.b16 %v2351
        %v2437 = vunpack.c.l.b16 %v2352
        %v2438 = vunpack.c.l.b16 %v2353
        %v2439 = vunpack.c.l.b16 %v2354
        %v2440 = vunpack.c.l.b16 %v2355
        %v2441 = vunpack.c.l.b16 %v2356
        %v2442 = vunpack.c.l.b16 %v2357
        %v2443 = vunpack.c.l.b16 %v2358
        %v2444 = vunpack.c.l.b16 %v2359
        %v2445 = vunpack.c.l.b16 %v2360
        %v2446 = vunpack.c.l.b16 %v2361
        %v2447 = vunpack.c.l.b16 %v2362
        %v2448 = vunpack.c.l.b16 %v2363
        %v2449 = vunpack.c.l.b16 %v2364
        %v2450 = vunpack.c.l.b16 %v2365
        %v2451 = vunpack.c.l.b16 %v2366
        %v2452 = vpack.c.b16 %v2437, %v2436
        %v2453 = vpack.c.b16 %v2439, %v2438
        %v2454 = vpack.c.b16 %v2441, %v2440
        %v2455 = vpack.c.b16 %v2443, %v2442
        %v2456 = vpack.c.b16 %v2445, %v2444
        %v2457 = vpack.c.b16 %v2447, %v2446
        %v2458 = vpack.c.b16 %v2449, %v2448
        %v2459 = vpack.c.b16 %v2451, %v2450
        %2468 = vmatprep.subr.bf16.mxu0 0
        %2469 = vmatpush1.bf16.msra.mxu0 %v2452
        %2470 = vmatprep.subr.bf16.mxu0 0
        %2471 = vmatpush1.bf16.msra.mxu0 %v2453
        %2472 = vmatprep.subr.bf16.mxu0 0
        %2473 = vmatpush1.bf16.msra.mxu0 %v2454
        %2474 = vmatprep.subr.bf16.mxu0 0
        %2475 = vmatpush1.bf16.msra.mxu0 %v2455
        %2476 = vmatprep.subr.bf16.mxu0 0
        %2477 = vmatpush1.bf16.msra.mxu0 %v2456
        %2478 = vmatprep.subr.bf16.mxu0 0
        %2479 = vmatpush1.bf16.msra.mxu0 %v2457
        %2480 = vmatprep.subr.bf16.mxu0 0
        %2481 = vmatpush1.bf16.msra.mxu0 %v2458
        %2482 = vmatprep.subr.bf16.mxu0 0
        %2483 = vmatpush1.bf16.msra.mxu0 %v2459
        %2484 = vmatprep.subr.bf16.mxu0 0
        %2485 = vmatpush1.bf16.msra.mxu0 0
        %2486 = vmatprep.subr.bf16.mxu0 0
        %2487 = vmatpush1.bf16.msra.mxu0 0
        %2488 = vmatprep.subr.bf16.mxu0 0
        %2489 = vmatpush1.bf16.msra.mxu0 0
        %2490 = vmatprep.subr.bf16.mxu0 0
        %2491 = vmatpush1.bf16.msra.mxu0 0
        %2492 = vmatprep.subr.bf16.mxu0 0
        %2493 = vmatpush1.bf16.msra.mxu0 0
        %2494 = vmatprep.subr.bf16.mxu0 0
        %2495 = vmatpush1.bf16.msra.mxu0 0
        %2496 = vmatprep.subr.bf16.mxu0 0
        %2497 = vmatpush1.bf16.msra.mxu0 0
        %2498 = vmatprep.subr.bf16.mxu0 0
        %2499 = vmatpush1.bf16.msra.mxu0 0
        %2500 = vmatprep.mubr.bf16.mxu0 0
        %2501 = vmatmul.mubr.bf16.gmra.mrb[0].mxu0 %v2378
        %v2502 = vpop.f32.mrb[0].mxu0
        %v2503 = vadd.f32 0.0, %v2502
        %v2504 = vpop.f32.mrb[0].mxu0
        %v2505 = vpop.f32.mrb[0].mxu0
        %v2506 = vadd.f32 0.0, %v2505
        %v2507 = vpop.f32.mrb[0].mxu0
        %2508 = vmatprep.mubr.bf16.mxu0 0
        %2509 = vmatmul.mubr.bf16.gmra.mrb[0].mxu0 %v2382
        %v2510 = vpop.f32.mrb[0].mxu0
        %v2511 = vadd.f32 0.0, %v2510
        %v2512 = vpop.f32.mrb[0].mxu0
        %v2513 = vpop.f32.mrb[0].mxu0
        %v2514 = vadd.f32 0.0, %v2513
        %v2515 = vpop.f32.mrb[0].mxu0
        %2516 = vmatprep.mubr.bf16.mxu0 0
        %2517 = vmatmul.mubr.bf16.gmra.mrb[0].mxu0 %v2386
        %v2518 = vpop.f32.mrb[0].mxu0
        %v2519 = vadd.f32 0.0, %v2518
        %v2520 = vpop.f32.mrb[0].mxu0
        %v2521 = vpop.f32.mrb[0].mxu0
        %v2522 = vadd.f32 0.0, %v2521
        %v2523 = vpop.f32.mrb[0].mxu0
        %2524 = vmatprep.mubr.bf16.mxu0 0
        %2525 = vmatmul.mubr.bf16.gmra.mrb[0].mxu0 %v2390
        %v2526 = vpop.f32.mrb[0].mxu0
        %v2527 = vadd.f32 0.0, %v2526
        %v2528 = vpop.f32.mrb[0].mxu0
        %v2529 = vpop.f32.mrb[0].mxu0
        %v2530 = vadd.f32 0.0, %v2529
        %v2531 = vpop.f32.mrb[0].mxu0
        %2532 = vmatprep.mubr.bf16.mxu0 0
        %2533 = vmatmul.mubr.bf16.gmra.mrb[0].mxu0 %v2394
        %v2534 = vpop.f32.mrb[0].mxu0
        %v2535 = vadd.f32 0.0, %v2534
        %v2536 = vpop.f32.mrb[0].mxu0
        %v2537 = vpop.f32.mrb[0].mxu0
        %v2538 = vadd.f32 0.0, %v2537
        %v2539 = vpop.f32.mrb[0].mxu0
        %2540 = vmatprep.mubr.bf16.mxu0 0
        %2541 = vmatmul.mubr.bf16.gmra.mrb[0].mxu0 %v2398
        %v2542 = vpop.f32.mrb[0].mxu0
        %v2543 = vadd.f32 0.0, %v2542
        %v2544 = vpop.f32.mrb[0].mxu0
        %v2545 = vpop.f32.mrb[0].mxu0
        %v2546 = vadd.f32 0.0, %v2545
        %v2547 = vpop.f32.mrb[0].mxu0
        %2548 = vmatprep.mubr.bf16.mxu0 0
        %2549 = vmatmul.mubr.bf16.gmra.mrb[0].mxu0 %v2402
        %v2550 = vpop.f32.mrb[0].mxu0
        %v2551 = vadd.f32 0.0, %v2550
        %v2552 = vpop.f32.mrb[0].mxu0
        %v2553 = vpop.f32.mrb[0].mxu0
        %v2554 = vadd.f32 0.0, %v2553
        %v2555 = vpop.f32.mrb[0].mxu0
        %2556 = vmatprep.mubr.bf16.mxu0 0
        %2557 = vmatmul.mubr.bf16.gmra.mrb[0].mxu0 %v2411
        %v2558 = vpop.f32.mrb[0].mxu0
        %v2559 = vadd.f32 0.0, %v2558
        %v2560 = vpop.f32.mrb[0].mxu0
        %v2561 = vpop.f32.mrb[0].mxu0
        %v2562 = vadd.f32 0.0, %v2561
        %v2563 = vpop.f32.mrb[0].mxu0
        %2564 = vdwg.mxu0
        %v2565 = vadd.f32 %v2333, %v2503
        %v2566 = vadd.f32 %v2334, %v2506
        %v2567 = vadd.f32 %v2335, %v2511
        %v2568 = vadd.f32 %v2336, %v2514
        %v2569 = vadd.f32 %v2337, %v2519
        %v2570 = vadd.f32 %v2338, %v2522
        %v2571 = vadd.f32 %v2339, %v2527
        %v2572 = vadd.f32 %v2340, %v2530
        %v2573 = vadd.f32 %v2341, %v2535
        %v2574 = vadd.f32 %v2342, %v2538
        %v2575 = vadd.f32 %v2343, %v2543
        %v2576 = vadd.f32 %v2344, %v2546
        %v2577 = vadd.f32 %v2345, %v2551
        %v2578 = vadd.f32 %v2346, %v2554
        %v2579 = vadd.f32 %v2347, %v2559
        %v2580 = vadd.f32 %v2348, %v2562
        %v2582 = vlaneseq
        %v2583 = vshrl.u32 %v2582, 7
        %v2584 = vsub.s32 0, %v2583
        %v2585 = vrot.slane %v451, %v2584
        %v2587 = vadd.f32 %v2565, %v2585
        %v2588 = vadd.f32 %v2566, %v2585
        %v2589 = vadd.f32 %v2567, %v2585
        %v2590 = vadd.f32 %v2568, %v2585
        %v2591 = vadd.f32 %v2569, %v2585
        %v2592 = vadd.f32 %v2570, %v2585
        %v2593 = vadd.f32 %v2571, %v2585
        %v2594 = vadd.f32 %v2572, %v2585
        %v2595 = vadd.f32 %v2573, %v2585
        %v2596 = vadd.f32 %v2574, %v2585
        %v2597 = vadd.f32 %v2575, %v2585
        %v2598 = vadd.f32 %v2576, %v2585
        %v2599 = vadd.f32 %v2577, %v2585
        %v2600 = vadd.f32 %v2578, %v2585
        %v2601 = vadd.f32 %v2579, %v2585
        %v2602 = vadd.f32 %v2580, %v2585
        %v2603 = vpack.c.bf16 %v2588, %v2587
        %v2604 = vpack.c.bf16 %v2590, %v2589
        %v2605 = vpack.c.bf16 %v2592, %v2591
        %v2606 = vpack.c.bf16 %v2594, %v2593
        %v2607 = vpack.c.bf16 %v2596, %v2595
        %v2608 = vpack.c.bf16 %v2598, %v2597
        %v2609 = vpack.c.bf16 %v2600, %v2599
        %v2610 = vpack.c.bf16 %v2602, %v2601
        %v2613 = vunpack.c.l.b16 %v2603
        %v2614 = vunpack.c.h.b16 %v2603
        %v2615 = vunpack.c.l.b16 %v2604
        %v2616 = vunpack.c.h.b16 %v2604
        %v2617 = vpack.c.b16 %v2613, %v2613
        %v2618 = vpack.c.b16 %v2614, %v2614
        %v2619 = vpack.c.b16 %v2615, %v2615
        %v2620 = vpack.c.b16 %v2616, %v2616
        %2625 = vst [vmem:[%s163] sm:$0xf] %v2617
        %2626 = vst [vmem:[%s163 + $0x4] sm:$0xf] %v2618
        %2627 = vst [vmem:[%s163 + $0x8] sm:$0xf] %v2619
        %v2628 = vld [vmem:[%s163 + $0xc] sm:$0x1]
        %v2629 = vsel %vm213, %v2620, %v2628
        %2630 = vst [vmem:[%s163 + $0xc] sm:$0x1] %v2629
        %v2633 = vunpack.c.l.b16 %v2605
        %v2634 = vunpack.c.h.b16 %v2605
        %v2635 = vunpack.c.l.b16 %v2606
        %v2636 = vunpack.c.h.b16 %v2606
        %v2637 = vpack.c.b16 %v2633, %v2633
        %v2638 = vpack.c.b16 %v2634, %v2634
        %v2639 = vpack.c.b16 %v2635, %v2635
        %v2640 = vpack.c.b16 %v2636, %v2636
        %vm2641 = vsmask.f32 4368
        %vm2642 = vmor %vm212, %vm2641
        %v2644 = vshrl.u32 %v2637, 16
        %v2646 = vrot.slane %v2644, 7
        %v2647 = vshll.u32 %v2637, 16
        %v2649 = vor.u32 %v2646, %v2647
        %v2650 = vrot.slane %v2646, 4
        %v2652 = vshrl.u32 %v2638, 16
        %v2654 = vrot.slane %v2652, 7
        %v2655 = vshll.u32 %v2638, 16
        %v2657 = vor.u32 %v2654, %v2655
        %v2658 = vsel %vm2642, %v2650, %v2657
        %v2659 = vrot.slane %v2654, 4
        %v2661 = vshrl.u32 %v2639, 16
        %v2663 = vrot.slane %v2661, 7
        %v2664 = vshll.u32 %v2639, 16
        %v2666 = vor.u32 %v2663, %v2664
        %v2667 = vsel %vm2642, %v2659, %v2666
        %v2668 = vrot.slane %v2663, 4
        %v2670 = vshll.u32 %v2640, 16
        %v2672 = vsel %vm2642, %v2668, %v2670
        %vm2677 = vsmask.f32 7938
        %vm2678 = vmand %vm504, %vm2677
        %v2679 = vld [vmem:[%s163 + $0xc] sm:$0xf]
        %v2680 = vsel %vm2678, %v2649, %v2679
        %2681 = vst [vmem:[%s163 + $0xc] sm:$0xf] %v2680
        %2682 = vst [vmem:[%s163 + $0x10] sm:$0xf] %v2658
        %2683 = vst [vmem:[%s163 + $0x14] sm:$0xf] %v2667
        %2684 = vst [vmem:[%s163 + $0x18] sm:$0x1] %v2672
        %v2687 = vunpack.c.l.b16 %v2607
        %v2688 = vunpack.c.h.b16 %v2607
        %v2689 = vunpack.c.l.b16 %v2608
        %v2690 = vunpack.c.h.b16 %v2608
        %v2691 = vpack.c.b16 %v2687, %v2687
        %v2692 = vpack.c.b16 %v2688, %v2688
        %v2693 = vpack.c.b16 %v2689, %v2689
        %v2694 = vpack.c.b16 %v2690, %v2690
        %vm2695 = vcmask 1044484
        %vm2696 = vmor %vm211, %vm2695
        %v2697 = vrot.slane %v2691, 7
        %v2698 = vrot.slane %v2697, 4
        %v2699 = vrot.slane %v2692, 7
        %v2700 = vsel %vm2696, %v2698, %v2699
        %v2701 = vrot.slane %v2699, 4
        %v2702 = vrot.slane %v2693, 7
        %v2703 = vsel %vm2696, %v2701, %v2702
        %v2704 = vrot.slane %v2702, 4
        %v2705 = vrot.slane %v2694, 7
        %v2706 = vsel %vm2696, %v2704, %v2705
        %2711 = vst [vmem:[%s163 + $0x18] sm:$0xe] %v2697
        %2712 = vst [vmem:[%s163 + $0x1c] sm:$0xf] %v2700
        %2713 = vst [vmem:[%s163 + $0x20] sm:$0xf] %v2703
        %vm2714 = vmand %vm337, %vm363
        %v2715 = vld [vmem:[%s163 + $0x24] sm:$0x3]
        %v2716 = vsel %vm2714, %v2706, %v2715
        %2717 = vst [vmem:[%s163 + $0x24] sm:$0x3] %v2716
        %v2720 = vunpack.c.l.b16 %v2609
        %v2721 = vunpack.c.h.b16 %v2609
        %v2722 = vunpack.c.l.b16 %v2610
        %v2723 = vunpack.c.h.b16 %v2610
        %v2724 = vpack.c.b16 %v2720, %v2720
        %v2725 = vpack.c.b16 %v2721, %v2721
        %v2726 = vpack.c.b16 %v2722, %v2722
        %v2727 = vpack.c.b16 %v2723, %v2723
        %vm2728 = vsmask.f32 5392
        %vm2729 = vmor %vm363, %vm2728
        %v2731 = vshrl.u32 %v2724, 16
        %v2733 = vrot.slane %v2731, 6
        %v2734 = vshll.u32 %v2724, 16
        %v2736 = vrot.slane %v2734, 7
        %v2737 = vor.u32 %v2733, %v2736
        %v2738 = vrot.slane %v2737, 4
        %v2740 = vshrl.u32 %v2725, 16
        %v2742 = vrot.slane %v2740, 6
        %v2743 = vshll.u32 %v2725, 16
        %v2745 = vrot.slane %v2743, 7
        %v2746 = vor.u32 %v2742, %v2745
        %v2747 = vsel %vm2729, %v2738, %v2746
        %v2748 = vrot.slane %v2746, 4
        %v2750 = vshrl.u32 %v2726, 16
        %v2752 = vrot.slane %v2750, 6
        %v2753 = vshll.u32 %v2726, 16
        %v2755 = vrot.slane %v2753, 7
        %v2756 = vor.u32 %v2752, %v2755
        %v2757 = vsel %vm2729, %v2748, %v2756
        %v2758 = vrot.slane %v2756, 4
        %v2760 = vshll.u32 %v2727, 16
        %v2762 = vrot.slane %v2760, 7
        %v2763 = vsel %vm2729, %v2758, %v2762
        %vm2768 = vcmask 1043457
        %vm2769 = vsmask.f32 7942
        %vm2770 = vmand %vm2768, %vm2769
        %v2771 = vld [vmem:[%s163 + $0x24] sm:$0xe]
        %v2772 = vsel %vm2770, %v2737, %v2771
        %2773 = vst [vmem:[%s163 + $0x24] sm:$0xe] %v2772
        %2774 = vst [vmem:[%s163 + $0x28] sm:$0xf] %v2747
        %2775 = vst [vmem:[%s163 + $0x2c] sm:$0xf] %v2757
        %2776 = vst [vmem:[%s163 + $0x30] sm:$0x3] %v2763
        %v2777 = vld [vmem:[#allocation2 + $0x40] sm:$0xf8]
        %v2778 = vld [vmem:[#allocation2 + $0x48] sm:$0xff]
        %v2779 = vld [vmem:[#allocation2 + $0x50] sm:$0xff]
        %v2780 = vld [vmem:[#allocation2 + $0x58] sm:$0xff]
        %v2781 = vld [vmem:[#allocation2 + $0x60] sm:$0xff]
        %v2782 = vld [vmem:[#allocation2 + $0x68] sm:$0xff]
        %v2783 = vld [vmem:[#allocation2 + $0x70] sm:$0xff]
        %v2784 = vld [vmem:[#allocation2 + $0x78] sm:$0xff]
        %v2785 = vld [vmem:[#allocation2 + $0x80] sm:$0xf]
        %v2786 = vld [vmem:[%s1] sm:$0xf]
        %v2787 = vld [vmem:[%s1 + $0x4] sm:$0xf]
        %v2788 = vld [vmem:[%s1 + $0x8] sm:$0xf]
        %v2789 = vld [vmem:[%s1 + $0xc] sm:$0xf]
        %v2790 = vld [vmem:[%s1 + $0x10] sm:$0xf]
        %v2791 = vld [vmem:[%s1 + $0x14] sm:$0xf]
        %v2792 = vld [vmem:[%s1 + $0x18] sm:$0xf]
        %v2793 = vld [vmem:[%s1 + $0x1c] sm:$0xf]
        %v2794 = vld [vmem:[%s1 + $0x20] sm:$0xf]
        %v2795 = vld [vmem:[%s1 + $0x24] sm:$0xf]
        %v2796 = vld [vmem:[%s1 + $0x28] sm:$0xf]
        %v2797 = vld [vmem:[%s1 + $0x2c] sm:$0xf]
        %v2798 = vld [vmem:[%s1 + $0x30] sm:$0xf]
        %v2799 = vld [vmem:[%s1 + $0x34] sm:$0xf]
        %v2800 = vld [vmem:[%s1 + $0x38] sm:$0xf]
        %v2801 = vld [vmem:[%s1 + $0x3c] sm:$0xf]
        %v2802 = vld [vmem:[#allocation2 + $0x40] sm:$0xf0]
        %v2803 = vld [vmem:[%s478] sm:$0xf]
        %v2804 = vld [vmem:[%s478 + $0x4] sm:$0xf]
        %v2805 = vld [vmem:[%s478 + $0x8] sm:$0xf]
        %v2806 = vld [vmem:[%s478 + $0xc] sm:$0xf]
        %v2807 = vld [vmem:[%s478 + $0x10] sm:$0xf]
        %v2808 = vld [vmem:[%s478 + $0x14] sm:$0xf]
        %v2809 = vld [vmem:[%s478 + $0x18] sm:$0xf]
        %v2810 = vld [vmem:[%s478 + $0x1c] sm:$0xf]
        %v2811 = vld [vmem:[%s478 + $0x20] sm:$0xf]
        %v2812 = vld [vmem:[%s478 + $0x24] sm:$0xf]
        %v2813 = vld [vmem:[%s478 + $0x28] sm:$0xf]
        %v2814 = vld [vmem:[%s478 + $0x2c] sm:$0xf]
        %v2815 = vld [vmem:[%s478 + $0x30] sm:$0xf]
        %v2816 = vld [vmem:[%s478 + $0x34] sm:$0xf]
        %v2817 = vld [vmem:[%s478 + $0x38] sm:$0xf]
        %v2818 = vld [vmem:[%s478 + $0x3c] sm:$0xf]
        %v2828 = vrot.slane %v2802, 4
        %v2829 = vrot.slane %v2778, 4
        %v2830 = vsel %vm504, %v2828, %v2829
        %v2831 = vrot.slane %v2779, 4
        %v2832 = vsel %vm504, %v2829, %v2831
        %v2833 = vrot.slane %v2780, 4
        %v2834 = vsel %vm504, %v2831, %v2833
        %v2835 = vrot.slane %v2781, 4
        %v2836 = vsel %vm504, %v2833, %v2835
        %v2837 = vrot.slane %v2782, 4
        %v2838 = vsel %vm504, %v2835, %v2837
        %v2839 = vrot.slane %v2783, 4
        %v2840 = vsel %vm504, %v2837, %v2839
        %v2841 = vrot.slane %v2784, 4
        %v2842 = vsel %vm504, %v2839, %v2841
        %v2843 = vrot.slane %v2785, 4
        %v2844 = vsel %vm504, %v2841, %v2843
        %v2869 = vunpack.c.l.b16 %v2803
        %v2870 = vunpack.c.l.b16 %v2804
        %v2871 = vunpack.c.l.b16 %v2805
        %v2872 = vunpack.c.l.b16 %v2806
        %v2873 = vunpack.c.l.b16 %v2807
        %v2874 = vunpack.c.l.b16 %v2808
        %v2875 = vunpack.c.l.b16 %v2809
        %v2876 = vunpack.c.l.b16 %v2810
        %v2877 = vunpack.c.l.b16 %v2811
        %v2878 = vunpack.c.l.b16 %v2812
        %v2879 = vunpack.c.l.b16 %v2813
        %v2880 = vunpack.c.l.b16 %v2814
        %v2881 = vunpack.c.l.b16 %v2815
        %v2882 = vunpack.c.l.b16 %v2816
        %v2883 = vunpack.c.l.b16 %v2817
        %v2884 = vunpack.c.l.b16 %v2818
        %v2885 = vpack.c.b16 %v2870, %v2869
        %v2886 = vpack.c.b16 %v2872, %v2871
        %v2887 = vpack.c.b16 %v2874, %v2873
        %v2888 = vpack.c.b16 %v2876, %v2875
        %v2889 = vpack.c.b16 %v2878, %v2877
        %v2890 = vpack.c.b16 %v2880, %v2879
        %v2891 = vpack.c.b16 %v2882, %v2881
        %v2892 = vpack.c.b16 %v2884, %v2883
        %2901 = vmatprep.subr.bf16.mxu0 0
        %2902 = vmatpush1.bf16.msra.mxu0 %v2885
        %2903 = vmatprep.subr.bf16.mxu0 0
        %2904 = vmatpush1.bf16.msra.mxu0 %v2886
        %2905 = vmatprep.subr.bf16.mxu0 0
        %2906 = vmatpush1.bf16.msra.mxu0 %v2887
        %2907 = vmatprep.subr.bf16.mxu0 0
        %2908 = vmatpush1.bf16.msra.mxu0 %v2888
        %2909 = vmatprep.subr.bf16.mxu0 0
        %2910 = vmatpush1.bf16.msra.mxu0 %v2889
        %2911 = vmatprep.subr.bf16.mxu0 0
        %2912 = vmatpush1.bf16.msra.mxu0 %v2890
        %2913 = vmatprep.subr.bf16.mxu0 0
        %2914 = vmatpush1.bf16.msra.mxu0 %v2891
        %2915 = vmatprep.subr.bf16.mxu0 0
        %2916 = vmatpush1.bf16.msra.mxu0 %v2892
        %2917 = vmatprep.subr.bf16.mxu0 0
        %2918 = vmatpush1.bf16.msra.mxu0 0
        %2919 = vmatprep.subr.bf16.mxu0 0
        %2920 = vmatpush1.bf16.msra.mxu0 0
        %2921 = vmatprep.subr.bf16.mxu0 0
        %2922 = vmatpush1.bf16.msra.mxu0 0
        %2923 = vmatprep.subr.bf16.mxu0 0
        %2924 = vmatpush1.bf16.msra.mxu0 0
        %2925 = vmatprep.subr.bf16.mxu0 0
        %2926 = vmatpush1.bf16.msra.mxu0 0
        %2927 = vmatprep.subr.bf16.mxu0 0
        %2928 = vmatpush1.bf16.msra.mxu0 0
        %2929 = vmatprep.subr.bf16.mxu0 0
        %2930 = vmatpush1.bf16.msra.mxu0 0
        %2931 = vmatprep.subr.bf16.mxu0 0
        %2932 = vmatpush1.bf16.msra.mxu0 0
        %2933 = vmatprep.mubr.bf16.mxu0 0
        %2934 = vmatmul.mubr.bf16.gmra.mrb[0].mxu0 %v2830
        %v2935 = vpop.f32.mrb[0].mxu0
        %v2936 = vadd.f32 0.0, %v2935
        %v2937 = vpop.f32.mrb[0].mxu0
        %v2938 = vpop.f32.mrb[0].mxu0
        %v2939 = vadd.f32 0.0, %v2938
        %v2940 = vpop.f32.mrb[0].mxu0
        %2941 = vmatprep.mubr.bf16.mxu0 0
        %2942 = vmatmul.mubr.bf16.gmra.mrb[0].mxu0 %v2832
        %v2943 = vpop.f32.mrb[0].mxu0
        %v2944 = vadd.f32 0.0, %v2943
        %v2945 = vpop.f32.mrb[0].mxu0
        %v2946 = vpop.f32.mrb[0].mxu0
        %v2947 = vadd.f32 0.0, %v2946
        %v2948 = vpop.f32.mrb[0].mxu0
        %2949 = vmatprep.mubr.bf16.mxu0 0
        %2950 = vmatmul.mubr.bf16.gmra.mrb[0].mxu0 %v2834
        %v2951 = vpop.f32.mrb[0].mxu0
        %v2952 = vadd.f32 0.0, %v2951
        %v2953 = vpop.f32.mrb[0].mxu0
        %v2954 = vpop.f32.mrb[0].mxu0
        %v2955 = vadd.f32 0.0, %v2954
        %v2956 = vpop.f32.mrb[0].mxu0
        %2957 = vmatprep.mubr.bf16.mxu0 0
        %2958 = vmatmul.mubr.bf16.gmra.mrb[0].mxu0 %v2836
        %v2959 = vpop.f32.mrb[0].mxu0
        %v2960 = vadd.f32 0.0, %v2959
        %v2961 = vpop.f32.mrb[0].mxu0
        %v2962 = vpop.f32.mrb[0].mxu0
        %v2963 = vadd.f32 0.0, %v2962
        %v2964 = vpop.f32.mrb[0].mxu0
        %2965 = vmatprep.mubr.bf16.mxu0 0
        %2966 = vmatmul.mubr.bf16.gmra.mrb[0].mxu0 %v2838
        %v2967 = vpop.f32.mrb[0].mxu0
        %v2968 = vadd.f32 0.0, %v2967
        %v2969 = vpop.f32.mrb[0].mxu0
        %v2970 = vpop.f32.mrb[0].mxu0
        %v2971 = vadd.f32 0.0, %v2970
        %v2972 = vpop.f32.mrb[0].mxu0
        %2973 = vmatprep.mubr.bf16.mxu0 0
        %2974 = vmatmul.mubr.bf16.gmra.mrb[0].mxu0 %v2840
        %v2975 = vpop.f32.mrb[0].mxu0
        %v2976 = vadd.f32 0.0, %v2975
        %v2977 = vpop.f32.mrb[0].mxu0
        %v2978 = vpop.f32.mrb[0].mxu0
        %v2979 = vadd.f32 0.0, %v2978
        %v2980 = vpop.f32.mrb[0].mxu0
        %2981 = vmatprep.mubr.bf16.mxu0 0
        %2982 = vmatmul.mubr.bf16.gmra.mrb[0].mxu0 %v2842
        %v2983 = vpop.f32.mrb[0].mxu0
        %v2984 = vadd.f32 0.0, %v2983
        %v2985 = vpop.f32.mrb[0].mxu0
        %v2986 = vpop.f32.mrb[0].mxu0
        %v2987 = vadd.f32 0.0, %v2986
        %v2988 = vpop.f32.mrb[0].mxu0
        %2989 = vmatprep.mubr.bf16.mxu0 0
        %2990 = vmatmul.mubr.bf16.gmra.mrb[0].mxu0 %v2844
        %v2991 = vpop.f32.mrb[0].mxu0
        %v2992 = vadd.f32 0.0, %v2991
        %v2993 = vpop.f32.mrb[0].mxu0
        %v2994 = vpop.f32.mrb[0].mxu0
        %v2995 = vadd.f32 0.0, %v2994
        %v2996 = vpop.f32.mrb[0].mxu0
        %2997 = vdwg.mxu0
        %v2999 = vshrl.u32 %v2777, 16
        %v3001 = vrot.slane %v2999, 3
        %v3002 = vshll.u32 %v2777, 16
        %v3004 = vrot.slane %v3002, 4
        %v3005 = vor.u32 %v3001, %v3004
        %v3007 = vshrl.u32 %v2778, 16
        %v3009 = vrot.slane %v3007, 3
        %v3010 = vshll.u32 %v2778, 16
        %v3012 = vrot.slane %v3010, 4
        %v3013 = vor.u32 %v3009, %v3012
        %v3014 = vsel %vm675, %v3005, %v3013
        %v3016 = vshrl.u32 %v2779, 16
        %v3018 = vrot.slane %v3016, 3
        %v3019 = vshll.u32 %v2779, 16
        %v3021 = vrot.slane %v3019, 4
        %v3022 = vor.u32 %v3018, %v3021
        %v3023 = vsel %vm675, %v3013, %v3022
        %v3025 = vshrl.u32 %v2780, 16
        %v3027 = vrot.slane %v3025, 3
        %v3028 = vshll.u32 %v2780, 16
        %v3030 = vrot.slane %v3028, 4
        %v3031 = vor.u32 %v3027, %v3030
        %v3032 = vsel %vm675, %v3022, %v3031
        %v3034 = vshrl.u32 %v2781, 16
        %v3036 = vrot.slane %v3034, 3
        %v3037 = vshll.u32 %v2781, 16
        %v3039 = vrot.slane %v3037, 4
        %v3040 = vor.u32 %v3036, %v3039
        %v3041 = vsel %vm675, %v3031, %v3040
        %v3043 = vshrl.u32 %v2782, 16
        %v3045 = vrot.slane %v3043, 3
        %v3046 = vshll.u32 %v2782, 16
        %v3048 = vrot.slane %v3046, 4
        %v3049 = vor.u32 %v3045, %v3048
        %v3050 = vsel %vm675, %v3040, %v3049
        %v3052 = vshrl.u32 %v2783, 16
        %v3054 = vrot.slane %v3052, 3
        %v3055 = vshll.u32 %v2783, 16
        %v3057 = vrot.slane %v3055, 4
        %v3058 = vor.u32 %v3054, %v3057
        %v3059 = vsel %vm675, %v3049, %v3058
        %v3061 = vshrl.u32 %v2784, 16
        %v3063 = vrot.slane %v3061, 3
        %v3064 = vshll.u32 %v2784, 16
        %v3066 = vrot.slane %v3064, 4
        %v3067 = vor.u32 %v3063, %v3066
        %v3068 = vsel %vm675, %v3058, %v3067
        %v3070 = vshrl.u32 %v2785, 16
        %v3072 = vrot.slane %v3070, 3
        %v3073 = vshll.u32 %v2785, 16
        %v3075 = vrot.slane %v3073, 4
        %v3076 = vor.u32 %v3072, %v3075
        %v3077 = vsel %vm675, %v3067, %v3076
        %v3102 = vunpack.c.l.b16 %v2786
        %v3103 = vunpack.c.l.b16 %v2787
        %v3104 = vunpack.c.l.b16 %v2788
        %v3105 = vunpack.c.l.b16 %v2789
        %v3106 = vunpack.c.l.b16 %v2790
        %v3107 = vunpack.c.l.b16 %v2791
        %v3108 = vunpack.c.l.b16 %v2792
        %v3109 = vunpack.c.l.b16 %v2793
        %v3110 = vunpack.c.l.b16 %v2794
        %v3111 = vunpack.c.l.b16 %v2795
        %v3112 = vunpack.c.l.b16 %v2796
        %v3113 = vunpack.c.l.b16 %v2797
        %v3114 = vunpack.c.l.b16 %v2798
        %v3115 = vunpack.c.l.b16 %v2799
        %v3116 = vunpack.c.l.b16 %v2800
        %v3117 = vunpack.c.l.b16 %v2801
        %v3118 = vpack.c.b16 %v3103, %v3102
        %v3119 = vpack.c.b16 %v3105, %v3104
        %v3120 = vpack.c.b16 %v3107, %v3106
        %v3121 = vpack.c.b16 %v3109, %v3108
        %v3122 = vpack.c.b16 %v3111, %v3110
        %v3123 = vpack.c.b16 %v3113, %v3112
        %v3124 = vpack.c.b16 %v3115, %v3114
        %v3125 = vpack.c.b16 %v3117, %v3116
        %3134 = vmatprep.subr.bf16.mxu0 0
        %3135 = vmatpush1.bf16.msra.mxu0 %v3118
        %3136 = vmatprep.subr.bf16.mxu0 0
        %3137 = vmatpush1.bf16.msra.mxu0 %v3119
        %3138 = vmatprep.subr.bf16.mxu0 0
        %3139 = vmatpush1.bf16.msra.mxu0 %v3120
        %3140 = vmatprep.subr.bf16.mxu0 0
        %3141 = vmatpush1.bf16.msra.mxu0 %v3121
        %3142 = vmatprep.subr.bf16.mxu0 0
        %3143 = vmatpush1.bf16.msra.mxu0 %v3122
        %3144 = vmatprep.subr.bf16.mxu0 0
        %3145 = vmatpush1.bf16.msra.mxu0 %v3123
        %3146 = vmatprep.subr.bf16.mxu0 0
        %3147 = vmatpush1.bf16.msra.mxu0 %v3124
        %3148 = vmatprep.subr.bf16.mxu0 0
        %3149 = vmatpush1.bf16.msra.mxu0 %v3125
        %3150 = vmatprep.subr.bf16.mxu0 0
        %3151 = vmatpush1.bf16.msra.mxu0 0
        %3152 = vmatprep.subr.bf16.mxu0 0
        %3153 = vmatpush1.bf16.msra.mxu0 0
        %3154 = vmatprep.subr.bf16.mxu0 0
        %3155 = vmatpush1.bf16.msra.mxu0 0
        %3156 = vmatprep.subr.bf16.mxu0 0
        %3157 = vmatpush1.bf16.msra.mxu0 0
        %3158 = vmatprep.subr.bf16.mxu0 0
        %3159 = vmatpush1.bf16.msra.mxu0 0
        %3160 = vmatprep.subr.bf16.mxu0 0
        %3161 = vmatpush1.bf16.msra.mxu0 0
        %3162 = vmatprep.subr.bf16.mxu0 0
        %3163 = vmatpush1.bf16.msra.mxu0 0
        %3164 = vmatprep.subr.bf16.mxu0 0
        %3165 = vmatpush1.bf16.msra.mxu0 0
        %3166 = vmatprep.mubr.bf16.mxu0 0
        %3167 = vmatmul.mubr.bf16.gmra.mrb[0].mxu0 %v3014
        %v3168 = vpop.f32.mrb[0].mxu0
        %v3169 = vadd.f32 %v2936, %v3168
        %v3170 = vpop.f32.mrb[0].mxu0
        %v3171 = vpop.f32.mrb[0].mxu0
        %v3172 = vadd.f32 %v2939, %v3171
        %v3173 = vpop.f32.mrb[0].mxu0
        %3174 = vmatprep.mubr.bf16.mxu0 0
        %3175 = vmatmul.mubr.bf16.gmra.mrb[0].mxu0 %v3023
        %v3176 = vpop.f32.mrb[0].mxu0
        %v3177 = vadd.f32 %v2944, %v3176
        %v3178 = vpop.f32.mrb[0].mxu0
        %v3179 = vpop.f32.mrb[0].mxu0
        %v3180 = vadd.f32 %v2947, %v3179
        %v3181 = vpop.f32.mrb[0].mxu0
        %3182 = vmatprep.mubr.bf16.mxu0 0
        %3183 = vmatmul.mubr.bf16.gmra.mrb[0].mxu0 %v3032
        %v3184 = vpop.f32.mrb[0].mxu0
        %v3185 = vadd.f32 %v2952, %v3184
        %v3186 = vpop.f32.mrb[0].mxu0
        %v3187 = vpop.f32.mrb[0].mxu0
        %v3188 = vadd.f32 %v2955, %v3187
        %v3189 = vpop.f32.mrb[0].mxu0
        %3190 = vmatprep.mubr.bf16.mxu0 0
        %3191 = vmatmul.mubr.bf16.gmra.mrb[0].mxu0 %v3041
        %v3192 = vpop.f32.mrb[0].mxu0
        %v3193 = vadd.f32 %v2960, %v3192
        %v3194 = vpop.f32.mrb[0].mxu0
        %v3195 = vpop.f32.mrb[0].mxu0
        %v3196 = vadd.f32 %v2963, %v3195
        %v3197 = vpop.f32.mrb[0].mxu0
        %3198 = vmatprep.mubr.bf16.mxu0 0
        %3199 = vmatmul.mubr.bf16.gmra.mrb[0].mxu0 %v3050
        %v3200 = vpop.f32.mrb[0].mxu0
        %v3201 = vadd.f32 %v2968, %v3200
        %v3202 = vpop.f32.mrb[0].mxu0
        %v3203 = vpop.f32.mrb[0].mxu0
        %v3204 = vadd.f32 %v2971, %v3203
        %v3205 = vpop.f32.mrb[0].mxu0
        %3206 = vmatprep.mubr.bf16.mxu0 0
        %3207 = vmatmul.mubr.bf16.gmra.mrb[0].mxu0 %v3059
        %v3208 = vpop.f32.mrb[0].mxu0
        %v3209 = vadd.f32 %v2976, %v3208
        %v3210 = vpop.f32.mrb[0].mxu0
        %v3211 = vpop.f32.mrb[0].mxu0
        %v3212 = vadd.f32 %v2979, %v3211
        %v3213 = vpop.f32.mrb[0].mxu0
        %3214 = vmatprep.mubr.bf16.mxu0 0
        %3215 = vmatmul.mubr.bf16.gmra.mrb[0].mxu0 %v3068
        %v3216 = vpop.f32.mrb[0].mxu0
        %v3217 = vadd.f32 %v2984, %v3216
        %v3218 = vpop.f32.mrb[0].mxu0
        %v3219 = vpop.f32.mrb[0].mxu0
        %v3220 = vadd.f32 %v2987, %v3219
        %v3221 = vpop.f32.mrb[0].mxu0
        %3222 = vmatprep.mubr.bf16.mxu0 0
        %3223 = vmatmul.mubr.bf16.gmra.mrb[0].mxu0 %v3077
        %v3224 = vpop.f32.mrb[0].mxu0
        %v3225 = vadd.f32 %v2992, %v3224
        %v3226 = vpop.f32.mrb[0].mxu0
        %v3227 = vpop.f32.mrb[0].mxu0
        %v3228 = vadd.f32 %v2995, %v3227
        %v3229 = vpop.f32.mrb[0].mxu0
        %3230 = vdwg.mxu0
        %v3231 = vld [vmem:[#allocation2 + $0x80] sm:$0x1f]
        %v3232 = vld [vmem:[%s910] sm:$0xf]
        %v3233 = vld [vmem:[%s910 + $0x4] sm:$0xf]
        %v3234 = vld [vmem:[%s910 + $0x8] sm:$0xf]
        %v3235 = vld [vmem:[%s910 + $0xc] sm:$0xf]
        %v3236 = vld [vmem:[%s910 + $0x10] sm:$0xf]
        %v3237 = vld [vmem:[%s910 + $0x14] sm:$0xf]
        %v3238 = vld [vmem:[%s910 + $0x18] sm:$0xf]
        %v3239 = vld [vmem:[%s910 + $0x1c] sm:$0xf]
        %v3240 = vld [vmem:[%s910 + $0x20] sm:$0xf]
        %v3241 = vld [vmem:[%s910 + $0x24] sm:$0xf]
        %v3242 = vld [vmem:[%s910 + $0x28] sm:$0xf]
        %v3243 = vld [vmem:[%s910 + $0x2c] sm:$0xf]
        %v3244 = vld [vmem:[%s910 + $0x30] sm:$0xf]
        %v3245 = vld [vmem:[%s910 + $0x34] sm:$0xf]
        %v3246 = vld [vmem:[%s910 + $0x38] sm:$0xf]
        %v3247 = vld [vmem:[%s910 + $0x3c] sm:$0xf]
        %v3249 = vshrl.u32 %v2802, 16
        %v3251 = vrot.slane %v3249, 4
        %v3252 = vshll.u32 %v2802, 16
        %v3254 = vrot.slane %v3252, 5
        %v3255 = vor.u32 %v3251, %v3254
        %v3256 = vrot.slane %v3007, 4
        %v3257 = vrot.slane %v3010, 5
        %v3258 = vor.u32 %v3256, %v3257
        %v3259 = vsel %vm231, %v3255, %v3258
        %v3260 = vrot.slane %v3016, 4
        %v3261 = vrot.slane %v3019, 5
        %v3262 = vor.u32 %v3260, %v3261
        %v3263 = vsel %vm231, %v3258, %v3262
        %v3264 = vrot.slane %v3025, 4
        %v3265 = vrot.slane %v3028, 5
        %v3266 = vor.u32 %v3264, %v3265
        %v3267 = vsel %vm231, %v3262, %v3266
        %v3268 = vrot.slane %v3034, 4
        %v3269 = vrot.slane %v3037, 5
        %v3270 = vor.u32 %v3268, %v3269
        %v3271 = vsel %vm231, %v3266, %v3270
        %v3272 = vrot.slane %v3043, 4
        %v3273 = vrot.slane %v3046, 5
        %v3274 = vor.u32 %v3272, %v3273
        %v3275 = vsel %vm231, %v3270, %v3274
        %v3276 = vrot.slane %v3052, 4
        %v3277 = vrot.slane %v3055, 5
        %v3278 = vor.u32 %v3276, %v3277
        %v3279 = vsel %vm231, %v3274, %v3278
        %v3280 = vrot.slane %v3061, 4
        %v3281 = vrot.slane %v3064, 5
        %v3282 = vor.u32 %v3280, %v3281
        %v3283 = vsel %vm231, %v3278, %v3282
        %v3285 = vshrl.u32 %v3231, 16
        %v3287 = vrot.slane %v3285, 4
        %v3288 = vshll.u32 %v3231, 16
        %v3290 = vrot.slane %v3288, 5
        %v3291 = vor.u32 %v3287, %v3290
        %v3292 = vsel %vm231, %v3282, %v3291
        %v3317 = vunpack.c.l.b16 %v3232
        %v3318 = vunpack.c.l.b16 %v3233
        %v3319 = vunpack.c.l.b16 %v3234
        %v3320 = vunpack.c.l.b16 %v3235
        %v3321 = vunpack.c.l.b16 %v3236
        %v3322 = vunpack.c.l.b16 %v3237
        %v3323 = vunpack.c.l.b16 %v3238
        %v3324 = vunpack.c.l.b16 %v3239
        %v3325 = vunpack.c.l.b16 %v3240
        %v3326 = vunpack.c.l.b16 %v3241
        %v3327 = vunpack.c.l.b16 %v3242
        %v3328 = vunpack.c.l.b16 %v3243
        %v3329 = vunpack.c.l.b16 %v3244
        %v3330 = vunpack.c.l.b16 %v3245
        %v3331 = vunpack.c.l.b16 %v3246
        %v3332 = vunpack.c.l.b16 %v3247
        %v3333 = vpack.c.b16 %v3318, %v3317
        %v3334 = vpack.c.b16 %v3320, %v3319
        %v3335 = vpack.c.b16 %v3322, %v3321
        %v3336 = vpack.c.b16 %v3324, %v3323
        %v3337 = vpack.c.b16 %v3326, %v3325
        %v3338 = vpack.c.b16 %v3328, %v3327
        %v3339 = vpack.c.b16 %v3330, %v3329
        %v3340 = vpack.c.b16 %v3332, %v3331
        %3349 = vmatprep.subr.bf16.mxu0 0
        %3350 = vmatpush1.bf16.msra.mxu0 %v3333
        %3351 = vmatprep.subr.bf16.mxu0 0
        %3352 = vmatpush1.bf16.msra.mxu0 %v3334
        %3353 = vmatprep.subr.bf16.mxu0 0
        %3354 = vmatpush1.bf16.msra.mxu0 %v3335
        %3355 = vmatprep.subr.bf16.mxu0 0
        %3356 = vmatpush1.bf16.msra.mxu0 %v3336
        %3357 = vmatprep.subr.bf16.mxu0 0
        %3358 = vmatpush1.bf16.msra.mxu0 %v3337
        %3359 = vmatprep.subr.bf16.mxu0 0
        %3360 = vmatpush1.bf16.msra.mxu0 %v3338
        %3361 = vmatprep.subr.bf16.mxu0 0
        %3362 = vmatpush1.bf16.msra.mxu0 %v3339
        %3363 = vmatprep.subr.bf16.mxu0 0
        %3364 = vmatpush1.bf16.msra.mxu0 %v3340
        %3365 = vmatprep.subr.bf16.mxu0 0
        %3366 = vmatpush1.bf16.msra.mxu0 0
        %3367 = vmatprep.subr.bf16.mxu0 0
        %3368 = vmatpush1.bf16.msra.mxu0 0
        %3369 = vmatprep.subr.bf16.mxu0 0
        %3370 = vmatpush1.bf16.msra.mxu0 0
        %3371 = vmatprep.subr.bf16.mxu0 0
        %3372 = vmatpush1.bf16.msra.mxu0 0
        %3373 = vmatprep.subr.bf16.mxu0 0
        %3374 = vmatpush1.bf16.msra.mxu0 0
        %3375 = vmatprep.subr.bf16.mxu0 0
        %3376 = vmatpush1.bf16.msra.mxu0 0
        %3377 = vmatprep.subr.bf16.mxu0 0
        %3378 = vmatpush1.bf16.msra.mxu0 0
        %3379 = vmatprep.subr.bf16.mxu0 0
        %3380 = vmatpush1.bf16.msra.mxu0 0
        %3381 = vmatprep.mubr.bf16.mxu0 0
        %3382 = vmatmul.mubr.bf16.gmra.mrb[0].mxu0 %v3259
        %v3383 = vpop.f32.mrb[0].mxu0
        %v3384 = vadd.f32 0.0, %v3383
        %v3385 = vpop.f32.mrb[0].mxu0
        %v3386 = vpop.f32.mrb[0].mxu0
        %v3387 = vadd.f32 0.0, %v3386
        %v3388 = vpop.f32.mrb[0].mxu0
        %3389 = vmatprep.mubr.bf16.mxu0 0
        %3390 = vmatmul.mubr.bf16.gmra.mrb[0].mxu0 %v3263
        %v3391 = vpop.f32.mrb[0].mxu0
        %v3392 = vadd.f32 0.0, %v3391
        %v3393 = vpop.f32.mrb[0].mxu0
        %v3394 = vpop.f32.mrb[0].mxu0
        %v3395 = vadd.f32 0.0, %v3394
        %v3396 = vpop.f32.mrb[0].mxu0
        %3397 = vmatprep.mubr.bf16.mxu0 0
        %3398 = vmatmul.mubr.bf16.gmra.mrb[0].mxu0 %v3267
        %v3399 = vpop.f32.mrb[0].mxu0
        %v3400 = vadd.f32 0.0, %v3399
        %v3401 = vpop.f32.mrb[0].mxu0
        %v3402 = vpop.f32.mrb[0].mxu0
        %v3403 = vadd.f32 0.0, %v3402
        %v3404 = vpop.f32.mrb[0].mxu0
        %3405 = vmatprep.mubr.bf16.mxu0 0
        %3406 = vmatmul.mubr.bf16.gmra.mrb[0].mxu0 %v3271
        %v3407 = vpop.f32.mrb[0].mxu0
        %v3408 = vadd.f32 0.0, %v3407
        %v3409 = vpop.f32.mrb[0].mxu0
        %v3410 = vpop.f32.mrb[0].mxu0
        %v3411 = vadd.f32 0.0, %v3410
        %v3412 = vpop.f32.mrb[0].mxu0
        %3413 = vmatprep.mubr.bf16.mxu0 0
        %3414 = vmatmul.mubr.bf16.gmra.mrb[0].mxu0 %v3275
        %v3415 = vpop.f32.mrb[0].mxu0
        %v3416 = vadd.f32 0.0, %v3415
        %v3417 = vpop.f32.mrb[0].mxu0
        %v3418 = vpop.f32.mrb[0].mxu0
        %v3419 = vadd.f32 0.0, %v3418
        %v3420 = vpop.f32.mrb[0].mxu0
        %3421 = vmatprep.mubr.bf16.mxu0 0
        %3422 = vmatmul.mubr.bf16.gmra.mrb[0].mxu0 %v3279
        %v3423 = vpop.f32.mrb[0].mxu0
        %v3424 = vadd.f32 0.0, %v3423
        %v3425 = vpop.f32.mrb[0].mxu0
        %v3426 = vpop.f32.mrb[0].mxu0
        %v3427 = vadd.f32 0.0, %v3426
        %v3428 = vpop.f32.mrb[0].mxu0
        %3429 = vmatprep.mubr.bf16.mxu0 0
        %3430 = vmatmul.mubr.bf16.gmra.mrb[0].mxu0 %v3283
        %v3431 = vpop.f32.mrb[0].mxu0
        %v3432 = vadd.f32 0.0, %v3431
        %v3433 = vpop.f32.mrb[0].mxu0
        %v3434 = vpop.f32.mrb[0].mxu0
        %v3435 = vadd.f32 0.0, %v3434
        %v3436 = vpop.f32.mrb[0].mxu0
        %3437 = vmatprep.mubr.bf16.mxu0 0
        %3438 = vmatmul.mubr.bf16.gmra.mrb[0].mxu0 %v3292
        %v3439 = vpop.f32.mrb[0].mxu0
        %v3440 = vadd.f32 0.0, %v3439
        %v3441 = vpop.f32.mrb[0].mxu0
        %v3442 = vpop.f32.mrb[0].mxu0
        %v3443 = vadd.f32 0.0, %v3442
        %v3444 = vpop.f32.mrb[0].mxu0
        %3445 = vdwg.mxu0
        %v3446 = vadd.f32 %v3169, %v3384
        %v3447 = vadd.f32 %v3172, %v3387
        %v3448 = vadd.f32 %v3177, %v3392
        %v3449 = vadd.f32 %v3180, %v3395
        %v3450 = vadd.f32 %v3185, %v3400
        %v3451 = vadd.f32 %v3188, %v3403
        %v3452 = vadd.f32 %v3193, %v3408
        %v3453 = vadd.f32 %v3196, %v3411
        %v3454 = vadd.f32 %v3201, %v3416
        %v3455 = vadd.f32 %v3204, %v3419
        %v3456 = vadd.f32 %v3209, %v3424
        %v3457 = vadd.f32 %v3212, %v3427
        %v3458 = vadd.f32 %v3217, %v3432
        %v3459 = vadd.f32 %v3220, %v3435
        %v3460 = vadd.f32 %v3225, %v3440
        %v3461 = vadd.f32 %v3228, %v3443
        %v3462 = vld [vmem:[#allocation2 + $0x50] sm:$0xf8]
        %v3463 = vld [vmem:[#allocation2 + $0x58] sm:$0xff]
        %v3464 = vld [vmem:[#allocation2 + $0x60] sm:$0xff]
        %v3465 = vld [vmem:[#allocation2 + $0x68] sm:$0xff]
        %v3466 = vld [vmem:[#allocation2 + $0x70] sm:$0xff]
        %v3467 = vld [vmem:[#allocation2 + $0x78] sm:$0xff]
        %v3468 = vld [vmem:[#allocation2 + $0x80] sm:$0xff]
        %v3469 = vld [vmem:[#allocation2 + $0x88] sm:$0xff]
        %v3470 = vld [vmem:[#allocation2 + $0x90] sm:$0xf]
        %v3471 = vld [vmem:[%s1150] sm:$0xf]
        %v3472 = vld [vmem:[%s1150 + $0x4] sm:$0xf]
        %v3473 = vld [vmem:[%s1150 + $0x8] sm:$0xf]
        %v3474 = vld [vmem:[%s1150 + $0xc] sm:$0xf]
        %v3475 = vld [vmem:[%s1150 + $0x10] sm:$0xf]
        %v3476 = vld [vmem:[%s1150 + $0x14] sm:$0xf]
        %v3477 = vld [vmem:[%s1150 + $0x18] sm:$0xf]
        %v3478 = vld [vmem:[%s1150 + $0x1c] sm:$0xf]
        %v3479 = vld [vmem:[%s1150 + $0x20] sm:$0xf]
        %v3480 = vld [vmem:[%s1150 + $0x24] sm:$0xf]
        %v3481 = vld [vmem:[%s1150 + $0x28] sm:$0xf]
        %v3482 = vld [vmem:[%s1150 + $0x2c] sm:$0xf]
        %v3483 = vld [vmem:[%s1150 + $0x30] sm:$0xf]
        %v3484 = vld [vmem:[%s1150 + $0x34] sm:$0xf]
        %v3485 = vld [vmem:[%s1150 + $0x38] sm:$0xf]
        %v3486 = vld [vmem:[%s1150 + $0x3c] sm:$0xf]
        %v3488 = vshrl.u32 %v3462, 16
        %v3490 = vrot.slane %v3488, 3
        %v3491 = vshll.u32 %v3462, 16
        %v3493 = vrot.slane %v3491, 4
        %v3494 = vor.u32 %v3490, %v3493
        %v3496 = vshrl.u32 %v3463, 16
        %v3498 = vrot.slane %v3496, 3
        %v3499 = vshll.u32 %v3463, 16
        %v3501 = vrot.slane %v3499, 4
        %v3502 = vor.u32 %v3498, %v3501
        %v3503 = vsel %vm675, %v3494, %v3502
        %v3505 = vshrl.u32 %v3464, 16
        %v3507 = vrot.slane %v3505, 3
        %v3508 = vshll.u32 %v3464, 16
        %v3510 = vrot.slane %v3508, 4
        %v3511 = vor.u32 %v3507, %v3510
        %v3512 = vsel %vm675, %v3502, %v3511
        %v3514 = vshrl.u32 %v3465, 16
        %v3516 = vrot.slane %v3514, 3
        %v3517 = vshll.u32 %v3465, 16
        %v3519 = vrot.slane %v3517, 4
        %v3520 = vor.u32 %v3516, %v3519
        %v3521 = vsel %vm675, %v3511, %v3520
        %v3523 = vshrl.u32 %v3466, 16
        %v3525 = vrot.slane %v3523, 3
        %v3526 = vshll.u32 %v3466, 16
        %v3528 = vrot.slane %v3526, 4
        %v3529 = vor.u32 %v3525, %v3528
        %v3530 = vsel %vm675, %v3520, %v3529
        %v3532 = vshrl.u32 %v3467, 16
        %v3534 = vrot.slane %v3532, 3
        %v3535 = vshll.u32 %v3467, 16
        %v3537 = vrot.slane %v3535, 4
        %v3538 = vor.u32 %v3534, %v3537
        %v3539 = vsel %vm675, %v3529, %v3538
        %v3541 = vshrl.u32 %v3468, 16
        %v3543 = vrot.slane %v3541, 3
        %v3544 = vshll.u32 %v3468, 16
        %v3546 = vrot.slane %v3544, 4
        %v3547 = vor.u32 %v3543, %v3546
        %v3548 = vsel %vm675, %v3538, %v3547
        %v3550 = vshrl.u32 %v3469, 16
        %v3552 = vrot.slane %v3550, 3
        %v3553 = vshll.u32 %v3469, 16
        %v3555 = vrot.slane %v3553, 4
        %v3556 = vor.u32 %v3552, %v3555
        %v3557 = vsel %vm675, %v3547, %v3556
        %v3559 = vshrl.u32 %v3470, 16
        %v3561 = vrot.slane %v3559, 3
        %v3562 = vshll.u32 %v3470, 16
        %v3564 = vrot.slane %v3562, 4
        %v3565 = vor.u32 %v3561, %v3564
        %v3566 = vsel %vm675, %v3556, %v3565
        %v3591 = vunpack.c.l.b16 %v3471
        %v3592 = vunpack.c.l.b16 %v3472
        %v3593 = vunpack.c.l.b16 %v3473
        %v3594 = vunpack.c.l.b16 %v3474
        %v3595 = vunpack.c.l.b16 %v3475
        %v3596 = vunpack.c.l.b16 %v3476
        %v3597 = vunpack.c.l.b16 %v3477
        %v3598 = vunpack.c.l.b16 %v3478
        %v3599 = vunpack.c.l.b16 %v3479
        %v3600 = vunpack.c.l.b16 %v3480
        %v3601 = vunpack.c.l.b16 %v3481
        %v3602 = vunpack.c.l.b16 %v3482
        %v3603 = vunpack.c.l.b16 %v3483
        %v3604 = vunpack.c.l.b16 %v3484
        %v3605 = vunpack.c.l.b16 %v3485
        %v3606 = vunpack.c.l.b16 %v3486
        %v3607 = vpack.c.b16 %v3592, %v3591
        %v3608 = vpack.c.b16 %v3594, %v3593
        %v3609 = vpack.c.b16 %v3596, %v3595
        %v3610 = vpack.c.b16 %v3598, %v3597
        %v3611 = vpack.c.b16 %v3600, %v3599
        %v3612 = vpack.c.b16 %v3602, %v3601
        %v3613 = vpack.c.b16 %v3604, %v3603
        %v3614 = vpack.c.b16 %v3606, %v3605
        %3623 = vmatprep.subr.bf16.mxu0 0
        %3624 = vmatpush1.bf16.msra.mxu0 %v3607
        %3625 = vmatprep.subr.bf16.mxu0 0
        %3626 = vmatpush1.bf16.msra.mxu0 %v3608
        %3627 = vmatprep.subr.bf16.mxu0 0
        %3628 = vmatpush1.bf16.msra.mxu0 %v3609
        %3629 = vmatprep.subr.bf16.mxu0 0
        %3630 = vmatpush1.bf16.msra.mxu0 %v3610
        %3631 = vmatprep.subr.bf16.mxu0 0
        %3632 = vmatpush1.bf16.msra.mxu0 %v3611
        %3633 = vmatprep.subr.bf16.mxu0 0
        %3634 = vmatpush1.bf16.msra.mxu0 %v3612
        %3635 = vmatprep.subr.bf16.mxu0 0
        %3636 = vmatpush1.bf16.msra.mxu0 %v3613
        %3637 = vmatprep.subr.bf16.mxu0 0
        %3638 = vmatpush1.bf16.msra.mxu0 %v3614
        %3639 = vmatprep.subr.bf16.mxu0 0
        %3640 = vmatpush1.bf16.msra.mxu0 0
        %3641 = vmatprep.subr.bf16.mxu0 0
        %3642 = vmatpush1.bf16.msra.mxu0 0
        %3643 = vmatprep.subr.bf16.mxu0 0
        %3644 = vmatpush1.bf16.msra.mxu0 0
        %3645 = vmatprep.subr.bf16.mxu0 0
        %3646 = vmatpush1.bf16.msra.mxu0 0
        %3647 = vmatprep.subr.bf16.mxu0 0
        %3648 = vmatpush1.bf16.msra.mxu0 0
        %3649 = vmatprep.subr.bf16.mxu0 0
        %3650 = vmatpush1.bf16.msra.mxu0 0
        %3651 = vmatprep.subr.bf16.mxu0 0
        %3652 = vmatpush1.bf16.msra.mxu0 0
        %3653 = vmatprep.subr.bf16.mxu0 0
        %3654 = vmatpush1.bf16.msra.mxu0 0
        %3655 = vmatprep.mubr.bf16.mxu0 0
        %3656 = vmatmul.mubr.bf16.gmra.mrb[0].mxu0 %v3503
        %v3657 = vpop.f32.mrb[0].mxu0
        %v3658 = vadd.f32 0.0, %v3657
        %v3659 = vpop.f32.mrb[0].mxu0
        %v3660 = vpop.f32.mrb[0].mxu0
        %v3661 = vadd.f32 0.0, %v3660
        %v3662 = vpop.f32.mrb[0].mxu0
        %3663 = vmatprep.mubr.bf16.mxu0 0
        %3664 = vmatmul.mubr.bf16.gmra.mrb[0].mxu0 %v3512
        %v3665 = vpop.f32.mrb[0].mxu0
        %v3666 = vadd.f32 0.0, %v3665
        %v3667 = vpop.f32.mrb[0].mxu0
        %v3668 = vpop.f32.mrb[0].mxu0
        %v3669 = vadd.f32 0.0, %v3668
        %v3670 = vpop.f32.mrb[0].mxu0
        %3671 = vmatprep.mubr.bf16.mxu0 0
        %3672 = vmatmul.mubr.bf16.gmra.mrb[0].mxu0 %v3521
        %v3673 = vpop.f32.mrb[0].mxu0
        %v3674 = vadd.f32 0.0, %v3673
        %v3675 = vpop.f32.mrb[0].mxu0
        %v3676 = vpop.f32.mrb[0].mxu0
        %v3677 = vadd.f32 0.0, %v3676
        %v3678 = vpop.f32.mrb[0].mxu0
        %3679 = vmatprep.mubr.bf16.mxu0 0
        %3680 = vmatmul.mubr.bf16.gmra.mrb[0].mxu0 %v3530
        %v3681 = vpop.f32.mrb[0].mxu0
        %v3682 = vadd.f32 0.0, %v3681
        %v3683 = vpop.f32.mrb[0].mxu0
        %v3684 = vpop.f32.mrb[0].mxu0
        %v3685 = vadd.f32 0.0, %v3684
        %v3686 = vpop.f32.mrb[0].mxu0
        %3687 = vmatprep.mubr.bf16.mxu0 0
        %3688 = vmatmul.mubr.bf16.gmra.mrb[0].mxu0 %v3539
        %v3689 = vpop.f32.mrb[0].mxu0
        %v3690 = vadd.f32 0.0, %v3689
        %v3691 = vpop.f32.mrb[0].mxu0
        %v3692 = vpop.f32.mrb[0].mxu0
        %v3693 = vadd.f32 0.0, %v3692
        %v3694 = vpop.f32.mrb[0].mxu0
        %3695 = vmatprep.mubr.bf16.mxu0 0
        %3696 = vmatmul.mubr.bf16.gmra.mrb[0].mxu0 %v3548
        %v3697 = vpop.f32.mrb[0].mxu0
        %v3698 = vadd.f32 0.0, %v3697
        %v3699 = vpop.f32.mrb[0].mxu0
        %v3700 = vpop.f32.mrb[0].mxu0
        %v3701 = vadd.f32 0.0, %v3700
        %v3702 = vpop.f32.mrb[0].mxu0
        %3703 = vmatprep.mubr.bf16.mxu0 0
        %3704 = vmatmul.mubr.bf16.gmra.mrb[0].mxu0 %v3557
        %v3705 = vpop.f32.mrb[0].mxu0
        %v3706 = vadd.f32 0.0, %v3705
        %v3707 = vpop.f32.mrb[0].mxu0
        %v3708 = vpop.f32.mrb[0].mxu0
        %v3709 = vadd.f32 0.0, %v3708
        %v3710 = vpop.f32.mrb[0].mxu0
        %3711 = vmatprep.mubr.bf16.mxu0 0
        %3712 = vmatmul.mubr.bf16.gmra.mrb[0].mxu0 %v3566
        %v3713 = vpop.f32.mrb[0].mxu0
        %v3714 = vadd.f32 0.0, %v3713
        %v3715 = vpop.f32.mrb[0].mxu0
        %v3716 = vpop.f32.mrb[0].mxu0
        %v3717 = vadd.f32 0.0, %v3716
        %v3718 = vpop.f32.mrb[0].mxu0
        %3719 = vdwg.mxu0
        %v3720 = vadd.f32 %v3446, %v3658
        %v3721 = vadd.f32 %v3447, %v3661
        %v3722 = vadd.f32 %v3448, %v3666
        %v3723 = vadd.f32 %v3449, %v3669
        %v3724 = vadd.f32 %v3450, %v3674
        %v3725 = vadd.f32 %v3451, %v3677
        %v3726 = vadd.f32 %v3452, %v3682
        %v3727 = vadd.f32 %v3453, %v3685
        %v3728 = vadd.f32 %v3454, %v3690
        %v3729 = vadd.f32 %v3455, %v3693
        %v3730 = vadd.f32 %v3456, %v3698
        %v3731 = vadd.f32 %v3457, %v3701
        %v3732 = vadd.f32 %v3458, %v3706
        %v3733 = vadd.f32 %v3459, %v3709
        %v3734 = vadd.f32 %v3460, %v3714
        %v3735 = vadd.f32 %v3461, %v3717
        %v3736 = vld [vmem:[#allocation2 + $0x50] sm:$0xf0]
        %v3737 = vld [vmem:[%s1417] sm:$0xf]
        %v3738 = vld [vmem:[%s1417 + $0x4] sm:$0xf]
        %v3739 = vld [vmem:[%s1417 + $0x8] sm:$0xf]
        %v3740 = vld [vmem:[%s1417 + $0xc] sm:$0xf]
        %v3741 = vld [vmem:[%s1417 + $0x10] sm:$0xf]
        %v3742 = vld [vmem:[%s1417 + $0x14] sm:$0xf]
        %v3743 = vld [vmem:[%s1417 + $0x18] sm:$0xf]
        %v3744 = vld [vmem:[%s1417 + $0x1c] sm:$0xf]
        %v3745 = vld [vmem:[%s1417 + $0x20] sm:$0xf]
        %v3746 = vld [vmem:[%s1417 + $0x24] sm:$0xf]
        %v3747 = vld [vmem:[%s1417 + $0x28] sm:$0xf]
        %v3748 = vld [vmem:[%s1417 + $0x2c] sm:$0xf]
        %v3749 = vld [vmem:[%s1417 + $0x30] sm:$0xf]
        %v3750 = vld [vmem:[%s1417 + $0x34] sm:$0xf]
        %v3751 = vld [vmem:[%s1417 + $0x38] sm:$0xf]
        %v3752 = vld [vmem:[%s1417 + $0x3c] sm:$0xf]
        %v3762 = vrot.slane %v3736, 4
        %v3763 = vrot.slane %v3463, 4
        %v3764 = vsel %vm504, %v3762, %v3763
        %v3765 = vrot.slane %v3464, 4
        %v3766 = vsel %vm504, %v3763, %v3765
        %v3767 = vrot.slane %v3465, 4
        %v3768 = vsel %vm504, %v3765, %v3767
        %v3769 = vrot.slane %v3466, 4
        %v3770 = vsel %vm504, %v3767, %v3769
        %v3771 = vrot.slane %v3467, 4
        %v3772 = vsel %vm504, %v3769, %v3771
        %v3773 = vrot.slane %v3468, 4
        %v3774 = vsel %vm504, %v3771, %v3773
        %v3775 = vrot.slane %v3469, 4
        %v3776 = vsel %vm504, %v3773, %v3775
        %v3777 = vrot.slane %v3470, 4
        %v3778 = vsel %vm504, %v3775, %v3777
        %v3803 = vunpack.c.l.b16 %v3737
        %v3804 = vunpack.c.l.b16 %v3738
        %v3805 = vunpack.c.l.b16 %v3739
        %v3806 = vunpack.c.l.b16 %v3740
        %v3807 = vunpack.c.l.b16 %v3741
        %v3808 = vunpack.c.l.b16 %v3742
        %v3809 = vunpack.c.l.b16 %v3743
        %v3810 = vunpack.c.l.b16 %v3744
        %v3811 = vunpack.c.l.b16 %v3745
        %v3812 = vunpack.c.l.b16 %v3746
        %v3813 = vunpack.c.l.b16 %v3747
        %v3814 = vunpack.c.l.b16 %v3748
        %v3815 = vunpack.c.l.b16 %v3749
        %v3816 = vunpack.c.l.b16 %v3750
        %v3817 = vunpack.c.l.b16 %v3751
        %v3818 = vunpack.c.l.b16 %v3752
        %v3819 = vpack.c.b16 %v3804, %v3803
        %v3820 = vpack.c.b16 %v3806, %v3805
        %v3821 = vpack.c.b16 %v3808, %v3807
        %v3822 = vpack.c.b16 %v3810, %v3809
        %v3823 = vpack.c.b16 %v3812, %v3811
        %v3824 = vpack.c.b16 %v3814, %v3813
        %v3825 = vpack.c.b16 %v3816, %v3815
        %v3826 = vpack.c.b16 %v3818, %v3817
        %3835 = vmatprep.subr.bf16.mxu0 0
        %3836 = vmatpush1.bf16.msra.mxu0 %v3819
        %3837 = vmatprep.subr.bf16.mxu0 0
        %3838 = vmatpush1.bf16.msra.mxu0 %v3820
        %3839 = vmatprep.subr.bf16.mxu0 0
        %3840 = vmatpush1.bf16.msra.mxu0 %v3821
        %3841 = vmatprep.subr.bf16.mxu0 0
        %3842 = vmatpush1.bf16.msra.mxu0 %v3822
        %3843 = vmatprep.subr.bf16.mxu0 0
        %3844 = vmatpush1.bf16.msra.mxu0 %v3823
        %3845 = vmatprep.subr.bf16.mxu0 0
        %3846 = vmatpush1.bf16.msra.mxu0 %v3824
        %3847 = vmatprep.subr.bf16.mxu0 0
        %3848 = vmatpush1.bf16.msra.mxu0 %v3825
        %3849 = vmatprep.subr.bf16.mxu0 0
        %3850 = vmatpush1.bf16.msra.mxu0 %v3826
        %3851 = vmatprep.subr.bf16.mxu0 0
        %3852 = vmatpush1.bf16.msra.mxu0 0
        %3853 = vmatprep.subr.bf16.mxu0 0
        %3854 = vmatpush1.bf16.msra.mxu0 0
        %3855 = vmatprep.subr.bf16.mxu0 0
        %3856 = vmatpush1.bf16.msra.mxu0 0
        %3857 = vmatprep.subr.bf16.mxu0 0
        %3858 = vmatpush1.bf16.msra.mxu0 0
        %3859 = vmatprep.subr.bf16.mxu0 0
        %3860 = vmatpush1.bf16.msra.mxu0 0
        %3861 = vmatprep.subr.bf16.mxu0 0
        %3862 = vmatpush1.bf16.msra.mxu0 0
        %3863 = vmatprep.subr.bf16.mxu0 0
        %3864 = vmatpush1.bf16.msra.mxu0 0
        %3865 = vmatprep.subr.bf16.mxu0 0
        %3866 = vmatpush1.bf16.msra.mxu0 0
        %3867 = vmatprep.mubr.bf16.mxu0 0
        %3868 = vmatmul.mubr.bf16.gmra.mrb[0].mxu0 %v3764
        %v3869 = vpop.f32.mrb[0].mxu0
        %v3870 = vadd.f32 0.0, %v3869
        %v3871 = vpop.f32.mrb[0].mxu0
        %v3872 = vpop.f32.mrb[0].mxu0
        %v3873 = vadd.f32 0.0, %v3872
        %v3874 = vpop.f32.mrb[0].mxu0
        %3875 = vmatprep.mubr.bf16.mxu0 0
        %3876 = vmatmul.mubr.bf16.gmra.mrb[0].mxu0 %v3766
        %v3877 = vpop.f32.mrb[0].mxu0
        %v3878 = vadd.f32 0.0, %v3877
        %v3879 = vpop.f32.mrb[0].mxu0
        %v3880 = vpop.f32.mrb[0].mxu0
        %v3881 = vadd.f32 0.0, %v3880
        %v3882 = vpop.f32.mrb[0].mxu0
        %3883 = vmatprep.mubr.bf16.mxu0 0
        %3884 = vmatmul.mubr.bf16.gmra.mrb[0].mxu0 %v3768
        %v3885 = vpop.f32.mrb[0].mxu0
        %v3886 = vadd.f32 0.0, %v3885
        %v3887 = vpop.f32.mrb[0].mxu0
        %v3888 = vpop.f32.mrb[0].mxu0
        %v3889 = vadd.f32 0.0, %v3888
        %v3890 = vpop.f32.mrb[0].mxu0
        %3891 = vmatprep.mubr.bf16.mxu0 0
        %3892 = vmatmul.mubr.bf16.gmra.mrb[0].mxu0 %v3770
        %v3893 = vpop.f32.mrb[0].mxu0
        %v3894 = vadd.f32 0.0, %v3893
        %v3895 = vpop.f32.mrb[0].mxu0
        %v3896 = vpop.f32.mrb[0].mxu0
        %v3897 = vadd.f32 0.0, %v3896
        %v3898 = vpop.f32.mrb[0].mxu0
        %3899 = vmatprep.mubr.bf16.mxu0 0
        %3900 = vmatmul.mubr.bf16.gmra.mrb[0].mxu0 %v3772
        %v3901 = vpop.f32.mrb[0].mxu0
        %v3902 = vadd.f32 0.0, %v3901
        %v3903 = vpop.f32.mrb[0].mxu0
        %v3904 = vpop.f32.mrb[0].mxu0
        %v3905 = vadd.f32 0.0, %v3904
        %v3906 = vpop.f32.mrb[0].mxu0
        %3907 = vmatprep.mubr.bf16.mxu0 0
        %3908 = vmatmul.mubr.bf16.gmra.mrb[0].mxu0 %v3774
        %v3909 = vpop.f32.mrb[0].mxu0
        %v3910 = vadd.f32 0.0, %v3909
        %v3911 = vpop.f32.mrb[0].mxu0
        %v3912 = vpop.f32.mrb[0].mxu0
        %v3913 = vadd.f32 0.0, %v3912
        %v3914 = vpop.f32.mrb[0].mxu0
        %3915 = vmatprep.mubr.bf16.mxu0 0
        %3916 = vmatmul.mubr.bf16.gmra.mrb[0].mxu0 %v3776
        %v3917 = vpop.f32.mrb[0].mxu0
        %v3918 = vadd.f32 0.0, %v3917
        %v3919 = vpop.f32.mrb[0].mxu0
        %v3920 = vpop.f32.mrb[0].mxu0
        %v3921 = vadd.f32 0.0, %v3920
        %v3922 = vpop.f32.mrb[0].mxu0
        %3923 = vmatprep.mubr.bf16.mxu0 0
        %3924 = vmatmul.mubr.bf16.gmra.mrb[0].mxu0 %v3778
        %v3925 = vpop.f32.mrb[0].mxu0
        %v3926 = vadd.f32 0.0, %v3925
        %v3927 = vpop.f32.mrb[0].mxu0
        %v3928 = vpop.f32.mrb[0].mxu0
        %v3929 = vadd.f32 0.0, %v3928
        %v3930 = vpop.f32.mrb[0].mxu0
        %3931 = vdwg.mxu0
        %v3932 = vadd.f32 %v3720, %v3870
        %v3933 = vadd.f32 %v3721, %v3873
        %v3934 = vadd.f32 %v3722, %v3878
        %v3935 = vadd.f32 %v3723, %v3881
        %v3936 = vadd.f32 %v3724, %v3886
        %v3937 = vadd.f32 %v3725, %v3889
        %v3938 = vadd.f32 %v3726, %v3894
        %v3939 = vadd.f32 %v3727, %v3897
        %v3940 = vadd.f32 %v3728, %v3902
        %v3941 = vadd.f32 %v3729, %v3905
        %v3942 = vadd.f32 %v3730, %v3910
        %v3943 = vadd.f32 %v3731, %v3913
        %v3944 = vadd.f32 %v3732, %v3918
        %v3945 = vadd.f32 %v3733, %v3921
        %v3946 = vadd.f32 %v3734, %v3926
        %v3947 = vadd.f32 %v3735, %v3929
        %v3948 = vld [vmem:[#allocation2 + $0x90] sm:$0x1f]
        %v3949 = vld [vmem:[%s1630] sm:$0xf]
        %v3950 = vld [vmem:[%s1630 + $0x4] sm:$0xf]
        %v3951 = vld [vmem:[%s1630 + $0x8] sm:$0xf]
        %v3952 = vld [vmem:[%s1630 + $0xc] sm:$0xf]
        %v3953 = vld [vmem:[%s1630 + $0x10] sm:$0xf]
        %v3954 = vld [vmem:[%s1630 + $0x14] sm:$0xf]
        %v3955 = vld [vmem:[%s1630 + $0x18] sm:$0xf]
        %v3956 = vld [vmem:[%s1630 + $0x1c] sm:$0xf]
        %v3957 = vld [vmem:[%s1630 + $0x20] sm:$0xf]
        %v3958 = vld [vmem:[%s1630 + $0x24] sm:$0xf]
        %v3959 = vld [vmem:[%s1630 + $0x28] sm:$0xf]
        %v3960 = vld [vmem:[%s1630 + $0x2c] sm:$0xf]
        %v3961 = vld [vmem:[%s1630 + $0x30] sm:$0xf]
        %v3962 = vld [vmem:[%s1630 + $0x34] sm:$0xf]
        %v3963 = vld [vmem:[%s1630 + $0x38] sm:$0xf]
        %v3964 = vld [vmem:[%s1630 + $0x3c] sm:$0xf]
        %v3966 = vshrl.u32 %v3736, 16
        %v3968 = vrot.slane %v3966, 4
        %v3969 = vshll.u32 %v3736, 16
        %v3971 = vrot.slane %v3969, 5
        %v3972 = vor.u32 %v3968, %v3971
        %v3973 = vrot.slane %v3496, 4
        %v3974 = vrot.slane %v3499, 5
        %v3975 = vor.u32 %v3973, %v3974
        %v3976 = vsel %vm231, %v3972, %v3975
        %v3977 = vrot.slane %v3505, 4
        %v3978 = vrot.slane %v3508, 5
        %v3979 = vor.u32 %v3977, %v3978
        %v3980 = vsel %vm231, %v3975, %v3979
        %v3981 = vrot.slane %v3514, 4
        %v3982 = vrot.slane %v3517, 5
        %v3983 = vor.u32 %v3981, %v3982
        %v3984 = vsel %vm231, %v3979, %v3983
        %v3985 = vrot.slane %v3523, 4
        %v3986 = vrot.slane %v3526, 5
        %v3987 = vor.u32 %v3985, %v3986
        %v3988 = vsel %vm231, %v3983, %v3987
        %v3989 = vrot.slane %v3532, 4
        %v3990 = vrot.slane %v3535, 5
        %v3991 = vor.u32 %v3989, %v3990
        %v3992 = vsel %vm231, %v3987, %v3991
        %v3993 = vrot.slane %v3541, 4
        %v3994 = vrot.slane %v3544, 5
        %v3995 = vor.u32 %v3993, %v3994
        %v3996 = vsel %vm231, %v3991, %v3995
        %v3997 = vrot.slane %v3550, 4
        %v3998 = vrot.slane %v3553, 5
        %v3999 = vor.u32 %v3997, %v3998
        %v4000 = vsel %vm231, %v3995, %v3999
        %v4002 = vshrl.u32 %v3948, 16
        %v4004 = vrot.slane %v4002, 4
        %v4005 = vshll.u32 %v3948, 16
        %v4007 = vrot.slane %v4005, 5
        %v4008 = vor.u32 %v4004, %v4007
        %v4009 = vsel %vm231, %v3999, %v4008
        %v4034 = vunpack.c.l.b16 %v3949
        %v4035 = vunpack.c.l.b16 %v3950
        %v4036 = vunpack.c.l.b16 %v3951
        %v4037 = vunpack.c.l.b16 %v3952
        %v4038 = vunpack.c.l.b16 %v3953
        %v4039 = vunpack.c.l.b16 %v3954
        %v4040 = vunpack.c.l.b16 %v3955
        %v4041 = vunpack.c.l.b16 %v3956
        %v4042 = vunpack.c.l.b16 %v3957
        %v4043 = vunpack.c.l.b16 %v3958
        %v4044 = vunpack.c.l.b16 %v3959
        %v4045 = vunpack.c.l.b16 %v3960
        %v4046 = vunpack.c.l.b16 %v3961
        %v4047 = vunpack.c.l.b16 %v3962
        %v4048 = vunpack.c.l.b16 %v3963
        %v4049 = vunpack.c.l.b16 %v3964
        %v4050 = vpack.c.b16 %v4035, %v4034
        %v4051 = vpack.c.b16 %v4037, %v4036
        %v4052 = vpack.c.b16 %v4039, %v4038
        %v4053 = vpack.c.b16 %v4041, %v4040
        %v4054 = vpack.c.b16 %v4043, %v4042
        %v4055 = vpack.c.b16 %v4045, %v4044
        %v4056 = vpack.c.b16 %v4047, %v4046
        %v4057 = vpack.c.b16 %v4049, %v4048
        %4066 = vmatprep.subr.bf16.mxu0 0
        %4067 = vmatpush1.bf16.msra.mxu0 %v4050
        %4068 = vmatprep.subr.bf16.mxu0 0
        %4069 = vmatpush1.bf16.msra.mxu0 %v4051
        %4070 = vmatprep.subr.bf16.mxu0 0
        %4071 = vmatpush1.bf16.msra.mxu0 %v4052
        %4072 = vmatprep.subr.bf16.mxu0 0
        %4073 = vmatpush1.bf16.msra.mxu0 %v4053
        %4074 = vmatprep.subr.bf16.mxu0 0
        %4075 = vmatpush1.bf16.msra.mxu0 %v4054
        %4076 = vmatprep.subr.bf16.mxu0 0
        %4077 = vmatpush1.bf16.msra.mxu0 %v4055
        %4078 = vmatprep.subr.bf16.mxu0 0
        %4079 = vmatpush1.bf16.msra.mxu0 %v4056
        %4080 = vmatprep.subr.bf16.mxu0 0
        %4081 = vmatpush1.bf16.msra.mxu0 %v4057
        %4082 = vmatprep.subr.bf16.mxu0 0
        %4083 = vmatpush1.bf16.msra.mxu0 0
        %4084 = vmatprep.subr.bf16.mxu0 0
        %4085 = vmatpush1.bf16.msra.mxu0 0
        %4086 = vmatprep.subr.bf16.mxu0 0
        %4087 = vmatpush1.bf16.msra.mxu0 0
        %4088 = vmatprep.subr.bf16.mxu0 0
        %4089 = vmatpush1.bf16.msra.mxu0 0
        %4090 = vmatprep.subr.bf16.mxu0 0
        %4091 = vmatpush1.bf16.msra.mxu0 0
        %4092 = vmatprep.subr.bf16.mxu0 0
        %4093 = vmatpush1.bf16.msra.mxu0 0
        %4094 = vmatprep.subr.bf16.mxu0 0
        %4095 = vmatpush1.bf16.msra.mxu0 0
        %4096 = vmatprep.subr.bf16.mxu0 0
        %4097 = vmatpush1.bf16.msra.mxu0 0
        %4098 = vmatprep.mubr.bf16.mxu0 0
        %4099 = vmatmul.mubr.bf16.gmra.mrb[0].mxu0 %v3976
        %v4100 = vpop.f32.mrb[0].mxu0
        %v4101 = vadd.f32 0.0, %v4100
        %v4102 = vpop.f32.mrb[0].mxu0
        %v4103 = vpop.f32.mrb[0].mxu0
        %v4104 = vadd.f32 0.0, %v4103
        %v4105 = vpop.f32.mrb[0].mxu0
        %4106 = vmatprep.mubr.bf16.mxu0 0
        %4107 = vmatmul.mubr.bf16.gmra.mrb[0].mxu0 %v3980
        %v4108 = vpop.f32.mrb[0].mxu0
        %v4109 = vadd.f32 0.0, %v4108
        %v4110 = vpop.f32.mrb[0].mxu0
        %v4111 = vpop.f32.mrb[0].mxu0
        %v4112 = vadd.f32 0.0, %v4111
        %v4113 = vpop.f32.mrb[0].mxu0
        %4114 = vmatprep.mubr.bf16.mxu0 0
        %4115 = vmatmul.mubr.bf16.gmra.mrb[0].mxu0 %v3984
        %v4116 = vpop.f32.mrb[0].mxu0
        %v4117 = vadd.f32 0.0, %v4116
        %v4118 = vpop.f32.mrb[0].mxu0
        %v4119 = vpop.f32.mrb[0].mxu0
        %v4120 = vadd.f32 0.0, %v4119
        %v4121 = vpop.f32.mrb[0].mxu0
        %4122 = vmatprep.mubr.bf16.mxu0 0
        %4123 = vmatmul.mubr.bf16.gmra.mrb[0].mxu0 %v3988
        %v4124 = vpop.f32.mrb[0].mxu0
        %v4125 = vadd.f32 0.0, %v4124
        %v4126 = vpop.f32.mrb[0].mxu0
        %v4127 = vpop.f32.mrb[0].mxu0
        %v4128 = vadd.f32 0.0, %v4127
        %v4129 = vpop.f32.mrb[0].mxu0
        %4130 = vmatprep.mubr.bf16.mxu0 0
        %4131 = vmatmul.mubr.bf16.gmra.mrb[0].mxu0 %v3992
        %v4132 = vpop.f32.mrb[0].mxu0
        %v4133 = vadd.f32 0.0, %v4132
        %v4134 = vpop.f32.mrb[0].mxu0
        %v4135 = vpop.f32.mrb[0].mxu0
        %v4136 = vadd.f32 0.0, %v4135
        %v4137 = vpop.f32.mrb[0].mxu0
        %4138 = vmatprep.mubr.bf16.mxu0 0
        %4139 = vmatmul.mubr.bf16.gmra.mrb[0].mxu0 %v3996
        %v4140 = vpop.f32.mrb[0].mxu0
        %v4141 = vadd.f32 0.0, %v4140
        %v4142 = vpop.f32.mrb[0].mxu0
        %v4143 = vpop.f32.mrb[0].mxu0
        %v4144 = vadd.f32 0.0, %v4143
        %v4145 = vpop.f32.mrb[0].mxu0
        %4146 = vmatprep.mubr.bf16.mxu0 0
        %4147 = vmatmul.mubr.bf16.gmra.mrb[0].mxu0 %v4000
        %v4148 = vpop.f32.mrb[0].mxu0
        %v4149 = vadd.f32 0.0, %v4148
        %v4150 = vpop.f32.mrb[0].mxu0
        %v4151 = vpop.f32.mrb[0].mxu0
        %v4152 = vadd.f32 0.0, %v4151
        %v4153 = vpop.f32.mrb[0].mxu0
        %4154 = vmatprep.mubr.bf16.mxu0 0
        %4155 = vmatmul.mubr.bf16.gmra.mrb[0].mxu0 %v4009
        %v4156 = vpop.f32.mrb[0].mxu0
        %v4157 = vadd.f32 0.0, %v4156
        %v4158 = vpop.f32.mrb[0].mxu0
        %v4159 = vpop.f32.mrb[0].mxu0
        %v4160 = vadd.f32 0.0, %v4159
        %v4161 = vpop.f32.mrb[0].mxu0
        %4162 = vdwg.mxu0
        %v4163 = vadd.f32 %v3932, %v4101
        %v4164 = vadd.f32 %v3933, %v4104
        %v4165 = vadd.f32 %v3934, %v4109
        %v4166 = vadd.f32 %v3935, %v4112
        %v4167 = vadd.f32 %v3936, %v4117
        %v4168 = vadd.f32 %v3937, %v4120
        %v4169 = vadd.f32 %v3938, %v4125
        %v4170 = vadd.f32 %v3939, %v4128
        %v4171 = vadd.f32 %v3940, %v4133
        %v4172 = vadd.f32 %v3941, %v4136
        %v4173 = vadd.f32 %v3942, %v4141
        %v4174 = vadd.f32 %v3943, %v4144
        %v4175 = vadd.f32 %v3944, %v4149
        %v4176 = vadd.f32 %v3945, %v4152
        %v4177 = vadd.f32 %v3946, %v4157
        %v4178 = vadd.f32 %v3947, %v4160
        %v4179 = vld [vmem:[#allocation2 + $0x60] sm:$0xf8]
        %v4180 = vld [vmem:[#allocation2 + $0x68] sm:$0xff]
        %v4181 = vld [vmem:[#allocation2 + $0x70] sm:$0xff]
        %v4182 = vld [vmem:[#allocation2 + $0x78] sm:$0xff]
        %v4183 = vld [vmem:[#allocation2 + $0x80] sm:$0xff]
        %v4184 = vld [vmem:[#allocation2 + $0x88] sm:$0xff]
        %v4185 = vld [vmem:[#allocation2 + $0x90] sm:$0xff]
        %v4186 = vld [vmem:[#allocation2 + $0x98] sm:$0xff]
        %v4187 = vld [vmem:[#allocation2 + $0xa0] sm:$0xf]
        %v4188 = vld [vmem:[%s1870] sm:$0xf]
        %v4189 = vld [vmem:[%s1870 + $0x4] sm:$0xf]
        %v4190 = vld [vmem:[%s1870 + $0x8] sm:$0xf]
        %v4191 = vld [vmem:[%s1870 + $0xc] sm:$0xf]
        %v4192 = vld [vmem:[%s1870 + $0x10] sm:$0xf]
        %v4193 = vld [vmem:[%s1870 + $0x14] sm:$0xf]
        %v4194 = vld [vmem:[%s1870 + $0x18] sm:$0xf]
        %v4195 = vld [vmem:[%s1870 + $0x1c] sm:$0xf]
        %v4196 = vld [vmem:[%s1870 + $0x20] sm:$0xf]
        %v4197 = vld [vmem:[%s1870 + $0x24] sm:$0xf]
        %v4198 = vld [vmem:[%s1870 + $0x28] sm:$0xf]
        %v4199 = vld [vmem:[%s1870 + $0x2c] sm:$0xf]
        %v4200 = vld [vmem:[%s1870 + $0x30] sm:$0xf]
        %v4201 = vld [vmem:[%s1870 + $0x34] sm:$0xf]
        %v4202 = vld [vmem:[%s1870 + $0x38] sm:$0xf]
        %v4203 = vld [vmem:[%s1870 + $0x3c] sm:$0xf]
        %v4205 = vshrl.u32 %v4179, 16
        %v4207 = vrot.slane %v4205, 3
        %v4208 = vshll.u32 %v4179, 16
        %v4210 = vrot.slane %v4208, 4
        %v4211 = vor.u32 %v4207, %v4210
        %v4213 = vshrl.u32 %v4180, 16
        %v4215 = vrot.slane %v4213, 3
        %v4216 = vshll.u32 %v4180, 16
        %v4218 = vrot.slane %v4216, 4
        %v4219 = vor.u32 %v4215, %v4218
        %v4220 = vsel %vm675, %v4211, %v4219
        %v4222 = vshrl.u32 %v4181, 16
        %v4224 = vrot.slane %v4222, 3
        %v4225 = vshll.u32 %v4181, 16
        %v4227 = vrot.slane %v4225, 4
        %v4228 = vor.u32 %v4224, %v4227
        %v4229 = vsel %vm675, %v4219, %v4228
        %v4231 = vshrl.u32 %v4182, 16
        %v4233 = vrot.slane %v4231, 3
        %v4234 = vshll.u32 %v4182, 16
        %v4236 = vrot.slane %v4234, 4
        %v4237 = vor.u32 %v4233, %v4236
        %v4238 = vsel %vm675, %v4228, %v4237
        %v4240 = vshrl.u32 %v4183, 16
        %v4242 = vrot.slane %v4240, 3
        %v4243 = vshll.u32 %v4183, 16
        %v4245 = vrot.slane %v4243, 4
        %v4246 = vor.u32 %v4242, %v4245
        %v4247 = vsel %vm675, %v4237, %v4246
        %v4249 = vshrl.u32 %v4184, 16
        %v4251 = vrot.slane %v4249, 3
        %v4252 = vshll.u32 %v4184, 16
        %v4254 = vrot.slane %v4252, 4
        %v4255 = vor.u32 %v4251, %v4254
        %v4256 = vsel %vm675, %v4246, %v4255
        %v4258 = vshrl.u32 %v4185, 16
        %v4260 = vrot.slane %v4258, 3
        %v4261 = vshll.u32 %v4185, 16
        %v4263 = vrot.slane %v4261, 4
        %v4264 = vor.u32 %v4260, %v4263
        %v4265 = vsel %vm675, %v4255, %v4264
        %v4267 = vshrl.u32 %v4186, 16
        %v4269 = vrot.slane %v4267, 3
        %v4270 = vshll.u32 %v4186, 16
        %v4272 = vrot.slane %v4270, 4
        %v4273 = vor.u32 %v4269, %v4272
        %v4274 = vsel %vm675, %v4264, %v4273
        %v4276 = vshrl.u32 %v4187, 16
        %v4278 = vrot.slane %v4276, 3
        %v4279 = vshll.u32 %v4187, 16
        %v4281 = vrot.slane %v4279, 4
        %v4282 = vor.u32 %v4278, %v4281
        %v4283 = vsel %vm675, %v4273, %v4282
        %v4308 = vunpack.c.l.b16 %v4188
        %v4309 = vunpack.c.l.b16 %v4189
        %v4310 = vunpack.c.l.b16 %v4190
        %v4311 = vunpack.c.l.b16 %v4191
        %v4312 = vunpack.c.l.b16 %v4192
        %v4313 = vunpack.c.l.b16 %v4193
        %v4314 = vunpack.c.l.b16 %v4194
        %v4315 = vunpack.c.l.b16 %v4195
        %v4316 = vunpack.c.l.b16 %v4196
        %v4317 = vunpack.c.l.b16 %v4197
        %v4318 = vunpack.c.l.b16 %v4198
        %v4319 = vunpack.c.l.b16 %v4199
        %v4320 = vunpack.c.l.b16 %v4200
        %v4321 = vunpack.c.l.b16 %v4201
        %v4322 = vunpack.c.l.b16 %v4202
        %v4323 = vunpack.c.l.b16 %v4203
        %v4324 = vpack.c.b16 %v4309, %v4308
        %v4325 = vpack.c.b16 %v4311, %v4310
        %v4326 = vpack.c.b16 %v4313, %v4312
        %v4327 = vpack.c.b16 %v4315, %v4314
        %v4328 = vpack.c.b16 %v4317, %v4316
        %v4329 = vpack.c.b16 %v4319, %v4318
        %v4330 = vpack.c.b16 %v4321, %v4320
        %v4331 = vpack.c.b16 %v4323, %v4322
        %4340 = vmatprep.subr.bf16.mxu0 0
        %4341 = vmatpush1.bf16.msra.mxu0 %v4324
        %4342 = vmatprep.subr.bf16.mxu0 0
        %4343 = vmatpush1.bf16.msra.mxu0 %v4325
        %4344 = vmatprep.subr.bf16.mxu0 0
        %4345 = vmatpush1.bf16.msra.mxu0 %v4326
        %4346 = vmatprep.subr.bf16.mxu0 0
        %4347 = vmatpush1.bf16.msra.mxu0 %v4327
        %4348 = vmatprep.subr.bf16.mxu0 0
        %4349 = vmatpush1.bf16.msra.mxu0 %v4328
        %4350 = vmatprep.subr.bf16.mxu0 0
        %4351 = vmatpush1.bf16.msra.mxu0 %v4329
        %4352 = vmatprep.subr.bf16.mxu0 0
        %4353 = vmatpush1.bf16.msra.mxu0 %v4330
        %4354 = vmatprep.subr.bf16.mxu0 0
        %4355 = vmatpush1.bf16.msra.mxu0 %v4331
        %4356 = vmatprep.subr.bf16.mxu0 0
        %4357 = vmatpush1.bf16.msra.mxu0 0
        %4358 = vmatprep.subr.bf16.mxu0 0
        %4359 = vmatpush1.bf16.msra.mxu0 0
        %4360 = vmatprep.subr.bf16.mxu0 0
        %4361 = vmatpush1.bf16.msra.mxu0 0
        %4362 = vmatprep.subr.bf16.mxu0 0
        %4363 = vmatpush1.bf16.msra.mxu0 0
        %4364 = vmatprep.subr.bf16.mxu0 0
        %4365 = vmatpush1.bf16.msra.mxu0 0
        %4366 = vmatprep.subr.bf16.mxu0 0
        %4367 = vmatpush1.bf16.msra.mxu0 0
        %4368 = vmatprep.subr.bf16.mxu0 0
        %4369 = vmatpush1.bf16.msra.mxu0 0
        %4370 = vmatprep.subr.bf16.mxu0 0
        %4371 = vmatpush1.bf16.msra.mxu0 0
        %4372 = vmatprep.mubr.bf16.mxu0 0
        %4373 = vmatmul.mubr.bf16.gmra.mrb[0].mxu0 %v4220
        %v4374 = vpop.f32.mrb[0].mxu0
        %v4375 = vadd.f32 0.0, %v4374
        %v4376 = vpop.f32.mrb[0].mxu0
        %v4377 = vpop.f32.mrb[0].mxu0
        %v4378 = vadd.f32 0.0, %v4377
        %v4379 = vpop.f32.mrb[0].mxu0
        %4380 = vmatprep.mubr.bf16.mxu0 0
        %4381 = vmatmul.mubr.bf16.gmra.mrb[0].mxu0 %v4229
        %v4382 = vpop.f32.mrb[0].mxu0
        %v4383 = vadd.f32 0.0, %v4382
        %v4384 = vpop.f32.mrb[0].mxu0
        %v4385 = vpop.f32.mrb[0].mxu0
        %v4386 = vadd.f32 0.0, %v4385
        %v4387 = vpop.f32.mrb[0].mxu0
        %4388 = vmatprep.mubr.bf16.mxu0 0
        %4389 = vmatmul.mubr.bf16.gmra.mrb[0].mxu0 %v4238
        %v4390 = vpop.f32.mrb[0].mxu0
        %v4391 = vadd.f32 0.0, %v4390
        %v4392 = vpop.f32.mrb[0].mxu0
        %v4393 = vpop.f32.mrb[0].mxu0
        %v4394 = vadd.f32 0.0, %v4393
        %v4395 = vpop.f32.mrb[0].mxu0
        %4396 = vmatprep.mubr.bf16.mxu0 0
        %4397 = vmatmul.mubr.bf16.gmra.mrb[0].mxu0 %v4247
        %v4398 = vpop.f32.mrb[0].mxu0
        %v4399 = vadd.f32 0.0, %v4398
        %v4400 = vpop.f32.mrb[0].mxu0
        %v4401 = vpop.f32.mrb[0].mxu0
        %v4402 = vadd.f32 0.0, %v4401
        %v4403 = vpop.f32.mrb[0].mxu0
        %4404 = vmatprep.mubr.bf16.mxu0 0
        %4405 = vmatmul.mubr.bf16.gmra.mrb[0].mxu0 %v4256
        %v4406 = vpop.f32.mrb[0].mxu0
        %v4407 = vadd.f32 0.0, %v4406
        %v4408 = vpop.f32.mrb[0].mxu0
        %v4409 = vpop.f32.mrb[0].mxu0
        %v4410 = vadd.f32 0.0, %v4409
        %v4411 = vpop.f32.mrb[0].mxu0
        %4412 = vmatprep.mubr.bf16.mxu0 0
        %4413 = vmatmul.mubr.bf16.gmra.mrb[0].mxu0 %v4265
        %v4414 = vpop.f32.mrb[0].mxu0
        %v4415 = vadd.f32 0.0, %v4414
        %v4416 = vpop.f32.mrb[0].mxu0
        %v4417 = vpop.f32.mrb[0].mxu0
        %v4418 = vadd.f32 0.0, %v4417
        %v4419 = vpop.f32.mrb[0].mxu0
        %4420 = vmatprep.mubr.bf16.mxu0 0
        %4421 = vmatmul.mubr.bf16.gmra.mrb[0].mxu0 %v4274
        %v4422 = vpop.f32.mrb[0].mxu0
        %v4423 = vadd.f32 0.0, %v4422
        %v4424 = vpop.f32.mrb[0].mxu0
        %v4425 = vpop.f32.mrb[0].mxu0
        %v4426 = vadd.f32 0.0, %v4425
        %v4427 = vpop.f32.mrb[0].mxu0
        %4428 = vmatprep.mubr.bf16.mxu0 0
        %4429 = vmatmul.mubr.bf16.gmra.mrb[0].mxu0 %v4283
        %v4430 = vpop.f32.mrb[0].mxu0
        %v4431 = vadd.f32 0.0, %v4430
        %v4432 = vpop.f32.mrb[0].mxu0
        %v4433 = vpop.f32.mrb[0].mxu0
        %v4434 = vadd.f32 0.0, %v4433
        %v4435 = vpop.f32.mrb[0].mxu0
        %4436 = vdwg.mxu0
        %v4437 = vadd.f32 %v4163, %v4375
        %v4438 = vadd.f32 %v4164, %v4378
        %v4439 = vadd.f32 %v4165, %v4383
        %v4440 = vadd.f32 %v4166, %v4386
        %v4441 = vadd.f32 %v4167, %v4391
        %v4442 = vadd.f32 %v4168, %v4394
        %v4443 = vadd.f32 %v4169, %v4399
        %v4444 = vadd.f32 %v4170, %v4402
        %v4445 = vadd.f32 %v4171, %v4407
        %v4446 = vadd.f32 %v4172, %v4410
        %v4447 = vadd.f32 %v4173, %v4415
        %v4448 = vadd.f32 %v4174, %v4418
        %v4449 = vadd.f32 %v4175, %v4423
        %v4450 = vadd.f32 %v4176, %v4426
        %v4451 = vadd.f32 %v4177, %v4431
        %v4452 = vadd.f32 %v4178, %v4434
        %v4453 = vld [vmem:[#allocation2 + $0x60] sm:$0xf0]
        %v4454 = vld [vmem:[%s2137] sm:$0xf]
        %v4455 = vld [vmem:[%s2137 + $0x4] sm:$0xf]
        %v4456 = vld [vmem:[%s2137 + $0x8] sm:$0xf]
        %v4457 = vld [vmem:[%s2137 + $0xc] sm:$0xf]
        %v4458 = vld [vmem:[%s2137 + $0x10] sm:$0xf]
        %v4459 = vld [vmem:[%s2137 + $0x14] sm:$0xf]
        %v4460 = vld [vmem:[%s2137 + $0x18] sm:$0xf]
        %v4461 = vld [vmem:[%s2137 + $0x1c] sm:$0xf]
        %v4462 = vld [vmem:[%s2137 + $0x20] sm:$0xf]
        %v4463 = vld [vmem:[%s2137 + $0x24] sm:$0xf]
        %v4464 = vld [vmem:[%s2137 + $0x28] sm:$0xf]
        %v4465 = vld [vmem:[%s2137 + $0x2c] sm:$0xf]
        %v4466 = vld [vmem:[%s2137 + $0x30] sm:$0xf]
        %v4467 = vld [vmem:[%s2137 + $0x34] sm:$0xf]
        %v4468 = vld [vmem:[%s2137 + $0x38] sm:$0xf]
        %v4469 = vld [vmem:[%s2137 + $0x3c] sm:$0xf]
        %v4479 = vrot.slane %v4453, 4
        %v4480 = vrot.slane %v4180, 4
        %v4481 = vsel %vm504, %v4479, %v4480
        %v4482 = vrot.slane %v4181, 4
        %v4483 = vsel %vm504, %v4480, %v4482
        %v4484 = vrot.slane %v4182, 4
        %v4485 = vsel %vm504, %v4482, %v4484
        %v4486 = vrot.slane %v4183, 4
        %v4487 = vsel %vm504, %v4484, %v4486
        %v4488 = vrot.slane %v4184, 4
        %v4489 = vsel %vm504, %v4486, %v4488
        %v4490 = vrot.slane %v4185, 4
        %v4491 = vsel %vm504, %v4488, %v4490
        %v4492 = vrot.slane %v4186, 4
        %v4493 = vsel %vm504, %v4490, %v4492
        %v4494 = vrot.slane %v4187, 4
        %v4495 = vsel %vm504, %v4492, %v4494
        %v4520 = vunpack.c.l.b16 %v4454
        %v4521 = vunpack.c.l.b16 %v4455
        %v4522 = vunpack.c.l.b16 %v4456
        %v4523 = vunpack.c.l.b16 %v4457
        %v4524 = vunpack.c.l.b16 %v4458
        %v4525 = vunpack.c.l.b16 %v4459
        %v4526 = vunpack.c.l.b16 %v4460
        %v4527 = vunpack.c.l.b16 %v4461
        %v4528 = vunpack.c.l.b16 %v4462
        %v4529 = vunpack.c.l.b16 %v4463
        %v4530 = vunpack.c.l.b16 %v4464
        %v4531 = vunpack.c.l.b16 %v4465
        %v4532 = vunpack.c.l.b16 %v4466
        %v4533 = vunpack.c.l.b16 %v4467
        %v4534 = vunpack.c.l.b16 %v4468
        %v4535 = vunpack.c.l.b16 %v4469
        %v4536 = vpack.c.b16 %v4521, %v4520
        %v4537 = vpack.c.b16 %v4523, %v4522
        %v4538 = vpack.c.b16 %v4525, %v4524
        %v4539 = vpack.c.b16 %v4527, %v4526
        %v4540 = vpack.c.b16 %v4529, %v4528
        %v4541 = vpack.c.b16 %v4531, %v4530
        %v4542 = vpack.c.b16 %v4533, %v4532
        %v4543 = vpack.c.b16 %v4535, %v4534
        %4552 = vmatprep.subr.bf16.mxu0 0
        %4553 = vmatpush1.bf16.msra.mxu0 %v4536
        %4554 = vmatprep.subr.bf16.mxu0 0
        %4555 = vmatpush1.bf16.msra.mxu0 %v4537
        %4556 = vmatprep.subr.bf16.mxu0 0
        %4557 = vmatpush1.bf16.msra.mxu0 %v4538
        %4558 = vmatprep.subr.bf16.mxu0 0
        %4559 = vmatpush1.bf16.msra.mxu0 %v4539
        %4560 = vmatprep.subr.bf16.mxu0 0
        %4561 = vmatpush1.bf16.msra.mxu0 %v4540
        %4562 = vmatprep.subr.bf16.mxu0 0
        %4563 = vmatpush1.bf16.msra.mxu0 %v4541
        %4564 = vmatprep.subr.bf16.mxu0 0
        %4565 = vmatpush1.bf16.msra.mxu0 %v4542
        %4566 = vmatprep.subr.bf16.mxu0 0
        %4567 = vmatpush1.bf16.msra.mxu0 %v4543
        %4568 = vmatprep.subr.bf16.mxu0 0
        %4569 = vmatpush1.bf16.msra.mxu0 0
        %4570 = vmatprep.subr.bf16.mxu0 0
        %4571 = vmatpush1.bf16.msra.mxu0 0
        %4572 = vmatprep.subr.bf16.mxu0 0
        %4573 = vmatpush1.bf16.msra.mxu0 0
        %4574 = vmatprep.subr.bf16.mxu0 0
        %4575 = vmatpush1.bf16.msra.mxu0 0
        %4576 = vmatprep.subr.bf16.mxu0 0
        %4577 = vmatpush1.bf16.msra.mxu0 0
        %4578 = vmatprep.subr.bf16.mxu0 0
        %4579 = vmatpush1.bf16.msra.mxu0 0
        %4580 = vmatprep.subr.bf16.mxu0 0
        %4581 = vmatpush1.bf16.msra.mxu0 0
        %4582 = vmatprep.subr.bf16.mxu0 0
        %4583 = vmatpush1.bf16.msra.mxu0 0
        %4584 = vmatprep.mubr.bf16.mxu0 0
        %4585 = vmatmul.mubr.bf16.gmra.mrb[0].mxu0 %v4481
        %v4586 = vpop.f32.mrb[0].mxu0
        %v4587 = vadd.f32 0.0, %v4586
        %v4588 = vpop.f32.mrb[0].mxu0
        %v4589 = vpop.f32.mrb[0].mxu0
        %v4590 = vadd.f32 0.0, %v4589
        %v4591 = vpop.f32.mrb[0].mxu0
        %4592 = vmatprep.mubr.bf16.mxu0 0
        %4593 = vmatmul.mubr.bf16.gmra.mrb[0].mxu0 %v4483
        %v4594 = vpop.f32.mrb[0].mxu0
        %v4595 = vadd.f32 0.0, %v4594
        %v4596 = vpop.f32.mrb[0].mxu0
        %v4597 = vpop.f32.mrb[0].mxu0
        %v4598 = vadd.f32 0.0, %v4597
        %v4599 = vpop.f32.mrb[0].mxu0
        %4600 = vmatprep.mubr.bf16.mxu0 0
        %4601 = vmatmul.mubr.bf16.gmra.mrb[0].mxu0 %v4485
        %v4602 = vpop.f32.mrb[0].mxu0
        %v4603 = vadd.f32 0.0, %v4602
        %v4604 = vpop.f32.mrb[0].mxu0
        %v4605 = vpop.f32.mrb[0].mxu0
        %v4606 = vadd.f32 0.0, %v4605
        %v4607 = vpop.f32.mrb[0].mxu0
        %4608 = vmatprep.mubr.bf16.mxu0 0
        %4609 = vmatmul.mubr.bf16.gmra.mrb[0].mxu0 %v4487
        %v4610 = vpop.f32.mrb[0].mxu0
        %v4611 = vadd.f32 0.0, %v4610
        %v4612 = vpop.f32.mrb[0].mxu0
        %v4613 = vpop.f32.mrb[0].mxu0
        %v4614 = vadd.f32 0.0, %v4613
        %v4615 = vpop.f32.mrb[0].mxu0
        %4616 = vmatprep.mubr.bf16.mxu0 0
        %4617 = vmatmul.mubr.bf16.gmra.mrb[0].mxu0 %v4489
        %v4618 = vpop.f32.mrb[0].mxu0
        %v4619 = vadd.f32 0.0, %v4618
        %v4620 = vpop.f32.mrb[0].mxu0
        %v4621 = vpop.f32.mrb[0].mxu0
        %v4622 = vadd.f32 0.0, %v4621
        %v4623 = vpop.f32.mrb[0].mxu0
        %4624 = vmatprep.mubr.bf16.mxu0 0
        %4625 = vmatmul.mubr.bf16.gmra.mrb[0].mxu0 %v4491
        %v4626 = vpop.f32.mrb[0].mxu0
        %v4627 = vadd.f32 0.0, %v4626
        %v4628 = vpop.f32.mrb[0].mxu0
        %v4629 = vpop.f32.mrb[0].mxu0
        %v4630 = vadd.f32 0.0, %v4629
        %v4631 = vpop.f32.mrb[0].mxu0
        %4632 = vmatprep.mubr.bf16.mxu0 0
        %4633 = vmatmul.mubr.bf16.gmra.mrb[0].mxu0 %v4493
        %v4634 = vpop.f32.mrb[0].mxu0
        %v4635 = vadd.f32 0.0, %v4634
        %v4636 = vpop.f32.mrb[0].mxu0
        %v4637 = vpop.f32.mrb[0].mxu0
        %v4638 = vadd.f32 0.0, %v4637
        %v4639 = vpop.f32.mrb[0].mxu0
        %4640 = vmatprep.mubr.bf16.mxu0 0
        %4641 = vmatmul.mubr.bf16.gmra.mrb[0].mxu0 %v4495
        %v4642 = vpop.f32.mrb[0].mxu0
        %v4643 = vadd.f32 0.0, %v4642
        %v4644 = vpop.f32.mrb[0].mxu0
        %v4645 = vpop.f32.mrb[0].mxu0
        %v4646 = vadd.f32 0.0, %v4645
        %v4647 = vpop.f32.mrb[0].mxu0
        %4648 = vdwg.mxu0
        %v4649 = vadd.f32 %v4437, %v4587
        %v4650 = vadd.f32 %v4438, %v4590
        %v4651 = vadd.f32 %v4439, %v4595
        %v4652 = vadd.f32 %v4440, %v4598
        %v4653 = vadd.f32 %v4441, %v4603
        %v4654 = vadd.f32 %v4442, %v4606
        %v4655 = vadd.f32 %v4443, %v4611
        %v4656 = vadd.f32 %v4444, %v4614
        %v4657 = vadd.f32 %v4445, %v4619
        %v4658 = vadd.f32 %v4446, %v4622
        %v4659 = vadd.f32 %v4447, %v4627
        %v4660 = vadd.f32 %v4448, %v4630
        %v4661 = vadd.f32 %v4449, %v4635
        %v4662 = vadd.f32 %v4450, %v4638
        %v4663 = vadd.f32 %v4451, %v4643
        %v4664 = vadd.f32 %v4452, %v4646
        %v4665 = vld [vmem:[#allocation2 + $0xa0] sm:$0x1f]
        %v4666 = vld [vmem:[%s2350] sm:$0xf]
        %v4667 = vld [vmem:[%s2350 + $0x4] sm:$0xf]
        %v4668 = vld [vmem:[%s2350 + $0x8] sm:$0xf]
        %v4669 = vld [vmem:[%s2350 + $0xc] sm:$0xf]
        %v4670 = vld [vmem:[%s2350 + $0x10] sm:$0xf]
        %v4671 = vld [vmem:[%s2350 + $0x14] sm:$0xf]
        %v4672 = vld [vmem:[%s2350 + $0x18] sm:$0xf]
        %v4673 = vld [vmem:[%s2350 + $0x1c] sm:$0xf]
        %v4674 = vld [vmem:[%s2350 + $0x20] sm:$0xf]
        %v4675 = vld [vmem:[%s2350 + $0x24] sm:$0xf]
        %v4676 = vld [vmem:[%s2350 + $0x28] sm:$0xf]
        %v4677 = vld [vmem:[%s2350 + $0x2c] sm:$0xf]
        %v4678 = vld [vmem:[%s2350 + $0x30] sm:$0xf]
        %v4679 = vld [vmem:[%s2350 + $0x34] sm:$0xf]
        %v4680 = vld [vmem:[%s2350 + $0x38] sm:$0xf]
        %v4681 = vld [vmem:[%s2350 + $0x3c] sm:$0xf]
        %v4683 = vshrl.u32 %v4453, 16
        %v4685 = vrot.slane %v4683, 4
        %v4686 = vshll.u32 %v4453, 16
        %v4688 = vrot.slane %v4686, 5
        %v4689 = vor.u32 %v4685, %v4688
        %v4690 = vrot.slane %v4213, 4
        %v4691 = vrot.slane %v4216, 5
        %v4692 = vor.u32 %v4690, %v4691
        %v4693 = vsel %vm231, %v4689, %v4692
        %v4694 = vrot.slane %v4222, 4
        %v4695 = vrot.slane %v4225, 5
        %v4696 = vor.u32 %v4694, %v4695
        %v4697 = vsel %vm231, %v4692, %v4696
        %v4698 = vrot.slane %v4231, 4
        %v4699 = vrot.slane %v4234, 5
        %v4700 = vor.u32 %v4698, %v4699
        %v4701 = vsel %vm231, %v4696, %v4700
        %v4702 = vrot.slane %v4240, 4
        %v4703 = vrot.slane %v4243, 5
        %v4704 = vor.u32 %v4702, %v4703
        %v4705 = vsel %vm231, %v4700, %v4704
        %v4706 = vrot.slane %v4249, 4
        %v4707 = vrot.slane %v4252, 5
        %v4708 = vor.u32 %v4706, %v4707
        %v4709 = vsel %vm231, %v4704, %v4708
        %v4710 = vrot.slane %v4258, 4
        %v4711 = vrot.slane %v4261, 5
        %v4712 = vor.u32 %v4710, %v4711
        %v4713 = vsel %vm231, %v4708, %v4712
        %v4714 = vrot.slane %v4267, 4
        %v4715 = vrot.slane %v4270, 5
        %v4716 = vor.u32 %v4714, %v4715
        %v4717 = vsel %vm231, %v4712, %v4716
        %v4719 = vshrl.u32 %v4665, 16
        %v4721 = vrot.slane %v4719, 4
        %v4722 = vshll.u32 %v4665, 16
        %v4724 = vrot.slane %v4722, 5
        %v4725 = vor.u32 %v4721, %v4724
        %v4726 = vsel %vm231, %v4716, %v4725
        %v4751 = vunpack.c.l.b16 %v4666
        %v4752 = vunpack.c.l.b16 %v4667
        %v4753 = vunpack.c.l.b16 %v4668
        %v4754 = vunpack.c.l.b16 %v4669
        %v4755 = vunpack.c.l.b16 %v4670
        %v4756 = vunpack.c.l.b16 %v4671
        %v4757 = vunpack.c.l.b16 %v4672
        %v4758 = vunpack.c.l.b16 %v4673
        %v4759 = vunpack.c.l.b16 %v4674
        %v4760 = vunpack.c.l.b16 %v4675
        %v4761 = vunpack.c.l.b16 %v4676
        %v4762 = vunpack.c.l.b16 %v4677
        %v4763 = vunpack.c.l.b16 %v4678
        %v4764 = vunpack.c.l.b16 %v4679
        %v4765 = vunpack.c.l.b16 %v4680
        %v4766 = vunpack.c.l.b16 %v4681
        %v4767 = vpack.c.b16 %v4752, %v4751
        %v4768 = vpack.c.b16 %v4754, %v4753
        %v4769 = vpack.c.b16 %v4756, %v4755
        %v4770 = vpack.c.b16 %v4758, %v4757
        %v4771 = vpack.c.b16 %v4760, %v4759
        %v4772 = vpack.c.b16 %v4762, %v4761
        %v4773 = vpack.c.b16 %v4764, %v4763
        %v4774 = vpack.c.b16 %v4766, %v4765
        %4783 = vmatprep.subr.bf16.mxu0 0
        %4784 = vmatpush1.bf16.msra.mxu0 %v4767
        %4785 = vmatprep.subr.bf16.mxu0 0
        %4786 = vmatpush1.bf16.msra.mxu0 %v4768
        %4787 = vmatprep.subr.bf16.mxu0 0
        %4788 = vmatpush1.bf16.msra.mxu0 %v4769
        %4789 = vmatprep.subr.bf16.mxu0 0
        %4790 = vmatpush1.bf16.msra.mxu0 %v4770
        %4791 = vmatprep.subr.bf16.mxu0 0
        %4792 = vmatpush1.bf16.msra.mxu0 %v4771
        %4793 = vmatprep.subr.bf16.mxu0 0
        %4794 = vmatpush1.bf16.msra.mxu0 %v4772
        %4795 = vmatprep.subr.bf16.mxu0 0
        %4796 = vmatpush1.bf16.msra.mxu0 %v4773
        %4797 = vmatprep.subr.bf16.mxu0 0
        %4798 = vmatpush1.bf16.msra.mxu0 %v4774
        %4799 = vmatprep.subr.bf16.mxu0 0
        %4800 = vmatpush1.bf16.msra.mxu0 0
        %4801 = vmatprep.subr.bf16.mxu0 0
        %4802 = vmatpush1.bf16.msra.mxu0 0
        %4803 = vmatprep.subr.bf16.mxu0 0
        %4804 = vmatpush1.bf16.msra.mxu0 0
        %4805 = vmatprep.subr.bf16.mxu0 0
        %4806 = vmatpush1.bf16.msra.mxu0 0
        %4807 = vmatprep.subr.bf16.mxu0 0
        %4808 = vmatpush1.bf16.msra.mxu0 0
        %4809 = vmatprep.subr.bf16.mxu0 0
        %4810 = vmatpush1.bf16.msra.mxu0 0
        %4811 = vmatprep.subr.bf16.mxu0 0
        %4812 = vmatpush1.bf16.msra.mxu0 0
        %4813 = vmatprep.subr.bf16.mxu0 0
        %4814 = vmatpush1.bf16.msra.mxu0 0
        %4815 = vmatprep.mubr.bf16.mxu0 0
        %4816 = vmatmul.mubr.bf16.gmra.mrb[0].mxu0 %v4693
        %v4817 = vpop.f32.mrb[0].mxu0
        %v4818 = vadd.f32 0.0, %v4817
        %v4819 = vpop.f32.mrb[0].mxu0
        %v4820 = vpop.f32.mrb[0].mxu0
        %v4821 = vadd.f32 0.0, %v4820
        %v4822 = vpop.f32.mrb[0].mxu0
        %4823 = vmatprep.mubr.bf16.mxu0 0
        %4824 = vmatmul.mubr.bf16.gmra.mrb[0].mxu0 %v4697
        %v4825 = vpop.f32.mrb[0].mxu0
        %v4826 = vadd.f32 0.0, %v4825
        %v4827 = vpop.f32.mrb[0].mxu0
        %v4828 = vpop.f32.mrb[0].mxu0
        %v4829 = vadd.f32 0.0, %v4828
        %v4830 = vpop.f32.mrb[0].mxu0
        %4831 = vmatprep.mubr.bf16.mxu0 0
        %4832 = vmatmul.mubr.bf16.gmra.mrb[0].mxu0 %v4701
        %v4833 = vpop.f32.mrb[0].mxu0
        %v4834 = vadd.f32 0.0, %v4833
        %v4835 = vpop.f32.mrb[0].mxu0
        %v4836 = vpop.f32.mrb[0].mxu0
        %v4837 = vadd.f32 0.0, %v4836
        %v4838 = vpop.f32.mrb[0].mxu0
        %4839 = vmatprep.mubr.bf16.mxu0 0
        %4840 = vmatmul.mubr.bf16.gmra.mrb[0].mxu0 %v4705
        %v4841 = vpop.f32.mrb[0].mxu0
        %v4842 = vadd.f32 0.0, %v4841
        %v4843 = vpop.f32.mrb[0].mxu0
        %v4844 = vpop.f32.mrb[0].mxu0
        %v4845 = vadd.f32 0.0, %v4844
        %v4846 = vpop.f32.mrb[0].mxu0
        %4847 = vmatprep.mubr.bf16.mxu0 0
        %4848 = vmatmul.mubr.bf16.gmra.mrb[0].mxu0 %v4709
        %v4849 = vpop.f32.mrb[0].mxu0
        %v4850 = vadd.f32 0.0, %v4849
        %v4851 = vpop.f32.mrb[0].mxu0
        %v4852 = vpop.f32.mrb[0].mxu0
        %v4853 = vadd.f32 0.0, %v4852
        %v4854 = vpop.f32.mrb[0].mxu0
        %4855 = vmatprep.mubr.bf16.mxu0 0
        %4856 = vmatmul.mubr.bf16.gmra.mrb[0].mxu0 %v4713
        %v4857 = vpop.f32.mrb[0].mxu0
        %v4858 = vadd.f32 0.0, %v4857
        %v4859 = vpop.f32.mrb[0].mxu0
        %v4860 = vpop.f32.mrb[0].mxu0
        %v4861 = vadd.f32 0.0, %v4860
        %v4862 = vpop.f32.mrb[0].mxu0
        %4863 = vmatprep.mubr.bf16.mxu0 0
        %4864 = vmatmul.mubr.bf16.gmra.mrb[0].mxu0 %v4717
        %v4865 = vpop.f32.mrb[0].mxu0
        %v4866 = vadd.f32 0.0, %v4865
        %v4867 = vpop.f32.mrb[0].mxu0
        %v4868 = vpop.f32.mrb[0].mxu0
        %v4869 = vadd.f32 0.0, %v4868
        %v4870 = vpop.f32.mrb[0].mxu0
        %4871 = vmatprep.mubr.bf16.mxu0 0
        %4872 = vmatmul.mubr.bf16.gmra.mrb[0].mxu0 %v4726
        %v4873 = vpop.f32.mrb[0].mxu0
        %v4874 = vadd.f32 0.0, %v4873
        %v4875 = vpop.f32.mrb[0].mxu0
        %v4876 = vpop.f32.mrb[0].mxu0
        %v4877 = vadd.f32 0.0, %v4876
        %v4878 = vpop.f32.mrb[0].mxu0
        %4879 = vdwg.mxu0
        %v4880 = vadd.f32 %v4649, %v4818
        %v4881 = vadd.f32 %v4650, %v4821
        %v4882 = vadd.f32 %v4651, %v4826
        %v4883 = vadd.f32 %v4652, %v4829
        %v4884 = vadd.f32 %v4653, %v4834
        %v4885 = vadd.f32 %v4654, %v4837
        %v4886 = vadd.f32 %v4655, %v4842
        %v4887 = vadd.f32 %v4656, %v4845
        %v4888 = vadd.f32 %v4657, %v4850
        %v4889 = vadd.f32 %v4658, %v4853
        %v4890 = vadd.f32 %v4659, %v4858
        %v4891 = vadd.f32 %v4660, %v4861
        %v4892 = vadd.f32 %v4661, %v4866
        %v4893 = vadd.f32 %v4662, %v4869
        %v4894 = vadd.f32 %v4663, %v4874
        %v4895 = vadd.f32 %v4664, %v4877
        %v4896 = vadd.f32 %v4880, %v2585
        %v4897 = vadd.f32 %v4881, %v2585
        %v4898 = vadd.f32 %v4882, %v2585
        %v4899 = vadd.f32 %v4883, %v2585
        %v4900 = vadd.f32 %v4884, %v2585
        %v4901 = vadd.f32 %v4885, %v2585
        %v4902 = vadd.f32 %v4886, %v2585
        %v4903 = vadd.f32 %v4887, %v2585
        %v4904 = vadd.f32 %v4888, %v2585
        %v4905 = vadd.f32 %v4889, %v2585
        %v4906 = vadd.f32 %v4890, %v2585
        %v4907 = vadd.f32 %v4891, %v2585
        %v4908 = vadd.f32 %v4892, %v2585
        %v4909 = vadd.f32 %v4893, %v2585
        %v4910 = vadd.f32 %v4894, %v2585
        %v4911 = vadd.f32 %v4895, %v2585
        %v4912 = vpack.c.bf16 %v4897, %v4896
        %v4913 = vpack.c.bf16 %v4899, %v4898
        %v4914 = vpack.c.bf16 %v4901, %v4900
        %v4915 = vpack.c.bf16 %v4903, %v4902
        %v4916 = vpack.c.bf16 %v4905, %v4904
        %v4917 = vpack.c.bf16 %v4907, %v4906
        %v4918 = vpack.c.bf16 %v4909, %v4908
        %v4919 = vpack.c.bf16 %v4911, %v4910
        %v4922 = vunpack.c.l.b16 %v4912
        %v4923 = vunpack.c.h.b16 %v4912
        %v4924 = vunpack.c.l.b16 %v4913
        %v4925 = vunpack.c.h.b16 %v4913
        %v4926 = vpack.c.b16 %v4922, %v4922
        %v4927 = vpack.c.b16 %v4923, %v4923
        %v4928 = vpack.c.b16 %v4924, %v4924
        %v4929 = vpack.c.b16 %v4925, %v4925
        %vm4930 = vcmask 1045508
        %vm4931 = vmor %vm337, %vm4930
        %v4932 = vrot.slane %v4926, 6
        %v4933 = vrot.slane %v4932, 4
        %v4934 = vrot.slane %v4927, 6
        %v4935 = vsel %vm4931, %v4933, %v4934
        %v4936 = vrot.slane %v4934, 4
        %v4937 = vrot.slane %v4928, 6
        %v4938 = vsel %vm4931, %v4936, %v4937
        %v4939 = vrot.slane %v4937, 4
        %v4940 = vrot.slane %v4929, 6
        %v4941 = vsel %vm4931, %v4939, %v4940
        %4946 = vst [vmem:[%s163 + $0x30] sm:$0xc] %v4932
        %4947 = vst [vmem:[%s163 + $0x34] sm:$0xf] %v4935
        %4948 = vst [vmem:[%s163 + $0x38] sm:$0xf] %v4938
        %vm4949 = vmand %vm271, %vm297
        %v4950 = vld [vmem:[%s163 + $0x3c] sm:$0x7]
        %v4951 = vsel %vm4949, %v4941, %v4950
        %4952 = vst [vmem:[%s163 + $0x3c] sm:$0x7] %v4951
        %v4955 = vunpack.c.l.b16 %v4914
        %v4956 = vunpack.c.h.b16 %v4914
        %v4957 = vunpack.c.l.b16 %v4915
        %v4958 = vunpack.c.h.b16 %v4915
        %v4959 = vpack.c.b16 %v4955, %v4955
        %v4960 = vpack.c.b16 %v4956, %v4956
        %v4961 = vpack.c.b16 %v4957, %v4957
        %v4962 = vpack.c.b16 %v4958, %v4958
        %vm4963 = vsmask.f32 6416
        %vm4964 = vmor %vm297, %vm4963
        %v4966 = vshrl.u32 %v4959, 16
        %v4968 = vrot.slane %v4966, 5
        %v4969 = vshll.u32 %v4959, 16
        %v4971 = vrot.slane %v4969, 6
        %v4972 = vor.u32 %v4968, %v4971
        %v4973 = vrot.slane %v4972, 4
        %v4975 = vshrl.u32 %v4960, 16
        %v4977 = vrot.slane %v4975, 5
        %v4978 = vshll.u32 %v4960, 16
        %v4980 = vrot.slane %v4978, 6
        %v4981 = vor.u32 %v4977, %v4980
        %v4982 = vsel %vm4964, %v4973, %v4981
        %v4983 = vrot.slane %v4981, 4
        %v4985 = vshrl.u32 %v4961, 16
        %v4987 = vrot.slane %v4985, 5
        %v4988 = vshll.u32 %v4961, 16
        %v4990 = vrot.slane %v4988, 6
        %v4991 = vor.u32 %v4987, %v4990
        %v4992 = vsel %vm4964, %v4983, %v4991
        %v4993 = vrot.slane %v4991, 4
        %v4995 = vshll.u32 %v4962, 16
        %v4997 = vrot.slane %v4995, 6
        %v4998 = vsel %vm4964, %v4993, %v4997
        %vm5003 = vcmask 1043458
        %vm5004 = vsmask.f32 7946
        %vm5005 = vmand %vm5003, %vm5004
        %v5006 = vld [vmem:[%s163 + $0x3c] sm:$0xc]
        %v5007 = vsel %vm5005, %v4972, %v5006
        %5008 = vst [vmem:[%s163 + $0x3c] sm:$0xc] %v5007
        %5009 = vst [vmem:[%s163 + $0x40] sm:$0xf] %v4982
        %5010 = vst [vmem:[%s163 + $0x44] sm:$0xf] %v4992
        %5011 = vst [vmem:[%s163 + $0x48] sm:$0x7] %v4998
        %v5014 = vunpack.c.l.b16 %v4916
        %v5015 = vunpack.c.h.b16 %v4916
        %v5016 = vunpack.c.l.b16 %v4917
        %v5017 = vunpack.c.h.b16 %v4917
        %v5018 = vpack.c.b16 %v5014, %v5014
        %v5019 = vpack.c.b16 %v5015, %v5015
        %v5020 = vpack.c.b16 %v5016, %v5016
        %v5021 = vpack.c.b16 %v5017, %v5017
        %vm5022 = vcmask 1046532
        %vm5023 = vmor %vm271, %vm5022
        %v5024 = vrot.slane %v5018, 5
        %v5025 = vrot.slane %v5024, 4
        %v5026 = vrot.slane %v5019, 5
        %v5027 = vsel %vm5023, %v5025, %v5026
        %v5028 = vrot.slane %v5026, 4
        %v5029 = vrot.slane %v5020, 5
        %v5030 = vsel %vm5023, %v5028, %v5029
        %v5031 = vrot.slane %v5029, 4
        %v5032 = vrot.slane %v5021, 5
        %v5033 = vsel %vm5023, %v5031, %v5032
        %5038 = vst [vmem:[%s163 + $0x48] sm:$0x8] %v5024
        %5039 = vst [vmem:[%s163 + $0x4c] sm:$0xf] %v5027
        %5040 = vst [vmem:[%s163 + $0x50] sm:$0xf] %v5030
        %vm5041 = vmand %vm504, %vm231
        %v5042 = vld [vmem:[%s163 + $0x54] sm:$0xf]
        %v5043 = vsel %vm5041, %v5033, %v5042
        %5044 = vst [vmem:[%s163 + $0x54] sm:$0xf] %v5043
        %v5047 = vunpack.c.l.b16 %v4918
        %v5048 = vunpack.c.h.b16 %v4918
        %v5049 = vunpack.c.l.b16 %v4919
        %v5050 = vunpack.c.h.b16 %v4919
        %v5051 = vpack.c.b16 %v5047, %v5047
        %v5052 = vpack.c.b16 %v5048, %v5048
        %v5053 = vpack.c.b16 %v5049, %v5049
        %v5054 = vpack.c.b16 %v5050, %v5050
        %vm5055 = vsmask.f32 7440
        %vm5056 = vmor %vm231, %vm5055
        %v5058 = vshll.u32 %v5051, 16
        %v5060 = vrot.slane %v5058, 5
        %v5061 = vshrl.u32 %v5051, 16
        %v5063 = vrot.slane %v5061, 4
        %v5064 = vor.u32 %v5063, %v5060
        %v5065 = vrot.slane %v5064, 4
        %v5067 = vshll.u32 %v5052, 16
        %v5069 = vrot.slane %v5067, 5
        %v5070 = vsel %vm5056, %v5065, %v5069
        %v5071 = vshrl.u32 %v5052, 16
        %v5073 = vrot.slane %v5071, 4
        %v5074 = vor.u32 %v5073, %v5069
        %v5075 = vrot.slane %v5074, 4
        %v5077 = vshll.u32 %v5053, 16
        %v5079 = vrot.slane %v5077, 5
        %v5080 = vsel %vm5056, %v5075, %v5079
        %v5081 = vshrl.u32 %v5053, 16
        %v5083 = vrot.slane %v5081, 4
        %v5084 = vor.u32 %v5083, %v5079
        %v5085 = vrot.slane %v5084, 4
        %v5087 = vshll.u32 %v5054, 16
        %v5089 = vrot.slane %v5087, 5
        %v5090 = vsel %vm5056, %v5085, %v5089
        %vm5095 = vcmask 1043459
        %vm5096 = vsmask.f32 7950
        %vm5097 = vmand %vm5095, %vm5096
        %v5098 = vld [vmem:[%s163 + $0x54] sm:$0x8]
        %v5099 = vsel %vm5097, %v5060, %v5098
        %5100 = vst [vmem:[%s163 + $0x54] sm:$0x8] %v5099
        %5101 = vst [vmem:[%s163 + $0x58] sm:$0xf] %v5070
        %5102 = vst [vmem:[%s163 + $0x5c] sm:$0xf] %v5080
        %5103 = vst [vmem:[%s163 + $0x60] sm:$0xf] %v5090
        %s5104 = sand.u32 %s93, 1
        %s5105 = scalar_lea.sflag [#allocation4], %s5104
        %s5106 = sand.u32 %s93, 1
        %s5107 = smul.addr %s5106, 100
        %s5108 = scalar_lea.vmem [#allocation3], %s5107
        // Predicated region
        $region33: #{conv_mixer_pallas.1} parent=31 // pred_check
          %p5109 = pneg %p103
        $region34: #{conv_mixer_pallas.1} parent=31 // pred_check_branch
          %5111 = sbr.rel (%p5109) target = $region36
        $region35: #{conv_mixer_pallas.1} parent=31 // pred_region
          %s5113 = ssub.s32 1600, 1600
          %5114 = vsyncadd %s5105, %s5113
          %s5115 = smul.addr %s17, 25
          %s5116 = smul.addr %s5115, 64
          %s5117 = scalar_lea.hbm %s3, %s5116
          %s5118 = sshll.u32 %s5108, 4
          %s5119 = int_to_ptr.vmem [resolvable:$true] %s5118
          %5124 = dma.vmem_to_hbm [thread:$0]  %s5119, 1600, %s5117, %s5105, 64, 64, 4
        $region36: #{conv_mixer_pallas.1} parent=31 // pred_fallthru
          _
      $region32: #{conv_mixer_pallas.1} parent=5 // pred_fallthru
        _
      %p5125 = scmp.le.s32.totalorder 2, %s12
      // Predicated region
      $region37: #{conv_mixer_pallas.1} parent=5 // pred_check
        %p5126 = pneg %p5125
      $region38: #{conv_mixer_pallas.1} parent=5 // pred_check_branch
        %5128 = sbr.rel (%p5126) target = $region40
      $region39: #{conv_mixer_pallas.1} parent=5 // pred_region
        %s5129 = ssub.s32 %s12, 2
        // Predicated region
        $region41: #{conv_mixer_pallas.1} parent=39 // pred_check
          %p5130 = pneg %p109
        $region42: #{conv_mixer_pallas.1} parent=39 // pred_check_branch
          %5132 = sbr.rel (%p5130) target = $region44
        $region43: #{conv_mixer_pallas.1} parent=39 // pred_region
          %s5133 = sand.u32 %s94, 1
          %s5134 = scalar_lea.sflag [#allocation4], %s5133
          %s5135 = sand.u32 %s94, 1
          %s5136 = smul.addr %s5135, 100
          %s5137 = scalar_lea.vmem [#allocation3], %s5136
          %5138 = dma.done %s5134, 1600
        $region44: #{conv_mixer_pallas.1} parent=39 // pred_fallthru
          _
      $region40: #{conv_mixer_pallas.1} parent=5 // pred_fallthru
        _
    $region6: #{conv_mixer_pallas.1} parent=1 // loop_footer
      %s16 = sadd.s32 1, %s12
    $region7: #{conv_mixer_pallas.1} parent=1 // loop_footer_branch
      %11 = sbr.rel target = $region3
    $region8: #{conv_mixer_pallas.1} parent=1 // loop_exit
      _
    %5139 = vsyncpa [#allocation4], 1
    %s5140 = scalar_lea.sflag [#allocation4], 1
    %5141 = vsyncpa %s5140, 1

</llo_original>
